<compile_context>
chip_gen: v6e
topology: v6e:2x2x1
jax: 0.10.0
libtpu: 0.0.40
codegen_flags: <defaults>
</compile_context>

<pallas_src>
import functools

import jax
import jax.numpy as jnp
from jax.experimental import pallas as pl
from jax.experimental.pallas import tpu as pltpu

_VMEM_LIMIT = 32 * 1024 * 1024  # safe on v5e/v6e/v7x; tiles here use far less


def _round_up(x, m):
    return ((x + m - 1) // m) * m


# -----------------------------------------------------------------------------
# Pallas kernels
# -----------------------------------------------------------------------------
def _matmul_bias_kernel(a_ref, b_ref, bias_ref, o_ref):
    # a: (bm, K) bf16, b: (K, N) bf16, bias: (1, N) f32 -> o: (bm, N) f32
    o_ref[...] = (
        jnp.dot(a_ref[...], b_ref[...], preferred_element_type=jnp.float32)
        + bias_ref[...]
    )


def _bn_stats_kernel(x_ref, sum_ref, sq_ref):
    # Tiled accumulation of per-column sum and sum-of-squares over the row axis.
    # Outputs are resident accumulators across the (arbitrary) grid axis.
    @pl.when(pl.program_id(0) == 0)
    def _():
        sum_ref[...] = jnp.zeros_like(sum_ref)
        sq_ref[...] = jnp.zeros_like(sq_ref)

    x = x_ref[...]
    sum_ref[...] += jnp.sum(x, axis=0, keepdims=True)
    sq_ref[...] += jnp.sum(x * x, axis=0, keepdims=True)


def _scale_shift_relu_kernel(x_ref, scale_ref, shift_ref, o_ref):
    # y = relu(x * scale + shift); scale/shift already fold mean/var/gamma/beta.
    y = jnp.maximum(x_ref[...] * scale_ref[...] + shift_ref[...], 0.0)
    o_ref[...] = y.astype(o_ref.dtype)


# -----------------------------------------------------------------------------
# Pallas wrappers
# -----------------------------------------------------------------------------
def pallas_matmul_bias(a, b, bias, block_m=1024):
    """(M, K) @ (K, N) + bias. a/b bf16, bias/output f32."""
    M, K = a.shape
    _, Nw = b.shape
    bm = min(block_m, _round_up(M, 8))
    Mp = _round_up(M, bm)
    if Mp != M:
        a = jnp.pad(a, ((0, Mp - M), (0, 0)))
    out = pl.pallas_call(
        _matmul_bias_kernel,
        out_shape=jax.ShapeDtypeStruct((Mp, Nw), jnp.float32),
        grid=(Mp // bm,),
        in_specs=[
            pl.BlockSpec((bm, K), lambda i: (i, 0)),
            pl.BlockSpec((K, Nw), lambda i: (0, 0)),
            pl.BlockSpec((1, Nw), lambda i: (0, 0)),
        ],
        out_specs=pl.BlockSpec((bm, Nw), lambda i: (i, 0)),
        compiler_params=pltpu.CompilerParams(
            dimension_semantics=("parallel",),
            vmem_limit_bytes=_VMEM_LIMIT,
        ),
    )(a, b, bias.reshape(1, Nw).astype(jnp.float32))
    return out[:M]


def pallas_bn_relu(x, gamma, beta, *, phase_groups=1, out_dtype=jnp.float32,
                   block_m=1024, eps=1e-5):
    """Training-mode BatchNorm (biased var) + ReLU over rows of x: (M, phase_groups*C).

    Column p*C + c shares statistics with every phase p and every row (so stats
    stay global over all spatial positions). Two tiled Pallas passes:
      pass 1: per-column sum / sumsq accumulation (arbitrary grid axis),
      pass 2: fused scale/shift + ReLU (parallel grid axis).
    Zero-padded rows do not perturb the sums; we divide by the true count.
    """
    M, Cw = x.shape
    C = Cw // phase_groups
    bm = min(block_m, _round_up(M, 8))
    Mp = _round_up(M, bm)
    if Mp != M:
        x = jnp.pad(x, ((0, Mp - M), (0, 0)))
    grid = (Mp // bm,)

    s, sq = pl.pallas_call(
        _bn_stats_kernel,
        out_shape=(jax.ShapeDtypeStruct((1, Cw), jnp.float32),
                   jax.ShapeDtypeStruct((1, Cw), jnp.float32)),
        grid=grid,
        in_specs=[pl.BlockSpec((bm, Cw), lambda i: (i, 0))],
        out_specs=(pl.BlockSpec((1, Cw), lambda i: (0, 0)),
                   pl.BlockSpec((1, Cw), lambda i: (0, 0))),
        compiler_params=pltpu.CompilerParams(
            dimension_semantics=("arbitrary",),
            vmem_limit_bytes=_VMEM_LIMIT,
        ),
    )(x)

    count = M * phase_groups
    s_c = jnp.sum(s.reshape(phase_groups, C), axis=0)
    sq_c = jnp.sum(sq.reshape(phase_groups, C), axis=0)
    mean = s_c / count
    var = sq_c / count - mean * mean
    scale_c = gamma * jax.lax.rsqrt(var + eps)
    shift_c = beta - mean * scale_c
    scale = jnp.tile(scale_c.reshape(1, C), (1, phase_groups))
    shift = jnp.tile(shift_c.reshape(1, C), (1, phase_groups))

    y = pl.pallas_call(
        _scale_shift_relu_kernel,
        out_shape=jax.ShapeDtypeStruct((Mp, Cw), out_dtype),
        grid=grid,
        in_specs=[
            pl.BlockSpec((bm, Cw), lambda i: (i, 0)),
            pl.BlockSpec((1, Cw), lambda i: (0, 0)),
            pl.BlockSpec((1, Cw), lambda i: (0, 0)),
        ],
        out_specs=pl.BlockSpec((bm, Cw), lambda i: (i, 0)),
        compiler_params=pltpu.CompilerParams(
            dimension_semantics=("parallel",),
            vmem_limit_bytes=_VMEM_LIMIT,
        ),
    )(x, scale, shift)
    return y[:M]


# -----------------------------------------------------------------------------
# Plain-JAX glue (im2col, bilinear sampling, weight re-layouts)
# -----------------------------------------------------------------------------
def im2col(x, kh, kw, stride, pad, dilation):
    """x: (N,H,W,C) -> ((N*Ho*Wo, kh*kw*C), Ho, Wo); patch order k*C + c, k = i*kw + j."""
    N, H, W, C = x.shape
    xp = jnp.pad(x, ((0, 0), (pad, pad), (pad, pad), (0, 0)))
    Ho = (H + 2 * pad - dilation * (kh - 1) - 1) // stride + 1
    Wo = (W + 2 * pad - dilation * (kw - 1) - 1) // stride + 1
    patches = []
    for i in range(kh):
        for j in range(kw):
            sl = xp[
                :,
                i * dilation: i * dilation + (Ho - 1) * stride + 1: stride,
                j * dilation: j * dilation + (Wo - 1) * stride + 1: stride,
                :,
            ]
            patches.append(sl)
    cols = jnp.stack(patches, axis=3)  # (N, Ho, Wo, kh*kw, C)
    return cols.reshape(N * Ho * Wo, kh * kw * C), Ho, Wo


def _bilinear_sample(img, h, w):
    """img: (H,W,C); h,w: (Ho,Wo) float sampling locations. DCNv2 semantics."""
    H, W, _ = img.shape
    h0 = jnp.floor(h)
    w0 = jnp.floor(w)

    def corner(hi, wi):
        valid = (hi >= 0) & (hi <= H - 1) & (wi >= 0) & (wi <= W - 1)
        hic = jnp.clip(hi, 0, H - 1).astype(jnp.int32)
        wic = jnp.clip(wi, 0, W - 1).astype(jnp.int32)
        v = img[hic, wic]  # (Ho, Wo, C) gather
        return jnp.where(valid[..., None], v, 0.0)

    lh = h - h0
    lw = w - w0
    v = (
        ((1 - lh) * (1 - lw))[..., None] * corner(h0, w0)
        + ((1 - lh) * lw)[..., None] * corner(h0, w0 + 1)
        + (lh * (1 - lw))[..., None] * corner(h0 + 1, w0)
        + (lh * lw)[..., None] * corner(h0 + 1, w0 + 1)
    )
    inside = (h > -1.0) & (h < H) & (w > -1.0) & (w < W)
    return jnp.where(inside[..., None], v, 0.0)


def deform_sample(x, offset, pad, dilation):
    """x: (N,H,W,C); offset: (N,H,W,18), channel 2k -> dh, 2k+1 -> dw of tap k.
    Returns sampled columns (N, H, W, 9, C)."""
    N, H, W, C = x.shape
    oh = jnp.arange(H, dtype=jnp.float32)
    ow = jnp.arange(W, dtype=jnp.float32)
    base_h = oh[:, None] - pad  # stride 1
    base_w = ow[None, :] - pad
    cols = []
    for k in range(9):
        i, j = k // 3, k % 3
        dh = offset[..., 2 * k]
        dw = offset[..., 2 * k + 1]
        h = base_h[None, :, :] + i * dilation + dh
        w = base_w[None, :, :] + j * dilation + dw
        cols.append(jax.vmap(_bilinear_sample)(x, h, w))  # (N,H,W,C)
    return jnp.stack(cols, axis=3)  # (N,H,W,9,C)


def build_up_phase_weight(w_up):
    """ConvTranspose2d(k=4, s=2, p=1) expressed as ONE stride-1 3x3 conv whose
    output channels are the 4 output subpixel phases.

    w_up: (C_in, C_out, 4, 4) PyTorch ConvTranspose2d layout.
    Returns (9*C_in, 4*C_out): rows = tap*C_in + ci (matching im2col), cols =
    phase*C_out + co with phase = r*2 + s (r = output-row subpixel, s = col).
    """
    cin, cout = w_up.shape[0], w_up.shape[1]
    w_eq = jnp.zeros((9, cin, 4, cout), jnp.float32)
    for r in range(2):
        for s in range(2):
            p = r * 2 + s
            for di in range(2):
                for dj in range(2):
                    ki = (3 - 2 * di) if r == 0 else (2 - 2 * di)
                    kj = (3 - 2 * dj) if s == 0 else (2 - 2 * dj)
                    tap = (r + di) * 3 + (s + dj)
                    w_eq = w_eq.at[tap, :, p, :].set(w_up[:, :, ki, kj])
    return w_eq.reshape(9 * cin, 4 * cout)


# -----------------------------------------------------------------------------
# DeformLayer forward
# -----------------------------------------------------------------------------
@functools.partial(jax.jit, static_argnames=("dilation",))
def deform_layer_forward(x_nchw, params, dilation=1):
    x = jnp.transpose(x_nchw, (0, 2, 3, 1)).astype(jnp.float32)  # NHWC
    N, H, W, Cin = x.shape
    Cout = params["w_dcn"].shape[0]
    M = N * H * W

    # --- dcn_offset: Conv2d(Cin, 27, k=3, s=1, p=dilation, d=dilation) ---
    # TODO(synk): the im2col writes a 9x-expanded copy of x; a halo-reading
    #             Pallas conv kernel would remove that HBM stream entirely.
    cols, _, _ = im2col(x.astype(jnp.bfloat16), 3, 3, 1, dilation, dilation)
    w_off = params["w_off"].transpose(2, 3, 1, 0).reshape(9 * Cin, 27)
    offset_mask = pallas_matmul_bias(cols, w_off.astype(jnp.bfloat16), params["b_off"])
    offset_mask = offset_mask.reshape(N, H, W, 27)

    # chunk -> (offset_x, offset_y, mask); cat(offset_x, offset_y) == channels 0..17
    offset = offset_mask[..., :18]
    mask = jax.nn.sigmoid(offset_mask[..., 18:27])  # (N,H,W,9)

    # --- ModulatedDeformConv (DCNv2), k=3, s=1, p=dilation, groups=1, dg=1 ---
    # TODO(synk): the fractional bilinear gather stays in plain JAX; the sigmoid
    #             modulation is fused here so only one bf16 (M, 9*Cin) column
    #             stream feeds the Pallas MXU matmul (no repeated mask tensor).
    cols_d = deform_sample(x, offset, pad=dilation, dilation=dilation)  # (N,H,W,9,Cin)
    cols_d = (cols_d * mask[..., None]).astype(jnp.bfloat16).reshape(M, 9 * Cin)
    w_dcn = params["w_dcn"].transpose(2, 3, 1, 0).reshape(9 * Cin, Cout)
    out = pallas_matmul_bias(cols_d, w_dcn.astype(jnp.bfloat16),
                             jnp.zeros((Cout,), jnp.float32))           # (M, Cout) f32

    # --- dcn_bn + ReLU (tiled two-pass Pallas BN); bf16 output feeds the deconv ---
    out = pallas_bn_relu(out, params["g1"], params["be1"], out_dtype=jnp.bfloat16)
    out = out.reshape(N, H, W, Cout)

    # --- up_sample: ConvTranspose2d(Cout, Cout, k=4, s=2, p=1, bias=False) as a
    #     single 3x3 conv over the BN output producing the 4 subpixel phases ---
    cols_u, _, _ = im2col(out, 3, 3, 1, 1, 1)                           # (M, 9*Cout) bf16
    w_up4 = build_up_phase_weight(params["w_up"])                       # (9*Cout, 4*Cout)
    up4 = pallas_matmul_bias(cols_u, w_up4.astype(jnp.bfloat16),
                             jnp.zeros((4 * Cout,), jnp.float32))       # (M, 4*Cout) f32

    # --- up_bn + ReLU on the phase-packed (lane-dense) layout; stats are still
    #     per true output channel (shared across the 4 phases) ---
    up4 = pallas_bn_relu(up4, params["g2"], params["be2"], phase_groups=4,
                         out_dtype=jnp.float32)

    # interleave subpixel phases and convert to NCHW in one transpose
    up = up4.reshape(N, H, W, 2, 2, Cout)
    up = jnp.transpose(up, (0, 5, 1, 3, 2, 4)).reshape(N, Cout, 2 * H, 2 * W)
    return up


# -----------------------------------------------------------------------------
if __name__ == "__main__":
    key = jax.random.PRNGKey(0)
    ks = jax.random.split(key, 10)

    N, Cin, H, W = 2, 8, 16, 16
    Cout = 8

    x = jax.random.normal(ks[0], (N, Cin, H, W), jnp.float32)

    params = {
        # dcn_offset: Conv2d(Cin, 27, 3x3) weight/bias
        "w_off": 0.05 * jax.random.normal(ks[1], (27, Cin, 3, 3), jnp.float32),
        "b_off": 0.05 * jax.random.normal(ks[2], (27,), jnp.float32),
        # dcn: ModulatedDeformConv weight (Cout, Cin, 3, 3), no bias
        "w_dcn": 0.1 * jax.random.normal(ks[3], (Cout, Cin, 3, 3), jnp.float32),
        # dcn_bn gamma/beta
        "g1": 1.0 + 0.1 * jax.random.normal(ks[4], (Cout,), jnp.float32),
        "be1": 0.1 * jax.random.normal(ks[5], (Cout,), jnp.float32),
        # up_sample: ConvTranspose2d weight (in=Cout, out=Cout, 4, 4), no bias
        "w_up": 0.1 * jax.random.normal(ks[6], (Cout, Cout, 4, 4), jnp.float32),
        # up_bn gamma/beta
        "g2": 1.0 + 0.1 * jax.random.normal(ks[7], (Cout,), jnp.float32),
        "be2": 0.1 * jax.random.normal(ks[8], (Cout,), jnp.float32),
    }

    y = deform_layer_forward(x, params, dilation=1)
    y = jax.block_until_ready(y)
    assert y.shape == (N, Cout, 2 * H, 2 * W), y.shape
    assert jnp.all(jnp.isfinite(y))
    print("KERNEL_OK")
</pallas_src>

<mosaic_0001>
module attributes {stable_mosaic.version = 11 : i64} {
  func.func @_matmul_bias_kernel(%arg0: i32, %arg1: memref<512x72xbf16, #tpu.memory_space<vmem>>, %arg2: memref<72x27xbf16, #tpu.memory_space<vmem>>, %arg3: memref<1x27xf32, #tpu.memory_space<vmem>>, %arg4: memref<512x27xf32, #tpu.memory_space<vmem>>) attributes {dimension_semantics = [#tpu.dimension_semantics<parallel>], iteration_bounds = array<i64: 1>, scalar_prefetch = 0 : i64, scratch_operands = 0 : i64, tpu.core_type = #tpu.core_type<tc>, window_params = [{transform_indices = @transform_0, window_bounds = array<i64: 512, 72>}, {pipeline_mode = #tpu.pipeline_mode<synchronous>, transform_indices = @transform_1, window_bounds = array<i64: 72, 27>}, {pipeline_mode = #tpu.pipeline_mode<synchronous>, transform_indices = @transform_2, window_bounds = array<i64: 1, 27>}, {transform_indices = @transform_3, window_bounds = array<i64: 512, 27>}]} {
    %c0 = arith.constant 0 : index
    %c0_0 = arith.constant 0 : index
    %0 = vector.load %arg1[%c0, %c0_0] : memref<512x72xbf16, #tpu.memory_space<vmem>>, vector<512x72xbf16>
    %c0_1 = arith.constant 0 : index
    %c0_2 = arith.constant 0 : index
    %1 = vector.load %arg2[%c0_1, %c0_2] : memref<72x27xbf16, #tpu.memory_space<vmem>>, vector<72x27xbf16>
    %cst = arith.constant dense<0.000000e+00> : vector<512x27xf32>
    %2 = tpu.matmul %0, %1, %cst {dimension_numbers = #tpu.dot_dimension_numbers<[1], [0], [0], [1], [0, 0, 1, 1], [], []>} : vector<512x72xbf16>, vector<72x27xbf16>, vector<512x27xf32> -> vector<512x27xf32>
    %c0_3 = arith.constant 0 : index
    %c0_4 = arith.constant 0 : index
    %3 = vector.load %arg3[%c0_3, %c0_4] : memref<1x27xf32, #tpu.memory_space<vmem>>, vector<1x27xf32>
    %4 = vector.broadcast %3 : vector<1x27xf32> to vector<512x27xf32>
    %5 = arith.addf %2, %4 : vector<512x27xf32>
    %c0_5 = arith.constant 0 : index
    %c0_6 = arith.constant 0 : index
    %6 = vector.load %arg4[%c0_5, %c0_6] : memref<512x27xf32, #tpu.memory_space<vmem>>, vector<512x27xf32>
    tpu.vector_store %arg4[%c0_5, %c0_6], %5 {strides = array<i32>} : memref<512x27xf32, #tpu.memory_space<vmem>>, vector<512x27xf32>,
    return
  }
  func.func @transform_0(%arg0: i32) -> (i32, i32) {
    %c0_i32 = arith.constant 0 : i32
    %c0_i32_0 = arith.constant 0 : i32
    return %arg0, %c0_i32 : i32, i32
  }
  func.func @transform_1(%arg0: i32) -> (i32, i32) {
    %c0_i32 = arith.constant 0 : i32
    %c0_i32_0 = arith.constant 0 : i32
    %c0_i32_1 = arith.constant 0 : i32
    return %c0_i32, %c0_i32_0 : i32, i32
  }
  func.func @transform_2(%arg0: i32) -> (i32, i32) {
    %c0_i32 = arith.constant 0 : i32
    %c0_i32_0 = arith.constant 0 : i32
    %c0_i32_1 = arith.constant 0 : i32
    return %c0_i32, %c0_i32_0 : i32, i32
  }
  func.func @transform_3(%arg0: i32) -> (i32, i32) {
    %c0_i32 = arith.constant 0 : i32
    %c0_i32_0 = arith.constant 0 : i32
    return %arg0, %c0_i32 : i32, i32
  }
}

module attributes {stable_mosaic.version = 11 : i64} {
  func.func @_matmul_bias_kernel(%arg0: i32, %arg1: memref<512x72xbf16, #tpu.memory_space<vmem>>, %arg2: memref<72x8xbf16, #tpu.memory_space<vmem>>, %arg3: memref<1x8xf32, #tpu.memory_space<vmem>>, %arg4: memref<512x8xf32, #tpu.memory_space<vmem>>) attributes {dimension_semantics = [#tpu.dimension_semantics<parallel>], iteration_bounds = array<i64: 1>, scalar_prefetch = 0 : i64, scratch_operands = 0 : i64, tpu.core_type = #tpu.core_type<tc>, window_params = [{transform_indices = @transform_0, window_bounds = array<i64: 512, 72>}, {pipeline_mode = #tpu.pipeline_mode<synchronous>, transform_indices = @transform_1, window_bounds = array<i64: 72, 8>}, {pipeline_mode = #tpu.pipeline_mode<synchronous>, transform_indices = @transform_2, window_bounds = array<i64: 1, 8>}, {transform_indices = @transform_3, window_bounds = array<i64: 512, 8>}]} {
    %c0 = arith.constant 0 : index
    %c0_0 = arith.constant 0 : index
    %0 = vector.load %arg1[%c0, %c0_0] : memref<512x72xbf16, #tpu.memory_space<vmem>>, vector<512x72xbf16>
    %c0_1 = arith.constant 0 : index
    %c0_2 = arith.constant 0 : index
    %1 = vector.load %arg2[%c0_1, %c0_2] : memref<72x8xbf16, #tpu.memory_space<vmem>>, vector<72x8xbf16>
    %cst = arith.constant dense<0.000000e+00> : vector<512x8xf32>
    %2 = tpu.matmul %0, %1, %cst {dimension_numbers = #tpu.dot_dimension_numbers<[1], [0], [0], [1], [0, 0, 1, 1], [], []>} : vector<512x72xbf16>, vector<72x8xbf16>, vector<512x8xf32> -> vector<512x8xf32>
    %c0_3 = arith.constant 0 : index
    %c0_4 = arith.constant 0 : index
    %3 = vector.load %arg3[%c0_3, %c0_4] : memref<1x8xf32, #tpu.memory_space<vmem>>, vector<1x8xf32>
    %4 = vector.broadcast %3 : vector<1x8xf32> to vector<512x8xf32>
    %5 = arith.addf %2, %4 : vector<512x8xf32>
    %c0_5 = arith.constant 0 : index
    %c0_6 = arith.constant 0 : index
    %6 = vector.load %arg4[%c0_5, %c0_6] : memref<512x8xf32, #tpu.memory_space<vmem>>, vector<512x8xf32>
    tpu.vector_store %arg4[%c0_5, %c0_6], %5 {strides = array<i32>} : memref<512x8xf32, #tpu.memory_space<vmem>>, vector<512x8xf32>,
    return
  }
  func.func @transform_0(%arg0: i32) -> (i32, i32) {
    %c0_i32 = arith.constant 0 : i32
    %c0_i32_0 = arith.constant 0 : i32
    return %arg0, %c0_i32 : i32, i32
  }
  func.func @transform_1(%arg0: i32) -> (i32, i32) {
    %c0_i32 = arith.constant 0 : i32
    %c0_i32_0 = arith.constant 0 : i32
    %c0_i32_1 = arith.constant 0 : i32
    return %c0_i32, %c0_i32_0 : i32, i32
  }
  func.func @transform_2(%arg0: i32) -> (i32, i32) {
    %c0_i32 = arith.constant 0 : i32
    %c0_i32_0 = arith.constant 0 : i32
    %c0_i32_1 = arith.constant 0 : i32
    return %c0_i32, %c0_i32_0 : i32, i32
  }
  func.func @transform_3(%arg0: i32) -> (i32, i32) {
    %c0_i32 = arith.constant 0 : i32
    %c0_i32_0 = arith.constant 0 : i32
    return %arg0, %c0_i32 : i32, i32
  }
}

module attributes {stable_mosaic.version = 11 : i64} {
  func.func @_bn_stats_kernel(%arg0: i32, %arg1: memref<512x8xf32, #tpu.memory_space<vmem>>, %arg2: memref<1x8xf32, #tpu.memory_space<vmem>>, %arg3: memref<1x8xf32, #tpu.memory_space<vmem>>) attributes {dimension_semantics = [#tpu.dimension_semantics<arbitrary>], iteration_bounds = array<i64: 1>, scalar_prefetch = 0 : i64, scratch_operands = 0 : i64, tpu.core_type = #tpu.core_type<tc>, window_params = [{transform_indices = @transform_0, window_bounds = array<i64: 512, 8>}, {pipeline_mode = #tpu.pipeline_mode<synchronous>, transform_indices = @transform_1, window_bounds = array<i64: 1, 8>}, {pipeline_mode = #tpu.pipeline_mode<synchronous>, transform_indices = @transform_2, window_bounds = array<i64: 1, 8>}]} {
    %c0_i32 = arith.constant 0 : i32
    %0 = arith.cmpi eq, %arg0, %c0_i32 : i32
    %1 = arith.extui %0 : i1 to i32
    %c0_i32_0 = arith.constant 0 : i32
    %2 = arith.cmpi ne, %1, %c0_i32_0 : i32
    scf.if %2 {
      %cst_11 = arith.constant 0.000000e+00 : f32
      %15 = vector.broadcast %cst_11 : f32 to vector<1x8xf32>
      %c0_12 = arith.constant 0 : index
      %c0_13 = arith.constant 0 : index
      %16 = vector.load %arg2[%c0_12, %c0_13] : memref<1x8xf32, #tpu.memory_space<vmem>>, vector<1x8xf32>
      tpu.vector_store %arg2[%c0_12, %c0_13], %15 {strides = array<i32>} : memref<1x8xf32, #tpu.memory_space<vmem>>, vector<1x8xf32>,
      %cst_14 = arith.constant 0.000000e+00 : f32
      %17 = vector.broadcast %cst_14 : f32 to vector<1x8xf32>
      %c0_15 = arith.constant 0 : index
      %c0_16 = arith.constant 0 : index
      %18 = vector.load %arg3[%c0_15, %c0_16] : memref<1x8xf32, #tpu.memory_space<vmem>>, vector<1x8xf32>
      tpu.vector_store %arg3[%c0_15, %c0_16], %17 {strides = array<i32>} : memref<1x8xf32, #tpu.memory_space<vmem>>, vector<1x8xf32>,
    } else {
    }
    %c0 = arith.constant 0 : index
    %c0_1 = arith.constant 0 : index
    %3 = vector.load %arg1[%c0, %c0_1] : memref<512x8xf32, #tpu.memory_space<vmem>>, vector<512x8xf32>
    %c0_2 = arith.constant 0 : index
    %c0_3 = arith.constant 0 : index
    %4 = vector.load %arg2[%c0_2, %c0_3] : memref<1x8xf32, #tpu.memory_space<vmem>>, vector<1x8xf32>
    %cst = arith.constant dense<0.000000e+00> : vector<8xf32>
    %5 = vector.multi_reduction <add>, %3, %cst [0] : vector<512x8xf32> to vector<8xf32>
    %6 = vector.shape_cast %5 : vector<8xf32> to vector<1x8xf32>
    %7 = arith.addf %4, %6 : vector<1x8xf32>
    %c0_4 = arith.constant 0 : index
    %c0_5 = arith.constant 0 : index
    %8 = vector.load %arg2[%c0_4, %c0_5] : memref<1x8xf32, #tpu.memory_space<vmem>>, vector<1x8xf32>
    tpu.vector_store %arg2[%c0_4, %c0_5], %7 {strides = array<i32>} : memref<1x8xf32, #tpu.memory_space<vmem>>, vector<1x8xf32>,
    %c0_6 = arith.constant 0 : index
    %c0_7 = arith.constant 0 : index
    %9 = vector.load %arg3[%c0_6, %c0_7] : memref<1x8xf32, #tpu.memory_space<vmem>>, vector<1x8xf32>
    %10 = arith.mulf %3, %3 : vector<512x8xf32>
    %cst_8 = arith.constant dense<0.000000e+00> : vector<8xf32>
    %11 = vector.multi_reduction <add>, %10, %cst_8 [0] : vector<512x8xf32> to vector<8xf32>
    %12 = vector.shape_cast %11 : vector<8xf32> to vector<1x8xf32>
    %13 = arith.addf %9, %12 : vector<1x8xf32>
    %c0_9 = arith.constant 0 : index
    %c0_10 = arith.constant 0 : index
    %14 = vector.load %arg3[%c0_9, %c0_10] : memref<1x8xf32, #tpu.memory_space<vmem>>, vector<1x8xf32>
    tpu.vector_store %arg3[%c0_9, %c0_10], %13 {strides = array<i32>} : memref<1x8xf32, #tpu.memory_space<vmem>>, vector<1x8xf32>,
    return
  }
  func.func @transform_0(%arg0: i32) -> (i32, i32) {
    %c0_i32 = arith.constant 0 : i32
    %c0_i32_0 = arith.constant 0 : i32
    return %arg0, %c0_i32 : i32, i32
  }
  func.func @transform_1(%arg0: i32) -> (i32, i32) {
    %c0_i32 = arith.constant 0 : i32
    %c0_i32_0 = arith.constant 0 : i32
    %c0_i32_1 = arith.constant 0 : i32
    return %c0_i32, %c0_i32_0 : i32, i32
  }
  func.func @transform_2(%arg0: i32) -> (i32, i32) {
    %c0_i32 = arith.constant 0 : i32
    %c0_i32_0 = arith.constant 0 : i32
    %c0_i32_1 = arith.constant 0 : i32
    return %c0_i32, %c0_i32_0 : i32, i32
  }
}

module attributes {stable_mosaic.version = 11 : i64} {
  func.func @_scale_shift_relu_kernel(%arg0: i32, %arg1: memref<512x8xf32, #tpu.memory_space<vmem>>, %arg2: memref<1x8xf32, #tpu.memory_space<vmem>>, %arg3: memref<1x8xf32, #tpu.memory_space<vmem>>, %arg4: memref<512x8xbf16, #tpu.memory_space<vmem>>) attributes {dimension_semantics = [#tpu.dimension_semantics<parallel>], iteration_bounds = array<i64: 1>, scalar_prefetch = 0 : i64, scratch_operands = 0 : i64, tpu.core_type = #tpu.core_type<tc>, window_params = [{transform_indices = @transform_0, window_bounds = array<i64: 512, 8>}, {pipeline_mode = #tpu.pipeline_mode<synchronous>, transform_indices = @transform_1, window_bounds = array<i64: 1, 8>}, {pipeline_mode = #tpu.pipeline_mode<synchronous>, transform_indices = @transform_2, window_bounds = array<i64: 1, 8>}, {transform_indices = @transform_3, window_bounds = array<i64: 512, 8>}]} {
    %c0 = arith.constant 0 : index
    %c0_0 = arith.constant 0 : index
    %0 = vector.load %arg1[%c0, %c0_0] : memref<512x8xf32, #tpu.memory_space<vmem>>, vector<512x8xf32>
    %c0_1 = arith.constant 0 : index
    %c0_2 = arith.constant 0 : index
    %1 = vector.load %arg2[%c0_1, %c0_2] : memref<1x8xf32, #tpu.memory_space<vmem>>, vector<1x8xf32>
    %2 = vector.broadcast %1 : vector<1x8xf32> to vector<512x8xf32>
    %3 = arith.mulf %0, %2 : vector<512x8xf32>
    %c0_3 = arith.constant 0 : index
    %c0_4 = arith.constant 0 : index
    %4 = vector.load %arg3[%c0_3, %c0_4] : memref<1x8xf32, #tpu.memory_space<vmem>>, vector<1x8xf32>
    %5 = vector.broadcast %4 : vector<1x8xf32> to vector<512x8xf32>
    %6 = arith.addf %3, %5 : vector<512x8xf32>
    %cst = arith.constant 0.000000e+00 : f32
    %7 = vector.broadcast %cst : f32 to vector<512x8xf32>
    %8 = arith.maximumf %6, %7 : vector<512x8xf32>
    %9 = arith.truncf %8 : vector<512x8xf32> to vector<512x8xbf16>
    %c0_5 = arith.constant 0 : index
    %c0_6 = arith.constant 0 : index
    %10 = vector.load %arg4[%c0_5, %c0_6] : memref<512x8xbf16, #tpu.memory_space<vmem>>, vector<512x8xbf16>
    tpu.vector_store %arg4[%c0_5, %c0_6], %9 {strides = array<i32>} : memref<512x8xbf16, #tpu.memory_space<vmem>>, vector<512x8xbf16>,
    return
  }
  func.func @transform_0(%arg0: i32) -> (i32, i32) {
    %c0_i32 = arith.constant 0 : i32
    %c0_i32_0 = arith.constant 0 : i32
    return %arg0, %c0_i32 : i32, i32
  }
  func.func @transform_1(%arg0: i32) -> (i32, i32) {
    %c0_i32 = arith.constant 0 : i32
    %c0_i32_0 = arith.constant 0 : i32
    %c0_i32_1 = arith.constant 0 : i32
    return %c0_i32, %c0_i32_0 : i32, i32
  }
  func.func @transform_2(%arg0: i32) -> (i32, i32) {
    %c0_i32 = arith.constant 0 : i32
    %c0_i32_0 = arith.constant 0 : i32
    %c0_i32_1 = arith.constant 0 : i32
    return %c0_i32, %c0_i32_0 : i32, i32
  }
  func.func @transform_3(%arg0: i32) -> (i32, i32) {
    %c0_i32 = arith.constant 0 : i32
    %c0_i32_0 = arith.constant 0 : i32
    return %arg0, %c0_i32 : i32, i32
  }
}

module attributes {stable_mosaic.version = 11 : i64} {
  func.func @_matmul_bias_kernel(%arg0: i32, %arg1: memref<512x72xbf16, #tpu.memory_space<vmem>>, %arg2: memref<72x32xbf16, #tpu.memory_space<vmem>>, %arg3: memref<1x32xf32, #tpu.memory_space<vmem>>, %arg4: memref<512x32xf32, #tpu.memory_space<vmem>>) attributes {dimension_semantics = [#tpu.dimension_semantics<parallel>], iteration_bounds = array<i64: 1>, scalar_prefetch = 0 : i64, scratch_operands = 0 : i64, tpu.core_type = #tpu.core_type<tc>, window_params = [{transform_indices = @transform_0, window_bounds = array<i64: 512, 72>}, {pipeline_mode = #tpu.pipeline_mode<synchronous>, transform_indices = @transform_1, window_bounds = array<i64: 72, 32>}, {pipeline_mode = #tpu.pipeline_mode<synchronous>, transform_indices = @transform_2, window_bounds = array<i64: 1, 32>}, {transform_indices = @transform_3, window_bounds = array<i64: 512, 32>}]} {
    %c0 = arith.constant 0 : index
    %c0_0 = arith.constant 0 : index
    %0 = vector.load %arg1[%c0, %c0_0] : memref<512x72xbf16, #tpu.memory_space<vmem>>, vector<512x72xbf16>
    %c0_1 = arith.constant 0 : index
    %c0_2 = arith.constant 0 : index
    %1 = vector.load %arg2[%c0_1, %c0_2] : memref<72x32xbf16, #tpu.memory_space<vmem>>, vector<72x32xbf16>
    %cst = arith.constant dense<0.000000e+00> : vector<512x32xf32>
    %2 = tpu.matmul %0, %1, %cst {dimension_numbers = #tpu.dot_dimension_numbers<[1], [0], [0], [1], [0, 0, 1, 1], [], []>} : vector<512x72xbf16>, vector<72x32xbf16>, vector<512x32xf32> -> vector<512x32xf32>
    %c0_3 = arith.constant 0 : index
    %c0_4 = arith.constant 0 : index
    %3 = vector.load %arg3[%c0_3, %c0_4] : memref<1x32xf32, #tpu.memory_space<vmem>>, vector<1x32xf32>
    %4 = vector.broadcast %3 : vector<1x32xf32> to vector<512x32xf32>
    %5 = arith.addf %2, %4 : vector<512x32xf32>
    %c0_5 = arith.constant 0 : index
    %c0_6 = arith.constant 0 : index
    %6 = vector.load %arg4[%c0_5, %c0_6] : memref<512x32xf32, #tpu.memory_space<vmem>>, vector<512x32xf32>
    tpu.vector_store %arg4[%c0_5, %c0_6], %5 {strides = array<i32>} : memref<512x32xf32, #tpu.memory_space<vmem>>, vector<512x32xf32>,
    return
  }
  func.func @transform_0(%arg0: i32) -> (i32, i32) {
    %c0_i32 = arith.constant 0 : i32
    %c0_i32_0 = arith.constant 0 : i32
    return %arg0, %c0_i32 : i32, i32
  }
  func.func @transform_1(%arg0: i32) -> (i32, i32) {
    %c0_i32 = arith.constant 0 : i32
    %c0_i32_0 = arith.constant 0 : i32
    %c0_i32_1 = arith.constant 0 : i32
    return %c0_i32, %c0_i32_0 : i32, i32
  }
  func.func @transform_2(%arg0: i32) -> (i32, i32) {
    %c0_i32 = arith.constant 0 : i32
    %c0_i32_0 = arith.constant 0 : i32
    %c0_i32_1 = arith.constant 0 : i32
    return %c0_i32, %c0_i32_0 : i32, i32
  }
  func.func @transform_3(%arg0: i32) -> (i32, i32) {
    %c0_i32 = arith.constant 0 : i32
    %c0_i32_0 = arith.constant 0 : i32
    return %arg0, %c0_i32 : i32, i32
  }
}

module attributes {stable_mosaic.version = 11 : i64} {
  func.func @_bn_stats_kernel(%arg0: i32, %arg1: memref<512x32xf32, #tpu.memory_space<vmem>>, %arg2: memref<1x32xf32, #tpu.memory_space<vmem>>, %arg3: memref<1x32xf32, #tpu.memory_space<vmem>>) attributes {dimension_semantics = [#tpu.dimension_semantics<arbitrary>], iteration_bounds = array<i64: 1>, scalar_prefetch = 0 : i64, scratch_operands = 0 : i64, tpu.core_type = #tpu.core_type<tc>, window_params = [{transform_indices = @transform_0, window_bounds = array<i64: 512, 32>}, {pipeline_mode = #tpu.pipeline_mode<synchronous>, transform_indices = @transform_1, window_bounds = array<i64: 1, 32>}, {pipeline_mode = #tpu.pipeline_mode<synchronous>, transform_indices = @transform_2, window_bounds = array<i64: 1, 32>}]} {
    %c0_i32 = arith.constant 0 : i32
    %0 = arith.cmpi eq, %arg0, %c0_i32 : i32
    %1 = arith.extui %0 : i1 to i32
    %c0_i32_0 = arith.constant 0 : i32
    %2 = arith.cmpi ne, %1, %c0_i32_0 : i32
    scf.if %2 {
      %cst_11 = arith.constant 0.000000e+00 : f32
      %15 = vector.broadcast %cst_11 : f32 to vector<1x32xf32>
      %c0_12 = arith.constant 0 : index
      %c0_13 = arith.constant 0 : index
      %16 = vector.load %arg2[%c0_12, %c0_13] : memref<1x32xf32, #tpu.memory_space<vmem>>, vector<1x32xf32>
      tpu.vector_store %arg2[%c0_12, %c0_13], %15 {strides = array<i32>} : memref<1x32xf32, #tpu.memory_space<vmem>>, vector<1x32xf32>,
      %cst_14 = arith.constant 0.000000e+00 : f32
      %17 = vector.broadcast %cst_14 : f32 to vector<1x32xf32>
      %c0_15 = arith.constant 0 : index
      %c0_16 = arith.constant 0 : index
      %18 = vector.load %arg3[%c0_15, %c0_16] : memref<1x32xf32, #tpu.memory_space<vmem>>, vector<1x32xf32>
      tpu.vector_store %arg3[%c0_15, %c0_16], %17 {strides = array<i32>} : memref<1x32xf32, #tpu.memory_space<vmem>>, vector<1x32xf32>,
    } else {
    }
    %c0 = arith.constant 0 : index
    %c0_1 = arith.constant 0 : index
    %3 = vector.load %arg1[%c0, %c0_1] : memref<512x32xf32, #tpu.memory_space<vmem>>, vector<512x32xf32>
    %c0_2 = arith.constant 0 : index
    %c0_3 = arith.constant 0 : index
    %4 = vector.load %arg2[%c0_2, %c0_3] : memref<1x32xf32, #tpu.memory_space<vmem>>, vector<1x32xf32>
    %cst = arith.constant dense<0.000000e+00> : vector<32xf32>
    %5 = vector.multi_reduction <add>, %3, %cst [0] : vector<512x32xf32> to vector<32xf32>
    %6 = vector.shape_cast %5 : vector<32xf32> to vector<1x32xf32>
    %7 = arith.addf %4, %6 : vector<1x32xf32>
    %c0_4 = arith.constant 0 : index
    %c0_5 = arith.constant 0 : index
    %8 = vector.load %arg2[%c0_4, %c0_5] : memref<1x32xf32, #tpu.memory_space<vmem>>, vector<1x32xf32>
    tpu.vector_store %arg2[%c0_4, %c0_5], %7 {strides = array<i32>} : memref<1x32xf32, #tpu.memory_space<vmem>>, vector<1x32xf32>,
    %c0_6 = arith.constant 0 : index
    %c0_7 = arith.constant 0 : index
    %9 = vector.load %arg3[%c0_6, %c0_7] : memref<1x32xf32, #tpu.memory_space<vmem>>, vector<1x32xf32>
    %10 = arith.mulf %3, %3 : vector<512x32xf32>
    %cst_8 = arith.constant dense<0.000000e+00> : vector<32xf32>
    %11 = vector.multi_reduction <add>, %10, %cst_8 [0] : vector<512x32xf32> to vector<32xf32>
    %12 = vector.shape_cast %11 : vector<32xf32> to vector<1x32xf32>
    %13 = arith.addf %9, %12 : vector<1x32xf32>
    %c0_9 = arith.constant 0 : index
    %c0_10 = arith.constant 0 : index
    %14 = vector.load %arg3[%c0_9, %c0_10] : memref<1x32xf32, #tpu.memory_space<vmem>>, vector<1x32xf32>
    tpu.vector_store %arg3[%c0_9, %c0_10], %13 {strides = array<i32>} : memref<1x32xf32, #tpu.memory_space<vmem>>, vector<1x32xf32>,
    return
  }
  func.func @transform_0(%arg0: i32) -> (i32, i32) {
    %c0_i32 = arith.constant 0 : i32
    %c0_i32_0 = arith.constant 0 : i32
    return %arg0, %c0_i32 : i32, i32
  }
  func.func @transform_1(%arg0: i32) -> (i32, i32) {
    %c0_i32 = arith.constant 0 : i32
    %c0_i32_0 = arith.constant 0 : i32
    %c0_i32_1 = arith.constant 0 : i32
    return %c0_i32, %c0_i32_0 : i32, i32
  }
  func.func @transform_2(%arg0: i32) -> (i32, i32) {
    %c0_i32 = arith.constant 0 : i32
    %c0_i32_0 = arith.constant 0 : i32
    %c0_i32_1 = arith.constant 0 : i32
    return %c0_i32, %c0_i32_0 : i32, i32
  }
}

module attributes {stable_mosaic.version = 11 : i64} {
  func.func @_scale_shift_relu_kernel(%arg0: i32, %arg1: memref<512x32xf32, #tpu.memory_space<vmem>>, %arg2: memref<1x32xf32, #tpu.memory_space<vmem>>, %arg3: memref<1x32xf32, #tpu.memory_space<vmem>>, %arg4: memref<512x32xf32, #tpu.memory_space<vmem>>) attributes {dimension_semantics = [#tpu.dimension_semantics<parallel>], iteration_bounds = array<i64: 1>, scalar_prefetch = 0 : i64, scratch_operands = 0 : i64, tpu.core_type = #tpu.core_type<tc>, window_params = [{transform_indices = @transform_0, window_bounds = array<i64: 512, 32>}, {pipeline_mode = #tpu.pipeline_mode<synchronous>, transform_indices = @transform_1, window_bounds = array<i64: 1, 32>}, {pipeline_mode = #tpu.pipeline_mode<synchronous>, transform_indices = @transform_2, window_bounds = array<i64: 1, 32>}, {transform_indices = @transform_3, window_bounds = array<i64: 512, 32>}]} {
    %c0 = arith.constant 0 : index
    %c0_0 = arith.constant 0 : index
    %0 = vector.load %arg1[%c0, %c0_0] : memref<512x32xf32, #tpu.memory_space<vmem>>, vector<512x32xf32>
    %c0_1 = arith.constant 0 : index
    %c0_2 = arith.constant 0 : index
    %1 = vector.load %arg2[%c0_1, %c0_2] : memref<1x32xf32, #tpu.memory_space<vmem>>, vector<1x32xf32>
    %2 = vector.broadcast %1 : vector<1x32xf32> to vector<512x32xf32>
    %3 = arith.mulf %0, %2 : vector<512x32xf32>
    %c0_3 = arith.constant 0 : index
    %c0_4 = arith.constant 0 : index
    %4 = vector.load %arg3[%c0_3, %c0_4] : memref<1x32xf32, #tpu.memory_space<vmem>>, vector<1x32xf32>
    %5 = vector.broadcast %4 : vector<1x32xf32> to vector<512x32xf32>
    %6 = arith.addf %3, %5 : vector<512x32xf32>
    %cst = arith.constant 0.000000e+00 : f32
    %7 = vector.broadcast %cst : f32 to vector<512x32xf32>
    %8 = arith.maximumf %6, %7 : vector<512x32xf32>
    %c0_5 = arith.constant 0 : index
    %c0_6 = arith.constant 0 : index
    %9 = vector.load %arg4[%c0_5, %c0_6] : memref<512x32xf32, #tpu.memory_space<vmem>>, vector<512x32xf32>
    tpu.vector_store %arg4[%c0_5, %c0_6], %8 {strides = array<i32>} : memref<512x32xf32, #tpu.memory_space<vmem>>, vector<512x32xf32>,
    return
  }
  func.func @transform_0(%arg0: i32) -> (i32, i32) {
    %c0_i32 = arith.constant 0 : i32
    %c0_i32_0 = arith.constant 0 : i32
    return %arg0, %c0_i32 : i32, i32
  }
  func.func @transform_1(%arg0: i32) -> (i32, i32) {
    %c0_i32 = arith.constant 0 : i32
    %c0_i32_0 = arith.constant 0 : i32
    %c0_i32_1 = arith.constant 0 : i32
    return %c0_i32, %c0_i32_0 : i32, i32
  }
  func.func @transform_2(%arg0: i32) -> (i32, i32) {
    %c0_i32 = arith.constant 0 : i32
    %c0_i32_0 = arith.constant 0 : i32
    %c0_i32_1 = arith.constant 0 : i32
    return %c0_i32, %c0_i32_0 : i32, i32
  }
  func.func @transform_3(%arg0: i32) -> (i32, i32) {
    %c0_i32 = arith.constant 0 : i32
    %c0_i32_0 = arith.constant 0 : i32
    return %arg0, %c0_i32 : i32, i32
  }
}

</mosaic_0001>

<llo_original>
// kernel: deform_layer_forward.7
$region0: #{deform_layer_forward.7}
  #allocation0 [shape = 'u32[]', space=smem, size = 0x4, offset = 0x4, fixed_abs, tag = 'smem constant byte address 0x4 - core index']
  #allocation1 [shape = 'u32[144,128]{1,0:T(1,128)}', space=vmem, size = 0x12000, scoped, tag = 'internal scratch']
  %s0 = inlined_call_operand.vmem [shape: bf16[512,72], index: 0, kind: input, shape index: {}]
  %s1 = inlined_call_operand.vmem [shape: bf16[72,27], index: 1, kind: input, shape index: {}]
  %s2 = inlined_call_operand.vmem [shape: f32[1,27], index: 2, kind: input, shape index: {}]
  %s3 = inlined_call_operand.vmem [shape: f32[512,27], index: 3, kind: output, shape index: {}]
  %s4 = sld [smem:[#allocation0]]
  $region22: #{deform_layer_forward.7} parent=0
    _
  %s6 = ssub.s32 1, %s4
  %s7 = scalar_select 0, %s6, %s4
  // Predicated region
  $region2: #{deform_layer_forward.7} parent=0 // pred_check
    _
  $region3: #{deform_layer_forward.7} parent=0 // pred_check_branch
    %9 = sbr.rel (0) target = $region5
  $region4: #{deform_layer_forward.7} parent=0 // pred_region
    _
  $region5: #{deform_layer_forward.7} parent=0 // pred_fallthru
    _
  // Predicated region
  $region6: #{deform_layer_forward.7} parent=0 // pred_check
    _
  $region7: #{deform_layer_forward.7} parent=0 // pred_check_branch
    %11 = sbr.rel (0) target = $region9
  $region8: #{deform_layer_forward.7} parent=0 // pred_region
    _
  $region9: #{deform_layer_forward.7} parent=0 // pred_fallthru
    _
  // Predicated region
  $region10: #{deform_layer_forward.7} parent=0 // pred_check
    _
  $region11: #{deform_layer_forward.7} parent=0 // pred_check_branch
    %13 = sbr.rel (0) target = $region13
  $region12: #{deform_layer_forward.7} parent=0 // pred_region
    _
  $region13: #{deform_layer_forward.7} parent=0 // pred_fallthru
    _
  %v15 = vld [vmem:[%s0] sm:$0xf]
  %v16 = vld [vmem:[%s0 + $0x4] sm:$0xf]
  %v17 = vld [vmem:[%s0 + $0x8] sm:$0xf]
  %v18 = vld [vmem:[%s0 + $0xc] sm:$0xf]
  %v19 = vld [vmem:[%s0 + $0x10] sm:$0xf]
  %v20 = vld [vmem:[%s0 + $0x14] sm:$0xf]
  %v21 = vld [vmem:[%s0 + $0x18] sm:$0xf]
  %v22 = vld [vmem:[%s0 + $0x1c] sm:$0xf]
  %v23 = vld [vmem:[%s0 + $0x20] sm:$0xf]
  %v24 = vld [vmem:[%s0 + $0x24] sm:$0xf]
  %v25 = vld [vmem:[%s0 + $0x28] sm:$0xf]
  %v26 = vld [vmem:[%s0 + $0x2c] sm:$0xf]
  %v27 = vld [vmem:[%s0 + $0x30] sm:$0xf]
  %v28 = vld [vmem:[%s0 + $0x34] sm:$0xf]
  %v29 = vld [vmem:[%s0 + $0x38] sm:$0xf]
  %v30 = vld [vmem:[%s0 + $0x3c] sm:$0xf]
  %v31 = vld [vmem:[%s0 + $0x40] sm:$0xf]
  %v32 = vld [vmem:[%s0 + $0x44] sm:$0xf]
  %v33 = vld [vmem:[%s0 + $0x48] sm:$0xf]
  %v34 = vld [vmem:[%s0 + $0x4c] sm:$0xf]
  %v35 = vld [vmem:[%s0 + $0x50] sm:$0xf]
  %v36 = vld [vmem:[%s0 + $0x54] sm:$0xf]
  %v37 = vld [vmem:[%s0 + $0x58] sm:$0xf]
  %v38 = vld [vmem:[%s0 + $0x5c] sm:$0xf]
  %v39 = vld [vmem:[%s0 + $0x60] sm:$0xf]
  %v40 = vld [vmem:[%s0 + $0x64] sm:$0xf]
  %v41 = vld [vmem:[%s0 + $0x68] sm:$0xf]
  %v42 = vld [vmem:[%s0 + $0x6c] sm:$0xf]
  %v43 = vld [vmem:[%s0 + $0x70] sm:$0xf]
  %v44 = vld [vmem:[%s0 + $0x74] sm:$0xf]
  %v45 = vld [vmem:[%s0 + $0x78] sm:$0xf]
  %v46 = vld [vmem:[%s0 + $0x7c] sm:$0xf]
  %v47 = vld [vmem:[%s0 + $0x80] sm:$0xf]
  %v48 = vld [vmem:[%s0 + $0x84] sm:$0xf]
  %v49 = vld [vmem:[%s0 + $0x88] sm:$0xf]
  %v50 = vld [vmem:[%s0 + $0x8c] sm:$0xf]
  %v51 = vld [vmem:[%s0 + $0x90] sm:$0xf]
  %v52 = vld [vmem:[%s0 + $0x94] sm:$0xf]
  %v53 = vld [vmem:[%s0 + $0x98] sm:$0xf]
  %v54 = vld [vmem:[%s0 + $0x9c] sm:$0xf]
  %v55 = vld [vmem:[%s0 + $0xa0] sm:$0xf]
  %v56 = vld [vmem:[%s0 + $0xa4] sm:$0xf]
  %v57 = vld [vmem:[%s0 + $0xa8] sm:$0xf]
  %v58 = vld [vmem:[%s0 + $0xac] sm:$0xf]
  %v59 = vld [vmem:[%s0 + $0xb0] sm:$0xf]
  %v60 = vld [vmem:[%s0 + $0xb4] sm:$0xf]
  %v61 = vld [vmem:[%s0 + $0xb8] sm:$0xf]
  %v62 = vld [vmem:[%s0 + $0xbc] sm:$0xf]
  %v63 = vld [vmem:[%s0 + $0xc0] sm:$0xf]
  %v64 = vld [vmem:[%s0 + $0xc4] sm:$0xf]
  %v65 = vld [vmem:[%s0 + $0xc8] sm:$0xf]
  %v66 = vld [vmem:[%s0 + $0xcc] sm:$0xf]
  %v67 = vld [vmem:[%s0 + $0xd0] sm:$0xf]
  %v68 = vld [vmem:[%s0 + $0xd4] sm:$0xf]
  %v69 = vld [vmem:[%s0 + $0xd8] sm:$0xf]
  %v70 = vld [vmem:[%s0 + $0xdc] sm:$0xf]
  %v71 = vld [vmem:[%s0 + $0xe0] sm:$0xf]
  %v72 = vld [vmem:[%s0 + $0xe4] sm:$0xf]
  %v73 = vld [vmem:[%s0 + $0xe8] sm:$0xf]
  %v74 = vld [vmem:[%s0 + $0xec] sm:$0xf]
  %v75 = vld [vmem:[%s0 + $0xf0] sm:$0xf]
  %v76 = vld [vmem:[%s0 + $0xf4] sm:$0xf]
  %v77 = vld [vmem:[%s0 + $0xf8] sm:$0xf]
  %v78 = vld [vmem:[%s0 + $0xfc] sm:$0xf]
  %v79 = vld [vmem:[%s1] sm:$0xf]
  %v80 = vld [vmem:[%s1 + $0x4] sm:$0xf]
  %v81 = vld [vmem:[%s1 + $0x8] sm:$0xf]
  %v82 = vld [vmem:[%s1 + $0xc] sm:$0xf]
  %v83 = vld [vmem:[%s1 + $0x10] sm:$0xf]
  %v84 = vld [vmem:[%s1 + $0x14] sm:$0xf]
  %v85 = vld [vmem:[%s1 + $0x18] sm:$0xf]
  %v86 = vld [vmem:[%s1 + $0x1c] sm:$0xf]
  %v87 = vld [vmem:[%s1 + $0x20] sm:$0xf]
  %v88 = vld [vmem:[%s2] sm:$0x1]
  %v90 = vlaneseq
  %v91 = vshrl.u32 %v90, 7
  %v92 = vsub.s32 0, %v91
  %v93 = vrot.slane %v88, %v92
  %v159 = vunpack.c.l.b16 %v15
  %v160 = vunpack.c.l.b16 %v16
  %v161 = vunpack.c.l.b16 %v17
  %v162 = vunpack.c.l.b16 %v18
  %v163 = vunpack.c.l.b16 %v19
  %v164 = vunpack.c.l.b16 %v20
  %v165 = vunpack.c.l.b16 %v21
  %v166 = vunpack.c.l.b16 %v22
  %v167 = vunpack.c.l.b16 %v23
  %v168 = vunpack.c.l.b16 %v24
  %v169 = vunpack.c.l.b16 %v25
  %v170 = vunpack.c.l.b16 %v26
  %v171 = vunpack.c.l.b16 %v27
  %v172 = vunpack.c.l.b16 %v28
  %v173 = vunpack.c.l.b16 %v29
  %v174 = vunpack.c.l.b16 %v30
  %v175 = vunpack.c.l.b16 %v31
  %v176 = vunpack.c.l.b16 %v32
  %v177 = vunpack.c.l.b16 %v33
  %v178 = vunpack.c.l.b16 %v34
  %v179 = vunpack.c.l.b16 %v35
  %v180 = vunpack.c.l.b16 %v36
  %v181 = vunpack.c.l.b16 %v37
  %v182 = vunpack.c.l.b16 %v38
  %v183 = vunpack.c.l.b16 %v39
  %v184 = vunpack.c.l.b16 %v40
  %v185 = vunpack.c.l.b16 %v41
  %v186 = vunpack.c.l.b16 %v42
  %v187 = vunpack.c.l.b16 %v43
  %v188 = vunpack.c.l.b16 %v44
  %v189 = vunpack.c.l.b16 %v45
  %v190 = vunpack.c.l.b16 %v46
  %v191 = vunpack.c.l.b16 %v47
  %v192 = vunpack.c.l.b16 %v48
  %v193 = vunpack.c.l.b16 %v49
  %v194 = vunpack.c.l.b16 %v50
  %v195 = vunpack.c.l.b16 %v51
  %v196 = vunpack.c.l.b16 %v52
  %v197 = vunpack.c.l.b16 %v53
  %v198 = vunpack.c.l.b16 %v54
  %v199 = vunpack.c.l.b16 %v55
  %v200 = vunpack.c.l.b16 %v56
  %v201 = vunpack.c.l.b16 %v57
  %v202 = vunpack.c.l.b16 %v58
  %v203 = vunpack.c.l.b16 %v59
  %v204 = vunpack.c.l.b16 %v60
  %v205 = vunpack.c.l.b16 %v61
  %v206 = vunpack.c.l.b16 %v62
  %v207 = vunpack.c.l.b16 %v63
  %v208 = vunpack.c.l.b16 %v64
  %v209 = vunpack.c.l.b16 %v65
  %v210 = vunpack.c.l.b16 %v66
  %v211 = vunpack.c.l.b16 %v67
  %v212 = vunpack.c.l.b16 %v68
  %v213 = vunpack.c.l.b16 %v69
  %v214 = vunpack.c.l.b16 %v70
  %v215 = vunpack.c.l.b16 %v71
  %v216 = vunpack.c.l.b16 %v72
  %v217 = vunpack.c.l.b16 %v73
  %v218 = vunpack.c.l.b16 %v74
  %v219 = vunpack.c.l.b16 %v75
  %v220 = vunpack.c.l.b16 %v76
  %v221 = vunpack.c.l.b16 %v77
  %v222 = vunpack.c.l.b16 %v78
  %v223 = vpack.c.b16 %v160, %v159
  %v224 = vpack.c.b16 %v162, %v161
  %v225 = vpack.c.b16 %v164, %v163
  %v226 = vpack.c.b16 %v166, %v165
  %v227 = vpack.c.b16 %v168, %v167
  %v228 = vpack.c.b16 %v170, %v169
  %v229 = vpack.c.b16 %v172, %v171
  %v230 = vpack.c.b16 %v174, %v173
  %v231 = vpack.c.b16 %v176, %v175
  %v232 = vpack.c.b16 %v178, %v177
  %v233 = vpack.c.b16 %v180, %v179
  %v234 = vpack.c.b16 %v182, %v181
  %v235 = vpack.c.b16 %v184, %v183
  %v236 = vpack.c.b16 %v186, %v185
  %v237 = vpack.c.b16 %v188, %v187
  %v238 = vpack.c.b16 %v190, %v189
  %v239 = vpack.c.b16 %v192, %v191
  %v240 = vpack.c.b16 %v194, %v193
  %v241 = vpack.c.b16 %v196, %v195
  %v242 = vpack.c.b16 %v198, %v197
  %v243 = vpack.c.b16 %v200, %v199
  %v244 = vpack.c.b16 %v202, %v201
  %v245 = vpack.c.b16 %v204, %v203
  %v246 = vpack.c.b16 %v206, %v205
  %v247 = vpack.c.b16 %v208, %v207
  %v248 = vpack.c.b16 %v210, %v209
  %v249 = vpack.c.b16 %v212, %v211
  %v250 = vpack.c.b16 %v214, %v213
  %v251 = vpack.c.b16 %v216, %v215
  %v252 = vpack.c.b16 %v218, %v217
  %v253 = vpack.c.b16 %v220, %v219
  %v254 = vpack.c.b16 %v222, %v221
  %v264 = vunpack.c.l.b16 %v79
  %v265 = vunpack.c.l.b16 %v80
  %v266 = vunpack.c.l.b16 %v81
  %v267 = vunpack.c.l.b16 %v82
  %v268 = vunpack.c.l.b16 %v83
  %v269 = vunpack.c.l.b16 %v84
  %v270 = vunpack.c.l.b16 %v85
  %v271 = vunpack.c.l.b16 %v86
  %v272 = vunpack.c.l.b16 %v87
  %v273 = vpack.c.b16 %v265, %v264
  %v274 = vpack.c.b16 %v267, %v266
  %v275 = vpack.c.b16 %v269, %v268
  %v276 = vpack.c.b16 %v271, %v270
  %v277 = vpack.c.b16 %v272, %v272
  %vm282 = vcmask 588800
  %v284 = vsel %vm282, %v223, 0
  %v287 = vsel %vm282, %v224, 0
  %v290 = vsel %vm282, %v225, 0
  %v293 = vsel %vm282, %v226, 0
  %v296 = vsel %vm282, %v227, 0
  %v299 = vsel %vm282, %v228, 0
  %v302 = vsel %vm282, %v229, 0
  %v305 = vsel %vm282, %v230, 0
  %v308 = vsel %vm282, %v231, 0
  %v311 = vsel %vm282, %v232, 0
  %v314 = vsel %vm282, %v233, 0
  %v317 = vsel %vm282, %v234, 0
  %v320 = vsel %vm282, %v235, 0
  %v323 = vsel %vm282, %v236, 0
  %v326 = vsel %vm282, %v237, 0
  %v329 = vsel %vm282, %v238, 0
  %v332 = vsel %vm282, %v239, 0
  %v335 = vsel %vm282, %v240, 0
  %v338 = vsel %vm282, %v241, 0
  %v341 = vsel %vm282, %v242, 0
  %v344 = vsel %vm282, %v243, 0
  %v347 = vsel %vm282, %v244, 0
  %v350 = vsel %vm282, %v245, 0
  %v353 = vsel %vm282, %v246, 0
  %v356 = vsel %vm282, %v247, 0
  %v359 = vsel %vm282, %v248, 0
  %v362 = vsel %vm282, %v249, 0
  %v365 = vsel %vm282, %v250, 0
  %v368 = vsel %vm282, %v251, 0
  %v371 = vsel %vm282, %v252, 0
  %v374 = vsel %vm282, %v253, 0
  %v377 = vsel %vm282, %v254, 0
  %vm379 = vcmask 1043456
  %v381 = vsel %vm379, %v277, 0
  %383 = vmatprep.subr.bf16.mxu0 0
  %384 = vmatpush1.bf16.msra.mxu0 0
  %385 = vmatprep.subr.bf16.mxu0 0
  %386 = vmatpush1.bf16.msra.mxu0 0
  %387 = vmatprep.subr.bf16.mxu0 0
  %388 = vmatpush1.bf16.msra.mxu0 0
  %389 = vmatprep.subr.bf16.mxu0 0
  %390 = vmatpush1.bf16.msra.mxu0 %v381
  %391 = vmatprep.subr.bf16.mxu0 0
  %392 = vmatpush1.bf16.msra.mxu0 %v276
  %393 = vmatprep.subr.bf16.mxu0 0
  %394 = vmatpush1.bf16.msra.mxu0 %v275
  %395 = vmatprep.subr.bf16.mxu0 0
  %396 = vmatpush1.bf16.msra.mxu0 %v274
  %397 = vmatprep.subr.bf16.mxu0 0
  %398 = vmatpush1.bf16.msra.mxu0 %v273
  %399 = vmatprep.subr.bf16.mxu0 0
  %400 = vmatpush2.bf16.msra.mxu0 0
  %401 = vmatprep.subr.bf16.mxu0 0
  %402 = vmatpush2.bf16.msra.mxu0 0
  %403 = vmatprep.subr.bf16.mxu0 0
  %404 = vmatpush2.bf16.msra.mxu0 0
  %405 = vmatprep.subr.bf16.mxu0 0
  %406 = vmatpush2.bf16.msra.mxu0 0
  %407 = vmatprep.subr.bf16.mxu0 0
  %408 = vmatpush2.bf16.msra.mxu0 0
  %409 = vmatprep.subr.bf16.mxu0 0
  %410 = vmatpush2.bf16.msra.mxu0 0
  %411 = vmatprep.subr.bf16.mxu0 0
  %412 = vmatpush2.bf16.msra.mxu0 0
  %413 = vmatprep.subr.bf16.mxu0 0
  %414 = vmatpush2.bf16.msra.mxu0 0
  %415 = vmatprep.mubr.bf16.mxu0 0
  %416 = vmatmul.mubr.bf16.gmra.mxu0 %v284
  %v417 = vpop.f32.mrf.mxu0
  %v418 = vadd.f32 %v93, %v417
  %v419 = vpop.f32.mrf.mxu0
  %v420 = vpop.f32.mrf.mxu0
  %v421 = vadd.f32 %v93, %v420
  %v422 = vpop.f32.mrf.mxu0
  %423 = vmatprep.mubr.bf16.mxu0 0
  %424 = vmatmul.mubr.bf16.gmra.mxu0 %v287
  %v425 = vpop.f32.mrf.mxu0
  %v426 = vadd.f32 %v93, %v425
  %v427 = vpop.f32.mrf.mxu0
  %v428 = vpop.f32.mrf.mxu0
  %v429 = vadd.f32 %v93, %v428
  %v430 = vpop.f32.mrf.mxu0
  %431 = vmatprep.mubr.bf16.mxu0 0
  %432 = vmatmul.mubr.bf16.gmra.mxu0 %v290
  %v433 = vpop.f32.mrf.mxu0
  %v434 = vadd.f32 %v93, %v433
  %v435 = vpop.f32.mrf.mxu0
  %v436 = vpop.f32.mrf.mxu0
  %v437 = vadd.f32 %v93, %v436
  %v438 = vpop.f32.mrf.mxu0
  %439 = vmatprep.mubr.bf16.mxu0 0
  %440 = vmatmul.mubr.bf16.gmra.mxu0 %v293
  %v441 = vpop.f32.mrf.mxu0
  %v442 = vadd.f32 %v93, %v441
  %v443 = vpop.f32.mrf.mxu0
  %v444 = vpop.f32.mrf.mxu0
  %v445 = vadd.f32 %v93, %v444
  %v446 = vpop.f32.mrf.mxu0
  %447 = vmatprep.mubr.bf16.mxu0 0
  %448 = vmatmul.mubr.bf16.gmra.mxu0 %v296
  %v449 = vpop.f32.mrf.mxu0
  %v450 = vadd.f32 %v93, %v449
  %v451 = vpop.f32.mrf.mxu0
  %v452 = vpop.f32.mrf.mxu0
  %v453 = vadd.f32 %v93, %v452
  %v454 = vpop.f32.mrf.mxu0
  %455 = vmatprep.mubr.bf16.mxu0 0
  %456 = vmatmul.mubr.bf16.gmra.mxu0 %v299
  %v457 = vpop.f32.mrf.mxu0
  %v458 = vadd.f32 %v93, %v457
  %v459 = vpop.f32.mrf.mxu0
  %v460 = vpop.f32.mrf.mxu0
  %v461 = vadd.f32 %v93, %v460
  %v462 = vpop.f32.mrf.mxu0
  %463 = vmatprep.mubr.bf16.mxu0 0
  %464 = vmatmul.mubr.bf16.gmra.mxu0 %v302
  %v465 = vpop.f32.mrf.mxu0
  %v466 = vadd.f32 %v93, %v465
  %v467 = vpop.f32.mrf.mxu0
  %v468 = vpop.f32.mrf.mxu0
  %v469 = vadd.f32 %v93, %v468
  %v470 = vpop.f32.mrf.mxu0
  %471 = vmatprep.mubr.bf16.mxu0 0
  %472 = vmatmul.mubr.bf16.gmra.mxu0 %v305
  %v473 = vpop.f32.mrf.mxu0
  %v474 = vadd.f32 %v93, %v473
  %v475 = vpop.f32.mrf.mxu0
  %v476 = vpop.f32.mrf.mxu0
  %v477 = vadd.f32 %v93, %v476
  %v478 = vpop.f32.mrf.mxu0
  %479 = vmatprep.mubr.bf16.mxu0 0
  %480 = vmatmul.mubr.bf16.gmra.mxu0 %v308
  %v481 = vpop.f32.mrf.mxu0
  %v482 = vadd.f32 %v93, %v481
  %v483 = vpop.f32.mrf.mxu0
  %v484 = vpop.f32.mrf.mxu0
  %v485 = vadd.f32 %v93, %v484
  %v486 = vpop.f32.mrf.mxu0
  %487 = vmatprep.mubr.bf16.mxu0 0
  %488 = vmatmul.mubr.bf16.gmra.mxu0 %v311
  %v489 = vpop.f32.mrf.mxu0
  %v490 = vadd.f32 %v93, %v489
  %v491 = vpop.f32.mrf.mxu0
  %v492 = vpop.f32.mrf.mxu0
  %v493 = vadd.f32 %v93, %v492
  %v494 = vpop.f32.mrf.mxu0
  %495 = vmatprep.mubr.bf16.mxu0 0
  %496 = vmatmul.mubr.bf16.gmra.mxu0 %v314
  %v497 = vpop.f32.mrf.mxu0
  %v498 = vadd.f32 %v93, %v497
  %v499 = vpop.f32.mrf.mxu0
  %v500 = vpop.f32.mrf.mxu0
  %v501 = vadd.f32 %v93, %v500
  %v502 = vpop.f32.mrf.mxu0
  %503 = vmatprep.mubr.bf16.mxu0 0
  %504 = vmatmul.mubr.bf16.gmra.mxu0 %v317
  %v505 = vpop.f32.mrf.mxu0
  %v506 = vadd.f32 %v93, %v505
  %v507 = vpop.f32.mrf.mxu0
  %v508 = vpop.f32.mrf.mxu0
  %v509 = vadd.f32 %v93, %v508
  %v510 = vpop.f32.mrf.mxu0
  %511 = vmatprep.mubr.bf16.mxu0 0
  %512 = vmatmul.mubr.bf16.gmra.mxu0 %v320
  %v513 = vpop.f32.mrf.mxu0
  %v514 = vadd.f32 %v93, %v513
  %v515 = vpop.f32.mrf.mxu0
  %v516 = vpop.f32.mrf.mxu0
  %v517 = vadd.f32 %v93, %v516
  %v518 = vpop.f32.mrf.mxu0
  %519 = vmatprep.mubr.bf16.mxu0 0
  %520 = vmatmul.mubr.bf16.gmra.mxu0 %v323
  %v521 = vpop.f32.mrf.mxu0
  %v522 = vadd.f32 %v93, %v521
  %v523 = vpop.f32.mrf.mxu0
  %v524 = vpop.f32.mrf.mxu0
  %v525 = vadd.f32 %v93, %v524
  %v526 = vpop.f32.mrf.mxu0
  %527 = vmatprep.mubr.bf16.mxu0 0
  %528 = vmatmul.mubr.bf16.gmra.mxu0 %v326
  %v529 = vpop.f32.mrf.mxu0
  %v530 = vadd.f32 %v93, %v529
  %v531 = vpop.f32.mrf.mxu0
  %v532 = vpop.f32.mrf.mxu0
  %v533 = vadd.f32 %v93, %v532
  %v534 = vpop.f32.mrf.mxu0
  %535 = vmatprep.mubr.bf16.mxu0 0
  %536 = vmatmul.mubr.bf16.gmra.mxu0 %v329
  %v537 = vpop.f32.mrf.mxu0
  %v538 = vadd.f32 %v93, %v537
  %v539 = vpop.f32.mrf.mxu0
  %v540 = vpop.f32.mrf.mxu0
  %v541 = vadd.f32 %v93, %v540
  %v542 = vpop.f32.mrf.mxu0
  %543 = vmatprep.mubr.bf16.mxu0 0
  %544 = vmatmul.mubr.bf16.gmra.mxu0 %v332
  %v545 = vpop.f32.mrf.mxu0
  %v546 = vadd.f32 %v93, %v545
  %v547 = vpop.f32.mrf.mxu0
  %v548 = vpop.f32.mrf.mxu0
  %v549 = vadd.f32 %v93, %v548
  %v550 = vpop.f32.mrf.mxu0
  %551 = vmatprep.mubr.bf16.mxu0 0
  %552 = vmatmul.mubr.bf16.gmra.mxu0 %v335
  %v553 = vpop.f32.mrf.mxu0
  %v554 = vadd.f32 %v93, %v553
  %v555 = vpop.f32.mrf.mxu0
  %v556 = vpop.f32.mrf.mxu0
  %v557 = vadd.f32 %v93, %v556
  %v558 = vpop.f32.mrf.mxu0
  %559 = vmatprep.mubr.bf16.mxu0 0
  %560 = vmatmul.mubr.bf16.gmra.mxu0 %v338
  %v561 = vpop.f32.mrf.mxu0
  %v562 = vadd.f32 %v93, %v561
  %v563 = vpop.f32.mrf.mxu0
  %v564 = vpop.f32.mrf.mxu0
  %v565 = vadd.f32 %v93, %v564
  %v566 = vpop.f32.mrf.mxu0
  %567 = vmatprep.mubr.bf16.mxu0 0
  %568 = vmatmul.mubr.bf16.gmra.mxu0 %v341
  %v569 = vpop.f32.mrf.mxu0
  %v570 = vadd.f32 %v93, %v569
  %v571 = vpop.f32.mrf.mxu0
  %v572 = vpop.f32.mrf.mxu0
  %v573 = vadd.f32 %v93, %v572
  %v574 = vpop.f32.mrf.mxu0
  %575 = vmatprep.mubr.bf16.mxu0 0
  %576 = vmatmul.mubr.bf16.gmra.mxu0 %v344
  %v577 = vpop.f32.mrf.mxu0
  %v578 = vadd.f32 %v93, %v577
  %v579 = vpop.f32.mrf.mxu0
  %v580 = vpop.f32.mrf.mxu0
  %v581 = vadd.f32 %v93, %v580
  %v582 = vpop.f32.mrf.mxu0
  %583 = vmatprep.mubr.bf16.mxu0 0
  %584 = vmatmul.mubr.bf16.gmra.mxu0 %v347
  %v585 = vpop.f32.mrf.mxu0
  %v586 = vadd.f32 %v93, %v585
  %v587 = vpop.f32.mrf.mxu0
  %v588 = vpop.f32.mrf.mxu0
  %v589 = vadd.f32 %v93, %v588
  %v590 = vpop.f32.mrf.mxu0
  %591 = vmatprep.mubr.bf16.mxu0 0
  %592 = vmatmul.mubr.bf16.gmra.mxu0 %v350
  %v593 = vpop.f32.mrf.mxu0
  %v594 = vadd.f32 %v93, %v593
  %v595 = vpop.f32.mrf.mxu0
  %v596 = vpop.f32.mrf.mxu0
  %v597 = vadd.f32 %v93, %v596
  %v598 = vpop.f32.mrf.mxu0
  %599 = vmatprep.mubr.bf16.mxu0 0
  %600 = vmatmul.mubr.bf16.gmra.mxu0 %v353
  %v601 = vpop.f32.mrf.mxu0
  %v602 = vadd.f32 %v93, %v601
  %v603 = vpop.f32.mrf.mxu0
  %v604 = vpop.f32.mrf.mxu0
  %v605 = vadd.f32 %v93, %v604
  %v606 = vpop.f32.mrf.mxu0
  %607 = vmatprep.mubr.bf16.mxu0 0
  %608 = vmatmul.mubr.bf16.gmra.mxu0 %v356
  %v609 = vpop.f32.mrf.mxu0
  %v610 = vadd.f32 %v93, %v609
  %v611 = vpop.f32.mrf.mxu0
  %v612 = vpop.f32.mrf.mxu0
  %v613 = vadd.f32 %v93, %v612
  %v614 = vpop.f32.mrf.mxu0
  %615 = vmatprep.mubr.bf16.mxu0 0
  %616 = vmatmul.mubr.bf16.gmra.mxu0 %v359
  %v617 = vpop.f32.mrf.mxu0
  %v618 = vadd.f32 %v93, %v617
  %v619 = vpop.f32.mrf.mxu0
  %v620 = vpop.f32.mrf.mxu0
  %v621 = vadd.f32 %v93, %v620
  %v622 = vpop.f32.mrf.mxu0
  %623 = vmatprep.mubr.bf16.mxu0 0
  %624 = vmatmul.mubr.bf16.gmra.mxu0 %v362
  %v625 = vpop.f32.mrf.mxu0
  %v626 = vadd.f32 %v93, %v625
  %v627 = vpop.f32.mrf.mxu0
  %v628 = vpop.f32.mrf.mxu0
  %v629 = vadd.f32 %v93, %v628
  %v630 = vpop.f32.mrf.mxu0
  %631 = vmatprep.mubr.bf16.mxu0 0
  %632 = vmatmul.mubr.bf16.gmra.mxu0 %v365
  %v633 = vpop.f32.mrf.mxu0
  %v634 = vadd.f32 %v93, %v633
  %v635 = vpop.f32.mrf.mxu0
  %v636 = vpop.f32.mrf.mxu0
  %v637 = vadd.f32 %v93, %v636
  %v638 = vpop.f32.mrf.mxu0
  %639 = vmatprep.mubr.bf16.mxu0 0
  %640 = vmatmul.mubr.bf16.gmra.mxu0 %v368
  %v641 = vpop.f32.mrf.mxu0
  %v642 = vadd.f32 %v93, %v641
  %v643 = vpop.f32.mrf.mxu0
  %v644 = vpop.f32.mrf.mxu0
  %v645 = vadd.f32 %v93, %v644
  %v646 = vpop.f32.mrf.mxu0
  %647 = vmatprep.mubr.bf16.mxu0 0
  %648 = vmatmul.mubr.bf16.gmra.mxu0 %v371
  %v649 = vpop.f32.mrf.mxu0
  %v650 = vadd.f32 %v93, %v649
  %v651 = vpop.f32.mrf.mxu0
  %v652 = vpop.f32.mrf.mxu0
  %v653 = vadd.f32 %v93, %v652
  %v654 = vpop.f32.mrf.mxu0
  %655 = vmatprep.mubr.bf16.mxu0 0
  %656 = vmatmul.mubr.bf16.gmra.mxu0 %v374
  %v657 = vpop.f32.mrf.mxu0
  %v658 = vadd.f32 %v93, %v657
  %v659 = vpop.f32.mrf.mxu0
  %v660 = vpop.f32.mrf.mxu0
  %v661 = vadd.f32 %v93, %v660
  %v662 = vpop.f32.mrf.mxu0
  %663 = vmatprep.mubr.bf16.mxu0 0
  %664 = vmatmul.mubr.bf16.gmra.mxu0 %v377
  %v665 = vpop.f32.mrf.mxu0
  %v666 = vadd.f32 %v93, %v665
  %v667 = vpop.f32.mrf.mxu0
  %v668 = vpop.f32.mrf.mxu0
  %v669 = vadd.f32 %v93, %v668
  %v670 = vpop.f32.mrf.mxu0
  %671 = vdwg.mxu0
  %vm672 = vcmask 220160
  %673 = vst.msk [vmem:[%s3] sm:$0xff] %vm672, %v418
  %674 = vst.msk [vmem:[%s3 + $0x8] sm:$0xff] %vm672, %v421
  %675 = vst.msk [vmem:[%s3 + $0x10] sm:$0xff] %vm672, %v426
  %676 = vst.msk [vmem:[%s3 + $0x18] sm:$0xff] %vm672, %v429
  %677 = vst.msk [vmem:[%s3 + $0x20] sm:$0xff] %vm672, %v434
  %678 = vst.msk [vmem:[%s3 + $0x28] sm:$0xff] %vm672, %v437
  %679 = vst.msk [vmem:[%s3 + $0x30] sm:$0xff] %vm672, %v442
  %680 = vst.msk [vmem:[%s3 + $0x38] sm:$0xff] %vm672, %v445
  %681 = vst.msk [vmem:[%s3 + $0x40] sm:$0xff] %vm672, %v450
  %682 = vst.msk [vmem:[%s3 + $0x48] sm:$0xff] %vm672, %v453
  %683 = vst.msk [vmem:[%s3 + $0x50] sm:$0xff] %vm672, %v458
  %684 = vst.msk [vmem:[%s3 + $0x58] sm:$0xff] %vm672, %v461
  %685 = vst.msk [vmem:[%s3 + $0x60] sm:$0xff] %vm672, %v466
  %686 = vst.msk [vmem:[%s3 + $0x68] sm:$0xff] %vm672, %v469
  %687 = vst.msk [vmem:[%s3 + $0x70] sm:$0xff] %vm672, %v474
  %688 = vst.msk [vmem:[%s3 + $0x78] sm:$0xff] %vm672, %v477
  %689 = vst.msk [vmem:[%s3 + $0x80] sm:$0xff] %vm672, %v482
  %690 = vst.msk [vmem:[%s3 + $0x88] sm:$0xff] %vm672, %v485
  %691 = vst.msk [vmem:[%s3 + $0x90] sm:$0xff] %vm672, %v490
  %692 = vst.msk [vmem:[%s3 + $0x98] sm:$0xff] %vm672, %v493
  %693 = vst.msk [vmem:[%s3 + $0xa0] sm:$0xff] %vm672, %v498
  %694 = vst.msk [vmem:[%s3 + $0xa8] sm:$0xff] %vm672, %v501
  %695 = vst.msk [vmem:[%s3 + $0xb0] sm:$0xff] %vm672, %v506
  %696 = vst.msk [vmem:[%s3 + $0xb8] sm:$0xff] %vm672, %v509
  %697 = vst.msk [vmem:[%s3 + $0xc0] sm:$0xff] %vm672, %v514
  %698 = vst.msk [vmem:[%s3 + $0xc8] sm:$0xff] %vm672, %v517
  %699 = vst.msk [vmem:[%s3 + $0xd0] sm:$0xff] %vm672, %v522
  %700 = vst.msk [vmem:[%s3 + $0xd8] sm:$0xff] %vm672, %v525
  %701 = vst.msk [vmem:[%s3 + $0xe0] sm:$0xff] %vm672, %v530
  %702 = vst.msk [vmem:[%s3 + $0xe8] sm:$0xff] %vm672, %v533
  %703 = vst.msk [vmem:[%s3 + $0xf0] sm:$0xff] %vm672, %v538
  %704 = vst.msk [vmem:[%s3 + $0xf8] sm:$0xff] %vm672, %v541
  %705 = vst.msk [vmem:[%s3 + $0x100] sm:$0xff] %vm672, %v546
  %706 = vst.msk [vmem:[%s3 + $0x108] sm:$0xff] %vm672, %v549
  %707 = vst.msk [vmem:[%s3 + $0x110] sm:$0xff] %vm672, %v554
  %708 = vst.msk [vmem:[%s3 + $0x118] sm:$0xff] %vm672, %v557
  %709 = vst.msk [vmem:[%s3 + $0x120] sm:$0xff] %vm672, %v562
  %710 = vst.msk [vmem:[%s3 + $0x128] sm:$0xff] %vm672, %v565
  %711 = vst.msk [vmem:[%s3 + $0x130] sm:$0xff] %vm672, %v570
  %712 = vst.msk [vmem:[%s3 + $0x138] sm:$0xff] %vm672, %v573
  %713 = vst.msk [vmem:[%s3 + $0x140] sm:$0xff] %vm672, %v578
  %714 = vst.msk [vmem:[%s3 + $0x148] sm:$0xff] %vm672, %v581
  %715 = vst.msk [vmem:[%s3 + $0x150] sm:$0xff] %vm672, %v586
  %716 = vst.msk [vmem:[%s3 + $0x158] sm:$0xff] %vm672, %v589
  %717 = vst.msk [vmem:[%s3 + $0x160] sm:$0xff] %vm672, %v594
  %718 = vst.msk [vmem:[%s3 + $0x168] sm:$0xff] %vm672, %v597
  %719 = vst.msk [vmem:[%s3 + $0x170] sm:$0xff] %vm672, %v602
  %720 = vst.msk [vmem:[%s3 + $0x178] sm:$0xff] %vm672, %v605
  %721 = vst.msk [vmem:[%s3 + $0x180] sm:$0xff] %vm672, %v610
  %722 = vst.msk [vmem:[%s3 + $0x188] sm:$0xff] %vm672, %v613
  %723 = vst.msk [vmem:[%s3 + $0x190] sm:$0xff] %vm672, %v618
  %724 = vst.msk [vmem:[%s3 + $0x198] sm:$0xff] %vm672, %v621
  %725 = vst.msk [vmem:[%s3 + $0x1a0] sm:$0xff] %vm672, %v626
  %726 = vst.msk [vmem:[%s3 + $0x1a8] sm:$0xff] %vm672, %v629
  %727 = vst.msk [vmem:[%s3 + $0x1b0] sm:$0xff] %vm672, %v634
  %728 = vst.msk [vmem:[%s3 + $0x1b8] sm:$0xff] %vm672, %v637
  %729 = vst.msk [vmem:[%s3 + $0x1c0] sm:$0xff] %vm672, %v642
  %730 = vst.msk [vmem:[%s3 + $0x1c8] sm:$0xff] %vm672, %v645
  %731 = vst.msk [vmem:[%s3 + $0x1d0] sm:$0xff] %vm672, %v650
  %732 = vst.msk [vmem:[%s3 + $0x1d8] sm:$0xff] %vm672, %v653
  %733 = vst.msk [vmem:[%s3 + $0x1e0] sm:$0xff] %vm672, %v658
  %734 = vst.msk [vmem:[%s3 + $0x1e8] sm:$0xff] %vm672, %v661
  %735 = vst.msk [vmem:[%s3 + $0x1f0] sm:$0xff] %vm672, %v666
  %736 = vst.msk [vmem:[%s3 + $0x1f8] sm:$0xff] %vm672, %v669
  // Predicated region
  $region14: #{deform_layer_forward.7} parent=0 // pred_check
    _
  $region15: #{deform_layer_forward.7} parent=0 // pred_check_branch
    %738 = sbr.rel (0) target = $region17
  $region16: #{deform_layer_forward.7} parent=0 // pred_region
    _
  $region17: #{deform_layer_forward.7} parent=0 // pred_fallthru
    _
  // Predicated region
  $region18: #{deform_layer_forward.7} parent=0 // pred_check
    _
  $region19: #{deform_layer_forward.7} parent=0 // pred_check_branch
    %740 = sbr.rel (0) target = $region21
  $region20: #{deform_layer_forward.7} parent=0 // pred_region
    _
  $region21: #{deform_layer_forward.7} parent=0 // pred_fallthru
    _

// kernel: deform_layer_forward.9
$region0: #{deform_layer_forward.9}
  #allocation0 [shape = 'u32[]', space=smem, size = 0x4, offset = 0x4, fixed_abs, tag = 'smem constant byte address 0x4 - core index']
  #allocation1 [shape = 'u32[144,128]{1,0:T(1,128)}', space=vmem, size = 0x12000, scoped, tag = 'internal scratch']
  %s0 = inlined_call_operand.vmem [shape: f32[512,8], index: 0, kind: input, shape index: {}]
  %s1 = inlined_call_operand.vmem [shape: f32[1,8], index: 1, kind: output, shape index: {0}]
  %s2 = inlined_call_operand.vmem [shape: f32[1,8], index: 2, kind: output, shape index: {1}]
  %3 = xla_tuple %s1, %s2
  %s4 = sld [smem:[#allocation0]]
  $region26: #{deform_layer_forward.9} parent=0
    _
  %s6 = ssub.s32 1, %s4
  %s7 = scalar_select 0, %s6, %s4
  // Predicated region
  $region2: #{deform_layer_forward.9} parent=0 // pred_check
    _
  $region3: #{deform_layer_forward.9} parent=0 // pred_check_branch
    %9 = sbr.rel (0) target = $region5
  $region4: #{deform_layer_forward.9} parent=0 // pred_region
    _
  $region5: #{deform_layer_forward.9} parent=0 // pred_fallthru
    _
  %p10 = scmp.eq.s32.totalorder 0, 0
  // Predicated region
  $region6: #{deform_layer_forward.9} parent=0 // pred_check
    %p11 = pneg %p10
  $region7: #{deform_layer_forward.9} parent=0 // pred_check_branch
    %13 = sbr.rel (%p11) target = $region9
  $region8: #{deform_layer_forward.9} parent=0 // pred_region
    %vm14 = vcmask 57344
    %15 = vst.msk [vmem:[%s1] sm:$0x1] %vm14, 0.0
    %16 = vst.msk [vmem:[%s2] sm:$0x1] %vm14, 0.0
  $region9: #{deform_layer_forward.9} parent=0 // pred_fallthru
    _
  %v17 = vld [vmem:[%s0] sm:$0xff]
  %v18 = vld [vmem:[%s0 + $0x8] sm:$0xff]
  %v19 = vld [vmem:[%s0 + $0x10] sm:$0xff]
  %v20 = vld [vmem:[%s0 + $0x18] sm:$0xff]
  %v21 = vld [vmem:[%s0 + $0x20] sm:$0xff]
  %v22 = vld [vmem:[%s0 + $0x28] sm:$0xff]
  %v23 = vld [vmem:[%s0 + $0x30] sm:$0xff]
  %v24 = vld [vmem:[%s0 + $0x38] sm:$0xff]
  %v25 = vld [vmem:[%s0 + $0x40] sm:$0xff]
  %v26 = vld [vmem:[%s0 + $0x48] sm:$0xff]
  %v27 = vld [vmem:[%s0 + $0x50] sm:$0xff]
  %v28 = vld [vmem:[%s0 + $0x58] sm:$0xff]
  %v29 = vld [vmem:[%s0 + $0x60] sm:$0xff]
  %v30 = vld [vmem:[%s0 + $0x68] sm:$0xff]
  %v31 = vld [vmem:[%s0 + $0x70] sm:$0xff]
  %v32 = vld [vmem:[%s0 + $0x78] sm:$0xff]
  %v33 = vld [vmem:[%s0 + $0x80] sm:$0xff]
  %v34 = vld [vmem:[%s0 + $0x88] sm:$0xff]
  %v35 = vld [vmem:[%s0 + $0x90] sm:$0xff]
  %v36 = vld [vmem:[%s0 + $0x98] sm:$0xff]
  %v37 = vld [vmem:[%s0 + $0xa0] sm:$0xff]
  %v38 = vld [vmem:[%s0 + $0xa8] sm:$0xff]
  %v39 = vld [vmem:[%s0 + $0xb0] sm:$0xff]
  %v40 = vld [vmem:[%s0 + $0xb8] sm:$0xff]
  %v41 = vld [vmem:[%s0 + $0xc0] sm:$0xff]
  %v42 = vld [vmem:[%s0 + $0xc8] sm:$0xff]
  %v43 = vld [vmem:[%s0 + $0xd0] sm:$0xff]
  %v44 = vld [vmem:[%s0 + $0xd8] sm:$0xff]
  %v45 = vld [vmem:[%s0 + $0xe0] sm:$0xff]
  %v46 = vld [vmem:[%s0 + $0xe8] sm:$0xff]
  %v47 = vld [vmem:[%s0 + $0xf0] sm:$0xff]
  %v48 = vld [vmem:[%s0 + $0xf8] sm:$0xff]
  %v49 = vld [vmem:[%s0 + $0x100] sm:$0xff]
  %v50 = vld [vmem:[%s0 + $0x108] sm:$0xff]
  %v51 = vld [vmem:[%s0 + $0x110] sm:$0xff]
  %v52 = vld [vmem:[%s0 + $0x118] sm:$0xff]
  %v53 = vld [vmem:[%s0 + $0x120] sm:$0xff]
  %v54 = vld [vmem:[%s0 + $0x128] sm:$0xff]
  %v55 = vld [vmem:[%s0 + $0x130] sm:$0xff]
  %v56 = vld [vmem:[%s0 + $0x138] sm:$0xff]
  %v57 = vld [vmem:[%s0 + $0x140] sm:$0xff]
  %v58 = vld [vmem:[%s0 + $0x148] sm:$0xff]
  %v59 = vld [vmem:[%s0 + $0x150] sm:$0xff]
  %v60 = vld [vmem:[%s0 + $0x158] sm:$0xff]
  %v61 = vld [vmem:[%s0 + $0x160] sm:$0xff]
  %v62 = vld [vmem:[%s0 + $0x168] sm:$0xff]
  %v63 = vld [vmem:[%s0 + $0x170] sm:$0xff]
  %v64 = vld [vmem:[%s0 + $0x178] sm:$0xff]
  %v65 = vld [vmem:[%s0 + $0x180] sm:$0xff]
  %v66 = vld [vmem:[%s0 + $0x188] sm:$0xff]
  %v67 = vld [vmem:[%s0 + $0x190] sm:$0xff]
  %v68 = vld [vmem:[%s0 + $0x198] sm:$0xff]
  %v69 = vld [vmem:[%s0 + $0x1a0] sm:$0xff]
  %v70 = vld [vmem:[%s0 + $0x1a8] sm:$0xff]
  %v71 = vld [vmem:[%s0 + $0x1b0] sm:$0xff]
  %v72 = vld [vmem:[%s0 + $0x1b8] sm:$0xff]
  %v73 = vld [vmem:[%s0 + $0x1c0] sm:$0xff]
  %v74 = vld [vmem:[%s0 + $0x1c8] sm:$0xff]
  %v75 = vld [vmem:[%s0 + $0x1d0] sm:$0xff]
  %v76 = vld [vmem:[%s0 + $0x1d8] sm:$0xff]
  %v77 = vld [vmem:[%s0 + $0x1e0] sm:$0xff]
  %v78 = vld [vmem:[%s0 + $0x1e8] sm:$0xff]
  %v79 = vld [vmem:[%s0 + $0x1f0] sm:$0xff]
  %v80 = vld [vmem:[%s0 + $0x1f8] sm:$0xff]
  %v81 = vld [vmem:[%s1] sm:$0x1]
  %vm82 = vcmask 64512
  %v83 = vsel %vm82, %v17, 0.0
  %v84 = vsel %vm82, %v18, 0.0
  %v85 = vadd.f32 %v83, %v84
  %v86 = vsel %vm82, %v19, 0.0
  %v87 = vadd.f32 %v85, %v86
  %v88 = vsel %vm82, %v20, 0.0
  %v89 = vadd.f32 %v87, %v88
  %v90 = vsel %vm82, %v21, 0.0
  %v91 = vadd.f32 %v89, %v90
  %v92 = vsel %vm82, %v22, 0.0
  %v93 = vadd.f32 %v91, %v92
  %v94 = vsel %vm82, %v23, 0.0
  %v95 = vadd.f32 %v93, %v94
  %v96 = vsel %vm82, %v24, 0.0
  %v97 = vadd.f32 %v95, %v96
  %v98 = vsel %vm82, %v25, 0.0
  %v99 = vadd.f32 %v97, %v98
  %v100 = vsel %vm82, %v26, 0.0
  %v101 = vadd.f32 %v99, %v100
  %v102 = vsel %vm82, %v27, 0.0
  %v103 = vadd.f32 %v101, %v102
  %v104 = vsel %vm82, %v28, 0.0
  %v105 = vadd.f32 %v103, %v104
  %v106 = vsel %vm82, %v29, 0.0
  %v107 = vadd.f32 %v105, %v106
  %v108 = vsel %vm82, %v30, 0.0
  %v109 = vadd.f32 %v107, %v108
  %v110 = vsel %vm82, %v31, 0.0
  %v111 = vadd.f32 %v109, %v110
  %v112 = vsel %vm82, %v32, 0.0
  %v113 = vadd.f32 %v111, %v112
  %v114 = vsel %vm82, %v33, 0.0
  %v115 = vadd.f32 %v113, %v114
  %v116 = vsel %vm82, %v34, 0.0
  %v117 = vadd.f32 %v115, %v116
  %v118 = vsel %vm82, %v35, 0.0
  %v119 = vadd.f32 %v117, %v118
  %v120 = vsel %vm82, %v36, 0.0
  %v121 = vadd.f32 %v119, %v120
  %v122 = vsel %vm82, %v37, 0.0
  %v123 = vadd.f32 %v121, %v122
  %v124 = vsel %vm82, %v38, 0.0
  %v125 = vadd.f32 %v123, %v124
  %v126 = vsel %vm82, %v39, 0.0
  %v127 = vadd.f32 %v125, %v126
  %v128 = vsel %vm82, %v40, 0.0
  %v129 = vadd.f32 %v127, %v128
  %v130 = vsel %vm82, %v41, 0.0
  %v131 = vadd.f32 %v129, %v130
  %v132 = vsel %vm82, %v42, 0.0
  %v133 = vadd.f32 %v131, %v132
  %v134 = vsel %vm82, %v43, 0.0
  %v135 = vadd.f32 %v133, %v134
  %v136 = vsel %vm82, %v44, 0.0
  %v137 = vadd.f32 %v135, %v136
  %v138 = vsel %vm82, %v45, 0.0
  %v139 = vadd.f32 %v137, %v138
  %v140 = vsel %vm82, %v46, 0.0
  %v141 = vadd.f32 %v139, %v140
  %v142 = vsel %vm82, %v47, 0.0
  %v143 = vadd.f32 %v141, %v142
  %v144 = vsel %vm82, %v48, 0.0
  %v145 = vadd.f32 %v143, %v144
  %v146 = vsel %vm82, %v49, 0.0
  %v147 = vadd.f32 %v145, %v146
  %v148 = vsel %vm82, %v50, 0.0
  %v149 = vadd.f32 %v147, %v148
  %v150 = vsel %vm82, %v51, 0.0
  %v151 = vadd.f32 %v149, %v150
  %v152 = vsel %vm82, %v52, 0.0
  %v153 = vadd.f32 %v151, %v152
  %v154 = vsel %vm82, %v53, 0.0
  %v155 = vadd.f32 %v153, %v154
  %v156 = vsel %vm82, %v54, 0.0
  %v157 = vadd.f32 %v155, %v156
  %v158 = vsel %vm82, %v55, 0.0
  %v159 = vadd.f32 %v157, %v158
  %v160 = vsel %vm82, %v56, 0.0
  %v161 = vadd.f32 %v159, %v160
  %v162 = vsel %vm82, %v57, 0.0
  %v163 = vadd.f32 %v161, %v162
  %v164 = vsel %vm82, %v58, 0.0
  %v165 = vadd.f32 %v163, %v164
  %v166 = vsel %vm82, %v59, 0.0
  %v167 = vadd.f32 %v165, %v166
  %v168 = vsel %vm82, %v60, 0.0
  %v169 = vadd.f32 %v167, %v168
  %v170 = vsel %vm82, %v61, 0.0
  %v171 = vadd.f32 %v169, %v170
  %v172 = vsel %vm82, %v62, 0.0
  %v173 = vadd.f32 %v171, %v172
  %v174 = vsel %vm82, %v63, 0.0
  %v175 = vadd.f32 %v173, %v174
  %v176 = vsel %vm82, %v64, 0.0
  %v177 = vadd.f32 %v175, %v176
  %v178 = vsel %vm82, %v65, 0.0
  %v179 = vadd.f32 %v177, %v178
  %v180 = vsel %vm82, %v66, 0.0
  %v181 = vadd.f32 %v179, %v180
  %v182 = vsel %vm82, %v67, 0.0
  %v183 = vadd.f32 %v181, %v182
  %v184 = vsel %vm82, %v68, 0.0
  %v185 = vadd.f32 %v183, %v184
  %v186 = vsel %vm82, %v69, 0.0
  %v187 = vadd.f32 %v185, %v186
  %v188 = vsel %vm82, %v70, 0.0
  %v189 = vadd.f32 %v187, %v188
  %v190 = vsel %vm82, %v71, 0.0
  %v191 = vadd.f32 %v189, %v190
  %v192 = vsel %vm82, %v72, 0.0
  %v193 = vadd.f32 %v191, %v192
  %v194 = vsel %vm82, %v73, 0.0
  %v195 = vadd.f32 %v193, %v194
  %v196 = vsel %vm82, %v74, 0.0
  %v197 = vadd.f32 %v195, %v196
  %v198 = vsel %vm82, %v75, 0.0
  %v199 = vadd.f32 %v197, %v198
  %v200 = vsel %vm82, %v76, 0.0
  %v201 = vadd.f32 %v199, %v200
  %v202 = vsel %vm82, %v77, 0.0
  %v203 = vadd.f32 %v201, %v202
  %v204 = vsel %vm82, %v78, 0.0
  %v205 = vadd.f32 %v203, %v204
  %v206 = vsel %vm82, %v79, 0.0
  %v207 = vadd.f32 %v205, %v206
  %v208 = vsel %vm82, %v80, 0.0
  %v209 = vadd.f32 %v207, %v208
  %v210 = vrot.slane %v209, 4
  %v211 = vadd.f32 %v209, %v210
  %v212 = vrot.slane %v211, 2
  %v213 = vadd.f32 %v211, %v212
  %v214 = vrot.slane %v213, 1
  %v215 = vadd.f32 %v213, %v214
  %v216 = vadd.f32 %v81, %v215
  %vm217 = vcmask 57344
  %218 = vst.msk [vmem:[%s1] sm:$0x1] %vm217, %v216
  %v219 = vld [vmem:[%s2] sm:$0x1]
  %v220 = vmul.f32 %v17, %v17
  %v221 = vmul.f32 %v18, %v18
  %v222 = vmul.f32 %v19, %v19
  %v223 = vmul.f32 %v20, %v20
  %v224 = vmul.f32 %v21, %v21
  %v225 = vmul.f32 %v22, %v22
  %v226 = vmul.f32 %v23, %v23
  %v227 = vmul.f32 %v24, %v24
  %v228 = vmul.f32 %v25, %v25
  %v229 = vmul.f32 %v26, %v26
  %v230 = vmul.f32 %v27, %v27
  %v231 = vmul.f32 %v28, %v28
  %v232 = vmul.f32 %v29, %v29
  %v233 = vmul.f32 %v30, %v30
  %v234 = vmul.f32 %v31, %v31
  %v235 = vmul.f32 %v32, %v32
  %v236 = vmul.f32 %v33, %v33
  %v237 = vmul.f32 %v34, %v34
  %v238 = vmul.f32 %v35, %v35
  %v239 = vmul.f32 %v36, %v36
  %v240 = vmul.f32 %v37, %v37
  %v241 = vmul.f32 %v38, %v38
  %v242 = vmul.f32 %v39, %v39
  %v243 = vmul.f32 %v40, %v40
  %v244 = vmul.f32 %v41, %v41
  %v245 = vmul.f32 %v42, %v42
  %v246 = vmul.f32 %v43, %v43
  %v247 = vmul.f32 %v44, %v44
  %v248 = vmul.f32 %v45, %v45
  %v249 = vmul.f32 %v46, %v46
  %v250 = vmul.f32 %v47, %v47
  %v251 = vmul.f32 %v48, %v48
  %v252 = vmul.f32 %v49, %v49
  %v253 = vmul.f32 %v50, %v50
  %v254 = vmul.f32 %v51, %v51
  %v255 = vmul.f32 %v52, %v52
  %v256 = vmul.f32 %v53, %v53
  %v257 = vmul.f32 %v54, %v54
  %v258 = vmul.f32 %v55, %v55
  %v259 = vmul.f32 %v56, %v56
  %v260 = vmul.f32 %v57, %v57
  %v261 = vmul.f32 %v58, %v58
  %v262 = vmul.f32 %v59, %v59
  %v263 = vmul.f32 %v60, %v60
  %v264 = vmul.f32 %v61, %v61
  %v265 = vmul.f32 %v62, %v62
  %v266 = vmul.f32 %v63, %v63
  %v267 = vmul.f32 %v64, %v64
  %v268 = vmul.f32 %v65, %v65
  %v269 = vmul.f32 %v66, %v66
  %v270 = vmul.f32 %v67, %v67
  %v271 = vmul.f32 %v68, %v68
  %v272 = vmul.f32 %v69, %v69
  %v273 = vmul.f32 %v70, %v70
  %v274 = vmul.f32 %v71, %v71
  %v275 = vmul.f32 %v72, %v72
  %v276 = vmul.f32 %v73, %v73
  %v277 = vmul.f32 %v74, %v74
  %v278 = vmul.f32 %v75, %v75
  %v279 = vmul.f32 %v76, %v76
  %v280 = vmul.f32 %v77, %v77
  %v281 = vmul.f32 %v78, %v78
  %v282 = vmul.f32 %v79, %v79
  %v283 = vmul.f32 %v80, %v80
  %v284 = vsel %vm82, %v220, 0.0
  %v285 = vsel %vm82, %v221, 0.0
  %v286 = vadd.f32 %v284, %v285
  %v287 = vsel %vm82, %v222, 0.0
  %v288 = vadd.f32 %v286, %v287
  %v289 = vsel %vm82, %v223, 0.0
  %v290 = vadd.f32 %v288, %v289
  %v291 = vsel %vm82, %v224, 0.0
  %v292 = vadd.f32 %v290, %v291
  %v293 = vsel %vm82, %v225, 0.0
  %v294 = vadd.f32 %v292, %v293
  %v295 = vsel %vm82, %v226, 0.0
  %v296 = vadd.f32 %v294, %v295
  %v297 = vsel %vm82, %v227, 0.0
  %v298 = vadd.f32 %v296, %v297
  %v299 = vsel %vm82, %v228, 0.0
  %v300 = vadd.f32 %v298, %v299
  %v301 = vsel %vm82, %v229, 0.0
  %v302 = vadd.f32 %v300, %v301
  %v303 = vsel %vm82, %v230, 0.0
  %v304 = vadd.f32 %v302, %v303
  %v305 = vsel %vm82, %v231, 0.0
  %v306 = vadd.f32 %v304, %v305
  %v307 = vsel %vm82, %v232, 0.0
  %v308 = vadd.f32 %v306, %v307
  %v309 = vsel %vm82, %v233, 0.0
  %v310 = vadd.f32 %v308, %v309
  %v311 = vsel %vm82, %v234, 0.0
  %v312 = vadd.f32 %v310, %v311
  %v313 = vsel %vm82, %v235, 0.0
  %v314 = vadd.f32 %v312, %v313
  %v315 = vsel %vm82, %v236, 0.0
  %v316 = vadd.f32 %v314, %v315
  %v317 = vsel %vm82, %v237, 0.0
  %v318 = vadd.f32 %v316, %v317
  %v319 = vsel %vm82, %v238, 0.0
  %v320 = vadd.f32 %v318, %v319
  %v321 = vsel %vm82, %v239, 0.0
  %v322 = vadd.f32 %v320, %v321
  %v323 = vsel %vm82, %v240, 0.0
  %v324 = vadd.f32 %v322, %v323
  %v325 = vsel %vm82, %v241, 0.0
  %v326 = vadd.f32 %v324, %v325
  %v327 = vsel %vm82, %v242, 0.0
  %v328 = vadd.f32 %v326, %v327
  %v329 = vsel %vm82, %v243, 0.0
  %v330 = vadd.f32 %v328, %v329
  %v331 = vsel %vm82, %v244, 0.0
  %v332 = vadd.f32 %v330, %v331
  %v333 = vsel %vm82, %v245, 0.0
  %v334 = vadd.f32 %v332, %v333
  %v335 = vsel %vm82, %v246, 0.0
  %v336 = vadd.f32 %v334, %v335
  %v337 = vsel %vm82, %v247, 0.0
  %v338 = vadd.f32 %v336, %v337
  %v339 = vsel %vm82, %v248, 0.0
  %v340 = vadd.f32 %v338, %v339
  %v341 = vsel %vm82, %v249, 0.0
  %v342 = vadd.f32 %v340, %v341
  %v343 = vsel %vm82, %v250, 0.0
  %v344 = vadd.f32 %v342, %v343
  %v345 = vsel %vm82, %v251, 0.0
  %v346 = vadd.f32 %v344, %v345
  %v347 = vsel %vm82, %v252, 0.0
  %v348 = vadd.f32 %v346, %v347
  %v349 = vsel %vm82, %v253, 0.0
  %v350 = vadd.f32 %v348, %v349
  %v351 = vsel %vm82, %v254, 0.0
  %v352 = vadd.f32 %v350, %v351
  %v353 = vsel %vm82, %v255, 0.0
  %v354 = vadd.f32 %v352, %v353
  %v355 = vsel %vm82, %v256, 0.0
  %v356 = vadd.f32 %v354, %v355
  %v357 = vsel %vm82, %v257, 0.0
  %v358 = vadd.f32 %v356, %v357
  %v359 = vsel %vm82, %v258, 0.0
  %v360 = vadd.f32 %v358, %v359
  %v361 = vsel %vm82, %v259, 0.0
  %v362 = vadd.f32 %v360, %v361
  %v363 = vsel %vm82, %v260, 0.0
  %v364 = vadd.f32 %v362, %v363
  %v365 = vsel %vm82, %v261, 0.0
  %v366 = vadd.f32 %v364, %v365
  %v367 = vsel %vm82, %v262, 0.0
  %v368 = vadd.f32 %v366, %v367
  %v369 = vsel %vm82, %v263, 0.0
  %v370 = vadd.f32 %v368, %v369
  %v371 = vsel %vm82, %v264, 0.0
  %v372 = vadd.f32 %v370, %v371
  %v373 = vsel %vm82, %v265, 0.0
  %v374 = vadd.f32 %v372, %v373
  %v375 = vsel %vm82, %v266, 0.0
  %v376 = vadd.f32 %v374, %v375
  %v377 = vsel %vm82, %v267, 0.0
  %v378 = vadd.f32 %v376, %v377
  %v379 = vsel %vm82, %v268, 0.0
  %v380 = vadd.f32 %v378, %v379
  %v381 = vsel %vm82, %v269, 0.0
  %v382 = vadd.f32 %v380, %v381
  %v383 = vsel %vm82, %v270, 0.0
  %v384 = vadd.f32 %v382, %v383
  %v385 = vsel %vm82, %v271, 0.0
  %v386 = vadd.f32 %v384, %v385
  %v387 = vsel %vm82, %v272, 0.0
  %v388 = vadd.f32 %v386, %v387
  %v389 = vsel %vm82, %v273, 0.0
  %v390 = vadd.f32 %v388, %v389
  %v391 = vsel %vm82, %v274, 0.0
  %v392 = vadd.f32 %v390, %v391
  %v393 = vsel %vm82, %v275, 0.0
  %v394 = vadd.f32 %v392, %v393
  %v395 = vsel %vm82, %v276, 0.0
  %v396 = vadd.f32 %v394, %v395
  %v397 = vsel %vm82, %v277, 0.0
  %v398 = vadd.f32 %v396, %v397
  %v399 = vsel %vm82, %v278, 0.0
  %v400 = vadd.f32 %v398, %v399
  %v401 = vsel %vm82, %v279, 0.0
  %v402 = vadd.f32 %v400, %v401
  %v403 = vsel %vm82, %v280, 0.0
  %v404 = vadd.f32 %v402, %v403
  %v405 = vsel %vm82, %v281, 0.0
  %v406 = vadd.f32 %v404, %v405
  %v407 = vsel %vm82, %v282, 0.0
  %v408 = vadd.f32 %v406, %v407
  %v409 = vsel %vm82, %v283, 0.0
  %v410 = vadd.f32 %v408, %v409
  %v411 = vrot.slane %v410, 4
  %v412 = vadd.f32 %v410, %v411
  %v413 = vrot.slane %v412, 2
  %v414 = vadd.f32 %v412, %v413
  %v415 = vrot.slane %v414, 1
  %v416 = vadd.f32 %v414, %v415
  %v417 = vadd.f32 %v219, %v416
  %418 = vst.msk [vmem:[%s2] sm:$0x1] %vm217, %v417
  // Predicated region
  $region10: #{deform_layer_forward.9} parent=0 // pred_check
    _
  $region11: #{deform_layer_forward.9} parent=0 // pred_check_branch
    %420 = sbr.rel (0) target = $region13
  $region12: #{deform_layer_forward.9} parent=0 // pred_region
    _
  $region13: #{deform_layer_forward.9} parent=0 // pred_fallthru
    _
  // Predicated region
  $region14: #{deform_layer_forward.9} parent=0 // pred_check
    _
  $region15: #{deform_layer_forward.9} parent=0 // pred_check_branch
    %422 = sbr.rel (0) target = $region17
  $region16: #{deform_layer_forward.9} parent=0 // pred_region
    _
  $region17: #{deform_layer_forward.9} parent=0 // pred_fallthru
    _
  // Predicated region
  $region18: #{deform_layer_forward.9} parent=0 // pred_check
    _
  $region19: #{deform_layer_forward.9} parent=0 // pred_check_branch
    %424 = sbr.rel (0) target = $region21
  $region20: #{deform_layer_forward.9} parent=0 // pred_region
    _
  $region21: #{deform_layer_forward.9} parent=0 // pred_fallthru
    _
  // Predicated region
  $region22: #{deform_layer_forward.9} parent=0 // pred_check
    _
  $region23: #{deform_layer_forward.9} parent=0 // pred_check_branch
    %426 = sbr.rel (0) target = $region25
  $region24: #{deform_layer_forward.9} parent=0 // pred_region
    _
  $region25: #{deform_layer_forward.9} parent=0 // pred_fallthru
    _

// kernel: deform_layer_forward.8
$region0: #{deform_layer_forward.8}
  #allocation0 [shape = 'u32[]', space=smem, size = 0x4, offset = 0x4, fixed_abs, tag = 'smem constant byte address 0x4 - core index']
  #allocation1 [shape = 'u32[144,128]{1,0:T(1,128)}', space=vmem, size = 0x12000, scoped, tag = 'internal scratch']
  %s0 = inlined_call_operand.vmem [shape: bf16[512,72], index: 0, kind: input, shape index: {}]
  %s1 = inlined_call_operand.vmem [shape: bf16[72,8], index: 1, kind: input, shape index: {}]
  %s2 = inlined_call_operand.vmem [shape: f32[1,8], index: 2, kind: input, shape index: {}]
  %s3 = inlined_call_operand.vmem [shape: f32[512,8], index: 3, kind: output, shape index: {}]
  %s4 = sld [smem:[#allocation0]]
  $region22: #{deform_layer_forward.8} parent=0
    _
  %s6 = ssub.s32 1, %s4
  %s7 = scalar_select 0, %s6, %s4
  // Predicated region
  $region2: #{deform_layer_forward.8} parent=0 // pred_check
    _
  $region3: #{deform_layer_forward.8} parent=0 // pred_check_branch
    %9 = sbr.rel (0) target = $region5
  $region4: #{deform_layer_forward.8} parent=0 // pred_region
    _
  $region5: #{deform_layer_forward.8} parent=0 // pred_fallthru
    _
  // Predicated region
  $region6: #{deform_layer_forward.8} parent=0 // pred_check
    _
  $region7: #{deform_layer_forward.8} parent=0 // pred_check_branch
    %11 = sbr.rel (0) target = $region9
  $region8: #{deform_layer_forward.8} parent=0 // pred_region
    _
  $region9: #{deform_layer_forward.8} parent=0 // pred_fallthru
    _
  // Predicated region
  $region10: #{deform_layer_forward.8} parent=0 // pred_check
    _
  $region11: #{deform_layer_forward.8} parent=0 // pred_check_branch
    %13 = sbr.rel (0) target = $region13
  $region12: #{deform_layer_forward.8} parent=0 // pred_region
    _
  $region13: #{deform_layer_forward.8} parent=0 // pred_fallthru
    _
  %v15 = vld [vmem:[%s0] sm:$0xf]
  %v16 = vld [vmem:[%s0 + $0x4] sm:$0xf]
  %v17 = vld [vmem:[%s0 + $0x8] sm:$0xf]
  %v18 = vld [vmem:[%s0 + $0xc] sm:$0xf]
  %v19 = vld [vmem:[%s0 + $0x10] sm:$0xf]
  %v20 = vld [vmem:[%s0 + $0x14] sm:$0xf]
  %v21 = vld [vmem:[%s0 + $0x18] sm:$0xf]
  %v22 = vld [vmem:[%s0 + $0x1c] sm:$0xf]
  %v23 = vld [vmem:[%s0 + $0x20] sm:$0xf]
  %v24 = vld [vmem:[%s0 + $0x24] sm:$0xf]
  %v25 = vld [vmem:[%s0 + $0x28] sm:$0xf]
  %v26 = vld [vmem:[%s0 + $0x2c] sm:$0xf]
  %v27 = vld [vmem:[%s0 + $0x30] sm:$0xf]
  %v28 = vld [vmem:[%s0 + $0x34] sm:$0xf]
  %v29 = vld [vmem:[%s0 + $0x38] sm:$0xf]
  %v30 = vld [vmem:[%s0 + $0x3c] sm:$0xf]
  %v31 = vld [vmem:[%s0 + $0x40] sm:$0xf]
  %v32 = vld [vmem:[%s0 + $0x44] sm:$0xf]
  %v33 = vld [vmem:[%s0 + $0x48] sm:$0xf]
  %v34 = vld [vmem:[%s0 + $0x4c] sm:$0xf]
  %v35 = vld [vmem:[%s0 + $0x50] sm:$0xf]
  %v36 = vld [vmem:[%s0 + $0x54] sm:$0xf]
  %v37 = vld [vmem:[%s0 + $0x58] sm:$0xf]
  %v38 = vld [vmem:[%s0 + $0x5c] sm:$0xf]
  %v39 = vld [vmem:[%s0 + $0x60] sm:$0xf]
  %v40 = vld [vmem:[%s0 + $0x64] sm:$0xf]
  %v41 = vld [vmem:[%s0 + $0x68] sm:$0xf]
  %v42 = vld [vmem:[%s0 + $0x6c] sm:$0xf]
  %v43 = vld [vmem:[%s0 + $0x70] sm:$0xf]
  %v44 = vld [vmem:[%s0 + $0x74] sm:$0xf]
  %v45 = vld [vmem:[%s0 + $0x78] sm:$0xf]
  %v46 = vld [vmem:[%s0 + $0x7c] sm:$0xf]
  %v47 = vld [vmem:[%s0 + $0x80] sm:$0xf]
  %v48 = vld [vmem:[%s0 + $0x84] sm:$0xf]
  %v49 = vld [vmem:[%s0 + $0x88] sm:$0xf]
  %v50 = vld [vmem:[%s0 + $0x8c] sm:$0xf]
  %v51 = vld [vmem:[%s0 + $0x90] sm:$0xf]
  %v52 = vld [vmem:[%s0 + $0x94] sm:$0xf]
  %v53 = vld [vmem:[%s0 + $0x98] sm:$0xf]
  %v54 = vld [vmem:[%s0 + $0x9c] sm:$0xf]
  %v55 = vld [vmem:[%s0 + $0xa0] sm:$0xf]
  %v56 = vld [vmem:[%s0 + $0xa4] sm:$0xf]
  %v57 = vld [vmem:[%s0 + $0xa8] sm:$0xf]
  %v58 = vld [vmem:[%s0 + $0xac] sm:$0xf]
  %v59 = vld [vmem:[%s0 + $0xb0] sm:$0xf]
  %v60 = vld [vmem:[%s0 + $0xb4] sm:$0xf]
  %v61 = vld [vmem:[%s0 + $0xb8] sm:$0xf]
  %v62 = vld [vmem:[%s0 + $0xbc] sm:$0xf]
  %v63 = vld [vmem:[%s0 + $0xc0] sm:$0xf]
  %v64 = vld [vmem:[%s0 + $0xc4] sm:$0xf]
  %v65 = vld [vmem:[%s0 + $0xc8] sm:$0xf]
  %v66 = vld [vmem:[%s0 + $0xcc] sm:$0xf]
  %v67 = vld [vmem:[%s0 + $0xd0] sm:$0xf]
  %v68 = vld [vmem:[%s0 + $0xd4] sm:$0xf]
  %v69 = vld [vmem:[%s0 + $0xd8] sm:$0xf]
  %v70 = vld [vmem:[%s0 + $0xdc] sm:$0xf]
  %v71 = vld [vmem:[%s0 + $0xe0] sm:$0xf]
  %v72 = vld [vmem:[%s0 + $0xe4] sm:$0xf]
  %v73 = vld [vmem:[%s0 + $0xe8] sm:$0xf]
  %v74 = vld [vmem:[%s0 + $0xec] sm:$0xf]
  %v75 = vld [vmem:[%s0 + $0xf0] sm:$0xf]
  %v76 = vld [vmem:[%s0 + $0xf4] sm:$0xf]
  %v77 = vld [vmem:[%s0 + $0xf8] sm:$0xf]
  %v78 = vld [vmem:[%s0 + $0xfc] sm:$0xf]
  %v79 = vld [vmem:[%s1] sm:$0xf]
  %v80 = vld [vmem:[%s1 + $0x4] sm:$0xf]
  %v81 = vld [vmem:[%s1 + $0x8] sm:$0xf]
  %v82 = vld [vmem:[%s1 + $0xc] sm:$0xf]
  %v83 = vld [vmem:[%s1 + $0x10] sm:$0xf]
  %v84 = vld [vmem:[%s1 + $0x14] sm:$0xf]
  %v85 = vld [vmem:[%s1 + $0x18] sm:$0xf]
  %v86 = vld [vmem:[%s1 + $0x1c] sm:$0xf]
  %v87 = vld [vmem:[%s1 + $0x20] sm:$0xf]
  %v88 = vld [vmem:[%s2] sm:$0x1]
  %v90 = vlaneseq
  %v91 = vshrl.u32 %v90, 7
  %v92 = vsub.s32 0, %v91
  %v93 = vrot.slane %v88, %v92
  %v159 = vunpack.c.l.b16 %v15
  %v160 = vunpack.c.l.b16 %v16
  %v161 = vunpack.c.l.b16 %v17
  %v162 = vunpack.c.l.b16 %v18
  %v163 = vunpack.c.l.b16 %v19
  %v164 = vunpack.c.l.b16 %v20
  %v165 = vunpack.c.l.b16 %v21
  %v166 = vunpack.c.l.b16 %v22
  %v167 = vunpack.c.l.b16 %v23
  %v168 = vunpack.c.l.b16 %v24
  %v169 = vunpack.c.l.b16 %v25
  %v170 = vunpack.c.l.b16 %v26
  %v171 = vunpack.c.l.b16 %v27
  %v172 = vunpack.c.l.b16 %v28
  %v173 = vunpack.c.l.b16 %v29
  %v174 = vunpack.c.l.b16 %v30
  %v175 = vunpack.c.l.b16 %v31
  %v176 = vunpack.c.l.b16 %v32
  %v177 = vunpack.c.l.b16 %v33
  %v178 = vunpack.c.l.b16 %v34
  %v179 = vunpack.c.l.b16 %v35
  %v180 = vunpack.c.l.b16 %v36
  %v181 = vunpack.c.l.b16 %v37
  %v182 = vunpack.c.l.b16 %v38
  %v183 = vunpack.c.l.b16 %v39
  %v184 = vunpack.c.l.b16 %v40
  %v185 = vunpack.c.l.b16 %v41
  %v186 = vunpack.c.l.b16 %v42
  %v187 = vunpack.c.l.b16 %v43
  %v188 = vunpack.c.l.b16 %v44
  %v189 = vunpack.c.l.b16 %v45
  %v190 = vunpack.c.l.b16 %v46
  %v191 = vunpack.c.l.b16 %v47
  %v192 = vunpack.c.l.b16 %v48
  %v193 = vunpack.c.l.b16 %v49
  %v194 = vunpack.c.l.b16 %v50
  %v195 = vunpack.c.l.b16 %v51
  %v196 = vunpack.c.l.b16 %v52
  %v197 = vunpack.c.l.b16 %v53
  %v198 = vunpack.c.l.b16 %v54
  %v199 = vunpack.c.l.b16 %v55
  %v200 = vunpack.c.l.b16 %v56
  %v201 = vunpack.c.l.b16 %v57
  %v202 = vunpack.c.l.b16 %v58
  %v203 = vunpack.c.l.b16 %v59
  %v204 = vunpack.c.l.b16 %v60
  %v205 = vunpack.c.l.b16 %v61
  %v206 = vunpack.c.l.b16 %v62
  %v207 = vunpack.c.l.b16 %v63
  %v208 = vunpack.c.l.b16 %v64
  %v209 = vunpack.c.l.b16 %v65
  %v210 = vunpack.c.l.b16 %v66
  %v211 = vunpack.c.l.b16 %v67
  %v212 = vunpack.c.l.b16 %v68
  %v213 = vunpack.c.l.b16 %v69
  %v214 = vunpack.c.l.b16 %v70
  %v215 = vunpack.c.l.b16 %v71
  %v216 = vunpack.c.l.b16 %v72
  %v217 = vunpack.c.l.b16 %v73
  %v218 = vunpack.c.l.b16 %v74
  %v219 = vunpack.c.l.b16 %v75
  %v220 = vunpack.c.l.b16 %v76
  %v221 = vunpack.c.l.b16 %v77
  %v222 = vunpack.c.l.b16 %v78
  %v223 = vpack.c.b16 %v160, %v159
  %v224 = vpack.c.b16 %v162, %v161
  %v225 = vpack.c.b16 %v164, %v163
  %v226 = vpack.c.b16 %v166, %v165
  %v227 = vpack.c.b16 %v168, %v167
  %v228 = vpack.c.b16 %v170, %v169
  %v229 = vpack.c.b16 %v172, %v171
  %v230 = vpack.c.b16 %v174, %v173
  %v231 = vpack.c.b16 %v176, %v175
  %v232 = vpack.c.b16 %v178, %v177
  %v233 = vpack.c.b16 %v180, %v179
  %v234 = vpack.c.b16 %v182, %v181
  %v235 = vpack.c.b16 %v184, %v183
  %v236 = vpack.c.b16 %v186, %v185
  %v237 = vpack.c.b16 %v188, %v187
  %v238 = vpack.c.b16 %v190, %v189
  %v239 = vpack.c.b16 %v192, %v191
  %v240 = vpack.c.b16 %v194, %v193
  %v241 = vpack.c.b16 %v196, %v195
  %v242 = vpack.c.b16 %v198, %v197
  %v243 = vpack.c.b16 %v200, %v199
  %v244 = vpack.c.b16 %v202, %v201
  %v245 = vpack.c.b16 %v204, %v203
  %v246 = vpack.c.b16 %v206, %v205
  %v247 = vpack.c.b16 %v208, %v207
  %v248 = vpack.c.b16 %v210, %v209
  %v249 = vpack.c.b16 %v212, %v211
  %v250 = vpack.c.b16 %v214, %v213
  %v251 = vpack.c.b16 %v216, %v215
  %v252 = vpack.c.b16 %v218, %v217
  %v253 = vpack.c.b16 %v220, %v219
  %v254 = vpack.c.b16 %v222, %v221
  %v264 = vunpack.c.l.b16 %v79
  %v265 = vunpack.c.l.b16 %v80
  %v266 = vunpack.c.l.b16 %v81
  %v267 = vunpack.c.l.b16 %v82
  %v268 = vunpack.c.l.b16 %v83
  %v269 = vunpack.c.l.b16 %v84
  %v270 = vunpack.c.l.b16 %v85
  %v271 = vunpack.c.l.b16 %v86
  %v272 = vunpack.c.l.b16 %v87
  %v273 = vpack.c.b16 %v265, %v264
  %v274 = vpack.c.b16 %v267, %v266
  %v275 = vpack.c.b16 %v269, %v268
  %v276 = vpack.c.b16 %v271, %v270
  %v277 = vpack.c.b16 %v272, %v272
  %vm282 = vcmask 588800
  %v284 = vsel %vm282, %v223, 0
  %v287 = vsel %vm282, %v224, 0
  %v290 = vsel %vm282, %v225, 0
  %v293 = vsel %vm282, %v226, 0
  %v296 = vsel %vm282, %v227, 0
  %v299 = vsel %vm282, %v228, 0
  %v302 = vsel %vm282, %v229, 0
  %v305 = vsel %vm282, %v230, 0
  %v308 = vsel %vm282, %v231, 0
  %v311 = vsel %vm282, %v232, 0
  %v314 = vsel %vm282, %v233, 0
  %v317 = vsel %vm282, %v234, 0
  %v320 = vsel %vm282, %v235, 0
  %v323 = vsel %vm282, %v236, 0
  %v326 = vsel %vm282, %v237, 0
  %v329 = vsel %vm282, %v238, 0
  %v332 = vsel %vm282, %v239, 0
  %v335 = vsel %vm282, %v240, 0
  %v338 = vsel %vm282, %v241, 0
  %v341 = vsel %vm282, %v242, 0
  %v344 = vsel %vm282, %v243, 0
  %v347 = vsel %vm282, %v244, 0
  %v350 = vsel %vm282, %v245, 0
  %v353 = vsel %vm282, %v246, 0
  %v356 = vsel %vm282, %v247, 0
  %v359 = vsel %vm282, %v248, 0
  %v362 = vsel %vm282, %v249, 0
  %v365 = vsel %vm282, %v250, 0
  %v368 = vsel %vm282, %v251, 0
  %v371 = vsel %vm282, %v252, 0
  %v374 = vsel %vm282, %v253, 0
  %v377 = vsel %vm282, %v254, 0
  %vm379 = vcmask 1043456
  %v381 = vsel %vm379, %v277, 0
  %383 = vmatprep.subr.bf16.mxu0 0
  %384 = vmatpush1.bf16.msra.mxu0 0
  %385 = vmatprep.subr.bf16.mxu0 0
  %386 = vmatpush1.bf16.msra.mxu0 0
  %387 = vmatprep.subr.bf16.mxu0 0
  %388 = vmatpush1.bf16.msra.mxu0 0
  %389 = vmatprep.subr.bf16.mxu0 0
  %390 = vmatpush1.bf16.msra.mxu0 %v381
  %391 = vmatprep.subr.bf16.mxu0 0
  %392 = vmatpush1.bf16.msra.mxu0 %v276
  %393 = vmatprep.subr.bf16.mxu0 0
  %394 = vmatpush1.bf16.msra.mxu0 %v275
  %395 = vmatprep.subr.bf16.mxu0 0
  %396 = vmatpush1.bf16.msra.mxu0 %v274
  %397 = vmatprep.subr.bf16.mxu0 0
  %398 = vmatpush1.bf16.msra.mxu0 %v273
  %399 = vmatprep.subr.bf16.mxu0 0
  %400 = vmatpush2.bf16.msra.mxu0 0
  %401 = vmatprep.subr.bf16.mxu0 0
  %402 = vmatpush2.bf16.msra.mxu0 0
  %403 = vmatprep.subr.bf16.mxu0 0
  %404 = vmatpush2.bf16.msra.mxu0 0
  %405 = vmatprep.subr.bf16.mxu0 0
  %406 = vmatpush2.bf16.msra.mxu0 0
  %407 = vmatprep.subr.bf16.mxu0 0
  %408 = vmatpush2.bf16.msra.mxu0 0
  %409 = vmatprep.subr.bf16.mxu0 0
  %410 = vmatpush2.bf16.msra.mxu0 0
  %411 = vmatprep.subr.bf16.mxu0 0
  %412 = vmatpush2.bf16.msra.mxu0 0
  %413 = vmatprep.subr.bf16.mxu0 0
  %414 = vmatpush2.bf16.msra.mxu0 0
  %415 = vmatprep.mubr.bf16.mxu0 0
  %416 = vmatmul.mubr.bf16.gmra.mxu0 %v284
  %v417 = vpop.f32.mrf.mxu0
  %v418 = vadd.f32 %v93, %v417
  %v419 = vpop.f32.mrf.mxu0
  %v420 = vpop.f32.mrf.mxu0
  %v421 = vadd.f32 %v93, %v420
  %v422 = vpop.f32.mrf.mxu0
  %423 = vmatprep.mubr.bf16.mxu0 0
  %424 = vmatmul.mubr.bf16.gmra.mxu0 %v287
  %v425 = vpop.f32.mrf.mxu0
  %v426 = vadd.f32 %v93, %v425
  %v427 = vpop.f32.mrf.mxu0
  %v428 = vpop.f32.mrf.mxu0
  %v429 = vadd.f32 %v93, %v428
  %v430 = vpop.f32.mrf.mxu0
  %431 = vmatprep.mubr.bf16.mxu0 0
  %432 = vmatmul.mubr.bf16.gmra.mxu0 %v290
  %v433 = vpop.f32.mrf.mxu0
  %v434 = vadd.f32 %v93, %v433
  %v435 = vpop.f32.mrf.mxu0
  %v436 = vpop.f32.mrf.mxu0
  %v437 = vadd.f32 %v93, %v436
  %v438 = vpop.f32.mrf.mxu0
  %439 = vmatprep.mubr.bf16.mxu0 0
  %440 = vmatmul.mubr.bf16.gmra.mxu0 %v293
  %v441 = vpop.f32.mrf.mxu0
  %v442 = vadd.f32 %v93, %v441
  %v443 = vpop.f32.mrf.mxu0
  %v444 = vpop.f32.mrf.mxu0
  %v445 = vadd.f32 %v93, %v444
  %v446 = vpop.f32.mrf.mxu0
  %447 = vmatprep.mubr.bf16.mxu0 0
  %448 = vmatmul.mubr.bf16.gmra.mxu0 %v296
  %v449 = vpop.f32.mrf.mxu0
  %v450 = vadd.f32 %v93, %v449
  %v451 = vpop.f32.mrf.mxu0
  %v452 = vpop.f32.mrf.mxu0
  %v453 = vadd.f32 %v93, %v452
  %v454 = vpop.f32.mrf.mxu0
  %455 = vmatprep.mubr.bf16.mxu0 0
  %456 = vmatmul.mubr.bf16.gmra.mxu0 %v299
  %v457 = vpop.f32.mrf.mxu0
  %v458 = vadd.f32 %v93, %v457
  %v459 = vpop.f32.mrf.mxu0
  %v460 = vpop.f32.mrf.mxu0
  %v461 = vadd.f32 %v93, %v460
  %v462 = vpop.f32.mrf.mxu0
  %463 = vmatprep.mubr.bf16.mxu0 0
  %464 = vmatmul.mubr.bf16.gmra.mxu0 %v302
  %v465 = vpop.f32.mrf.mxu0
  %v466 = vadd.f32 %v93, %v465
  %v467 = vpop.f32.mrf.mxu0
  %v468 = vpop.f32.mrf.mxu0
  %v469 = vadd.f32 %v93, %v468
  %v470 = vpop.f32.mrf.mxu0
  %471 = vmatprep.mubr.bf16.mxu0 0
  %472 = vmatmul.mubr.bf16.gmra.mxu0 %v305
  %v473 = vpop.f32.mrf.mxu0
  %v474 = vadd.f32 %v93, %v473
  %v475 = vpop.f32.mrf.mxu0
  %v476 = vpop.f32.mrf.mxu0
  %v477 = vadd.f32 %v93, %v476
  %v478 = vpop.f32.mrf.mxu0
  %479 = vmatprep.mubr.bf16.mxu0 0
  %480 = vmatmul.mubr.bf16.gmra.mxu0 %v308
  %v481 = vpop.f32.mrf.mxu0
  %v482 = vadd.f32 %v93, %v481
  %v483 = vpop.f32.mrf.mxu0
  %v484 = vpop.f32.mrf.mxu0
  %v485 = vadd.f32 %v93, %v484
  %v486 = vpop.f32.mrf.mxu0
  %487 = vmatprep.mubr.bf16.mxu0 0
  %488 = vmatmul.mubr.bf16.gmra.mxu0 %v311
  %v489 = vpop.f32.mrf.mxu0
  %v490 = vadd.f32 %v93, %v489
  %v491 = vpop.f32.mrf.mxu0
  %v492 = vpop.f32.mrf.mxu0
  %v493 = vadd.f32 %v93, %v492
  %v494 = vpop.f32.mrf.mxu0
  %495 = vmatprep.mubr.bf16.mxu0 0
  %496 = vmatmul.mubr.bf16.gmra.mxu0 %v314
  %v497 = vpop.f32.mrf.mxu0
  %v498 = vadd.f32 %v93, %v497
  %v499 = vpop.f32.mrf.mxu0
  %v500 = vpop.f32.mrf.mxu0
  %v501 = vadd.f32 %v93, %v500
  %v502 = vpop.f32.mrf.mxu0
  %503 = vmatprep.mubr.bf16.mxu0 0
  %504 = vmatmul.mubr.bf16.gmra.mxu0 %v317
  %v505 = vpop.f32.mrf.mxu0
  %v506 = vadd.f32 %v93, %v505
  %v507 = vpop.f32.mrf.mxu0
  %v508 = vpop.f32.mrf.mxu0
  %v509 = vadd.f32 %v93, %v508
  %v510 = vpop.f32.mrf.mxu0
  %511 = vmatprep.mubr.bf16.mxu0 0
  %512 = vmatmul.mubr.bf16.gmra.mxu0 %v320
  %v513 = vpop.f32.mrf.mxu0
  %v514 = vadd.f32 %v93, %v513
  %v515 = vpop.f32.mrf.mxu0
  %v516 = vpop.f32.mrf.mxu0
  %v517 = vadd.f32 %v93, %v516
  %v518 = vpop.f32.mrf.mxu0
  %519 = vmatprep.mubr.bf16.mxu0 0
  %520 = vmatmul.mubr.bf16.gmra.mxu0 %v323
  %v521 = vpop.f32.mrf.mxu0
  %v522 = vadd.f32 %v93, %v521
  %v523 = vpop.f32.mrf.mxu0
  %v524 = vpop.f32.mrf.mxu0
  %v525 = vadd.f32 %v93, %v524
  %v526 = vpop.f32.mrf.mxu0
  %527 = vmatprep.mubr.bf16.mxu0 0
  %528 = vmatmul.mubr.bf16.gmra.mxu0 %v326
  %v529 = vpop.f32.mrf.mxu0
  %v530 = vadd.f32 %v93, %v529
  %v531 = vpop.f32.mrf.mxu0
  %v532 = vpop.f32.mrf.mxu0
  %v533 = vadd.f32 %v93, %v532
  %v534 = vpop.f32.mrf.mxu0
  %535 = vmatprep.mubr.bf16.mxu0 0
  %536 = vmatmul.mubr.bf16.gmra.mxu0 %v329
  %v537 = vpop.f32.mrf.mxu0
  %v538 = vadd.f32 %v93, %v537
  %v539 = vpop.f32.mrf.mxu0
  %v540 = vpop.f32.mrf.mxu0
  %v541 = vadd.f32 %v93, %v540
  %v542 = vpop.f32.mrf.mxu0
  %543 = vmatprep.mubr.bf16.mxu0 0
  %544 = vmatmul.mubr.bf16.gmra.mxu0 %v332
  %v545 = vpop.f32.mrf.mxu0
  %v546 = vadd.f32 %v93, %v545
  %v547 = vpop.f32.mrf.mxu0
  %v548 = vpop.f32.mrf.mxu0
  %v549 = vadd.f32 %v93, %v548
  %v550 = vpop.f32.mrf.mxu0
  %551 = vmatprep.mubr.bf16.mxu0 0
  %552 = vmatmul.mubr.bf16.gmra.mxu0 %v335
  %v553 = vpop.f32.mrf.mxu0
  %v554 = vadd.f32 %v93, %v553
  %v555 = vpop.f32.mrf.mxu0
  %v556 = vpop.f32.mrf.mxu0
  %v557 = vadd.f32 %v93, %v556
  %v558 = vpop.f32.mrf.mxu0
  %559 = vmatprep.mubr.bf16.mxu0 0
  %560 = vmatmul.mubr.bf16.gmra.mxu0 %v338
  %v561 = vpop.f32.mrf.mxu0
  %v562 = vadd.f32 %v93, %v561
  %v563 = vpop.f32.mrf.mxu0
  %v564 = vpop.f32.mrf.mxu0
  %v565 = vadd.f32 %v93, %v564
  %v566 = vpop.f32.mrf.mxu0
  %567 = vmatprep.mubr.bf16.mxu0 0
  %568 = vmatmul.mubr.bf16.gmra.mxu0 %v341
  %v569 = vpop.f32.mrf.mxu0
  %v570 = vadd.f32 %v93, %v569
  %v571 = vpop.f32.mrf.mxu0
  %v572 = vpop.f32.mrf.mxu0
  %v573 = vadd.f32 %v93, %v572
  %v574 = vpop.f32.mrf.mxu0
  %575 = vmatprep.mubr.bf16.mxu0 0
  %576 = vmatmul.mubr.bf16.gmra.mxu0 %v344
  %v577 = vpop.f32.mrf.mxu0
  %v578 = vadd.f32 %v93, %v577
  %v579 = vpop.f32.mrf.mxu0
  %v580 = vpop.f32.mrf.mxu0
  %v581 = vadd.f32 %v93, %v580
  %v582 = vpop.f32.mrf.mxu0
  %583 = vmatprep.mubr.bf16.mxu0 0
  %584 = vmatmul.mubr.bf16.gmra.mxu0 %v347
  %v585 = vpop.f32.mrf.mxu0
  %v586 = vadd.f32 %v93, %v585
  %v587 = vpop.f32.mrf.mxu0
  %v588 = vpop.f32.mrf.mxu0
  %v589 = vadd.f32 %v93, %v588
  %v590 = vpop.f32.mrf.mxu0
  %591 = vmatprep.mubr.bf16.mxu0 0
  %592 = vmatmul.mubr.bf16.gmra.mxu0 %v350
  %v593 = vpop.f32.mrf.mxu0
  %v594 = vadd.f32 %v93, %v593
  %v595 = vpop.f32.mrf.mxu0
  %v596 = vpop.f32.mrf.mxu0
  %v597 = vadd.f32 %v93, %v596
  %v598 = vpop.f32.mrf.mxu0
  %599 = vmatprep.mubr.bf16.mxu0 0
  %600 = vmatmul.mubr.bf16.gmra.mxu0 %v353
  %v601 = vpop.f32.mrf.mxu0
  %v602 = vadd.f32 %v93, %v601
  %v603 = vpop.f32.mrf.mxu0
  %v604 = vpop.f32.mrf.mxu0
  %v605 = vadd.f32 %v93, %v604
  %v606 = vpop.f32.mrf.mxu0
  %607 = vmatprep.mubr.bf16.mxu0 0
  %608 = vmatmul.mubr.bf16.gmra.mxu0 %v356
  %v609 = vpop.f32.mrf.mxu0
  %v610 = vadd.f32 %v93, %v609
  %v611 = vpop.f32.mrf.mxu0
  %v612 = vpop.f32.mrf.mxu0
  %v613 = vadd.f32 %v93, %v612
  %v614 = vpop.f32.mrf.mxu0
  %615 = vmatprep.mubr.bf16.mxu0 0
  %616 = vmatmul.mubr.bf16.gmra.mxu0 %v359
  %v617 = vpop.f32.mrf.mxu0
  %v618 = vadd.f32 %v93, %v617
  %v619 = vpop.f32.mrf.mxu0
  %v620 = vpop.f32.mrf.mxu0
  %v621 = vadd.f32 %v93, %v620
  %v622 = vpop.f32.mrf.mxu0
  %623 = vmatprep.mubr.bf16.mxu0 0
  %624 = vmatmul.mubr.bf16.gmra.mxu0 %v362
  %v625 = vpop.f32.mrf.mxu0
  %v626 = vadd.f32 %v93, %v625
  %v627 = vpop.f32.mrf.mxu0
  %v628 = vpop.f32.mrf.mxu0
  %v629 = vadd.f32 %v93, %v628
  %v630 = vpop.f32.mrf.mxu0
  %631 = vmatprep.mubr.bf16.mxu0 0
  %632 = vmatmul.mubr.bf16.gmra.mxu0 %v365
  %v633 = vpop.f32.mrf.mxu0
  %v634 = vadd.f32 %v93, %v633
  %v635 = vpop.f32.mrf.mxu0
  %v636 = vpop.f32.mrf.mxu0
  %v637 = vadd.f32 %v93, %v636
  %v638 = vpop.f32.mrf.mxu0
  %639 = vmatprep.mubr.bf16.mxu0 0
  %640 = vmatmul.mubr.bf16.gmra.mxu0 %v368
  %v641 = vpop.f32.mrf.mxu0
  %v642 = vadd.f32 %v93, %v641
  %v643 = vpop.f32.mrf.mxu0
  %v644 = vpop.f32.mrf.mxu0
  %v645 = vadd.f32 %v93, %v644
  %v646 = vpop.f32.mrf.mxu0
  %647 = vmatprep.mubr.bf16.mxu0 0
  %648 = vmatmul.mubr.bf16.gmra.mxu0 %v371
  %v649 = vpop.f32.mrf.mxu0
  %v650 = vadd.f32 %v93, %v649
  %v651 = vpop.f32.mrf.mxu0
  %v652 = vpop.f32.mrf.mxu0
  %v653 = vadd.f32 %v93, %v652
  %v654 = vpop.f32.mrf.mxu0
  %655 = vmatprep.mubr.bf16.mxu0 0
  %656 = vmatmul.mubr.bf16.gmra.mxu0 %v374
  %v657 = vpop.f32.mrf.mxu0
  %v658 = vadd.f32 %v93, %v657
  %v659 = vpop.f32.mrf.mxu0
  %v660 = vpop.f32.mrf.mxu0
  %v661 = vadd.f32 %v93, %v660
  %v662 = vpop.f32.mrf.mxu0
  %663 = vmatprep.mubr.bf16.mxu0 0
  %664 = vmatmul.mubr.bf16.gmra.mxu0 %v377
  %v665 = vpop.f32.mrf.mxu0
  %v666 = vadd.f32 %v93, %v665
  %v667 = vpop.f32.mrf.mxu0
  %v668 = vpop.f32.mrf.mxu0
  %v669 = vadd.f32 %v93, %v668
  %v670 = vpop.f32.mrf.mxu0
  %671 = vdwg.mxu0
  %vm672 = vcmask 64512
  %673 = vst.msk [vmem:[%s3] sm:$0xff] %vm672, %v418
  %674 = vst.msk [vmem:[%s3 + $0x8] sm:$0xff] %vm672, %v421
  %675 = vst.msk [vmem:[%s3 + $0x10] sm:$0xff] %vm672, %v426
  %676 = vst.msk [vmem:[%s3 + $0x18] sm:$0xff] %vm672, %v429
  %677 = vst.msk [vmem:[%s3 + $0x20] sm:$0xff] %vm672, %v434
  %678 = vst.msk [vmem:[%s3 + $0x28] sm:$0xff] %vm672, %v437
  %679 = vst.msk [vmem:[%s3 + $0x30] sm:$0xff] %vm672, %v442
  %680 = vst.msk [vmem:[%s3 + $0x38] sm:$0xff] %vm672, %v445
  %681 = vst.msk [vmem:[%s3 + $0x40] sm:$0xff] %vm672, %v450
  %682 = vst.msk [vmem:[%s3 + $0x48] sm:$0xff] %vm672, %v453
  %683 = vst.msk [vmem:[%s3 + $0x50] sm:$0xff] %vm672, %v458
  %684 = vst.msk [vmem:[%s3 + $0x58] sm:$0xff] %vm672, %v461
  %685 = vst.msk [vmem:[%s3 + $0x60] sm:$0xff] %vm672, %v466
  %686 = vst.msk [vmem:[%s3 + $0x68] sm:$0xff] %vm672, %v469
  %687 = vst.msk [vmem:[%s3 + $0x70] sm:$0xff] %vm672, %v474
  %688 = vst.msk [vmem:[%s3 + $0x78] sm:$0xff] %vm672, %v477
  %689 = vst.msk [vmem:[%s3 + $0x80] sm:$0xff] %vm672, %v482
  %690 = vst.msk [vmem:[%s3 + $0x88] sm:$0xff] %vm672, %v485
  %691 = vst.msk [vmem:[%s3 + $0x90] sm:$0xff] %vm672, %v490
  %692 = vst.msk [vmem:[%s3 + $0x98] sm:$0xff] %vm672, %v493
  %693 = vst.msk [vmem:[%s3 + $0xa0] sm:$0xff] %vm672, %v498
  %694 = vst.msk [vmem:[%s3 + $0xa8] sm:$0xff] %vm672, %v501
  %695 = vst.msk [vmem:[%s3 + $0xb0] sm:$0xff] %vm672, %v506
  %696 = vst.msk [vmem:[%s3 + $0xb8] sm:$0xff] %vm672, %v509
  %697 = vst.msk [vmem:[%s3 + $0xc0] sm:$0xff] %vm672, %v514
  %698 = vst.msk [vmem:[%s3 + $0xc8] sm:$0xff] %vm672, %v517
  %699 = vst.msk [vmem:[%s3 + $0xd0] sm:$0xff] %vm672, %v522
  %700 = vst.msk [vmem:[%s3 + $0xd8] sm:$0xff] %vm672, %v525
  %701 = vst.msk [vmem:[%s3 + $0xe0] sm:$0xff] %vm672, %v530
  %702 = vst.msk [vmem:[%s3 + $0xe8] sm:$0xff] %vm672, %v533
  %703 = vst.msk [vmem:[%s3 + $0xf0] sm:$0xff] %vm672, %v538
  %704 = vst.msk [vmem:[%s3 + $0xf8] sm:$0xff] %vm672, %v541
  %705 = vst.msk [vmem:[%s3 + $0x100] sm:$0xff] %vm672, %v546
  %706 = vst.msk [vmem:[%s3 + $0x108] sm:$0xff] %vm672, %v549
  %707 = vst.msk [vmem:[%s3 + $0x110] sm:$0xff] %vm672, %v554
  %708 = vst.msk [vmem:[%s3 + $0x118] sm:$0xff] %vm672, %v557
  %709 = vst.msk [vmem:[%s3 + $0x120] sm:$0xff] %vm672, %v562
  %710 = vst.msk [vmem:[%s3 + $0x128] sm:$0xff] %vm672, %v565
  %711 = vst.msk [vmem:[%s3 + $0x130] sm:$0xff] %vm672, %v570
  %712 = vst.msk [vmem:[%s3 + $0x138] sm:$0xff] %vm672, %v573
  %713 = vst.msk [vmem:[%s3 + $0x140] sm:$0xff] %vm672, %v578
  %714 = vst.msk [vmem:[%s3 + $0x148] sm:$0xff] %vm672, %v581
  %715 = vst.msk [vmem:[%s3 + $0x150] sm:$0xff] %vm672, %v586
  %716 = vst.msk [vmem:[%s3 + $0x158] sm:$0xff] %vm672, %v589
  %717 = vst.msk [vmem:[%s3 + $0x160] sm:$0xff] %vm672, %v594
  %718 = vst.msk [vmem:[%s3 + $0x168] sm:$0xff] %vm672, %v597
  %719 = vst.msk [vmem:[%s3 + $0x170] sm:$0xff] %vm672, %v602
  %720 = vst.msk [vmem:[%s3 + $0x178] sm:$0xff] %vm672, %v605
  %721 = vst.msk [vmem:[%s3 + $0x180] sm:$0xff] %vm672, %v610
  %722 = vst.msk [vmem:[%s3 + $0x188] sm:$0xff] %vm672, %v613
  %723 = vst.msk [vmem:[%s3 + $0x190] sm:$0xff] %vm672, %v618
  %724 = vst.msk [vmem:[%s3 + $0x198] sm:$0xff] %vm672, %v621
  %725 = vst.msk [vmem:[%s3 + $0x1a0] sm:$0xff] %vm672, %v626
  %726 = vst.msk [vmem:[%s3 + $0x1a8] sm:$0xff] %vm672, %v629
  %727 = vst.msk [vmem:[%s3 + $0x1b0] sm:$0xff] %vm672, %v634
  %728 = vst.msk [vmem:[%s3 + $0x1b8] sm:$0xff] %vm672, %v637
  %729 = vst.msk [vmem:[%s3 + $0x1c0] sm:$0xff] %vm672, %v642
  %730 = vst.msk [vmem:[%s3 + $0x1c8] sm:$0xff] %vm672, %v645
  %731 = vst.msk [vmem:[%s3 + $0x1d0] sm:$0xff] %vm672, %v650
  %732 = vst.msk [vmem:[%s3 + $0x1d8] sm:$0xff] %vm672, %v653
  %733 = vst.msk [vmem:[%s3 + $0x1e0] sm:$0xff] %vm672, %v658
  %734 = vst.msk [vmem:[%s3 + $0x1e8] sm:$0xff] %vm672, %v661
  %735 = vst.msk [vmem:[%s3 + $0x1f0] sm:$0xff] %vm672, %v666
  %736 = vst.msk [vmem:[%s3 + $0x1f8] sm:$0xff] %vm672, %v669
  // Predicated region
  $region14: #{deform_layer_forward.8} parent=0 // pred_check
    _
  $region15: #{deform_layer_forward.8} parent=0 // pred_check_branch
    %738 = sbr.rel (0) target = $region17
  $region16: #{deform_layer_forward.8} parent=0 // pred_region
    _
  $region17: #{deform_layer_forward.8} parent=0 // pred_fallthru
    _
  // Predicated region
  $region18: #{deform_layer_forward.8} parent=0 // pred_check
    _
  $region19: #{deform_layer_forward.8} parent=0 // pred_check_branch
    %740 = sbr.rel (0) target = $region21
  $region20: #{deform_layer_forward.8} parent=0 // pred_region
    _
  $region21: #{deform_layer_forward.8} parent=0 // pred_fallthru
    _

// kernel: deform_layer_forward.10
$region0: #{deform_layer_forward.10}
  #allocation0 [shape = 'u32[]', space=smem, size = 0x4, offset = 0x4, fixed_abs, tag = 'smem constant byte address 0x4 - core index']
  #allocation1 [shape = 'u32[144,128]{1,0:T(1,128)}', space=vmem, size = 0x12000, scoped, tag = 'internal scratch']
  %s0 = inlined_call_operand.vmem [shape: f32[512,8], index: 0, kind: input, shape index: {}]
  %s1 = inlined_call_operand.vmem [shape: f32[1,8], index: 1, kind: input, shape index: {}]
  %s2 = inlined_call_operand.vmem [shape: f32[1,8], index: 2, kind: input, shape index: {}]
  %s3 = inlined_call_operand.vmem [shape: bf16[512,8], index: 3, kind: output, shape index: {}]
  %s4 = sld [smem:[#allocation0]]
  $region22: #{deform_layer_forward.10} parent=0
    _
  %s6 = ssub.s32 1, %s4
  %s7 = scalar_select 0, %s6, %s4
  // Predicated region
  $region2: #{deform_layer_forward.10} parent=0 // pred_check
    _
  $region3: #{deform_layer_forward.10} parent=0 // pred_check_branch
    %9 = sbr.rel (0) target = $region5
  $region4: #{deform_layer_forward.10} parent=0 // pred_region
    _
  $region5: #{deform_layer_forward.10} parent=0 // pred_fallthru
    _
  // Predicated region
  $region6: #{deform_layer_forward.10} parent=0 // pred_check
    _
  $region7: #{deform_layer_forward.10} parent=0 // pred_check_branch
    %11 = sbr.rel (0) target = $region9
  $region8: #{deform_layer_forward.10} parent=0 // pred_region
    _
  $region9: #{deform_layer_forward.10} parent=0 // pred_fallthru
    _
  // Predicated region
  $region10: #{deform_layer_forward.10} parent=0 // pred_check
    _
  $region11: #{deform_layer_forward.10} parent=0 // pred_check_branch
    %13 = sbr.rel (0) target = $region13
  $region12: #{deform_layer_forward.10} parent=0 // pred_region
    _
  $region13: #{deform_layer_forward.10} parent=0 // pred_fallthru
    _
  %v14 = vld [vmem:[%s0] sm:$0xff]
  %v15 = vld [vmem:[%s0 + $0x8] sm:$0xff]
  %v16 = vld [vmem:[%s0 + $0x10] sm:$0xff]
  %v17 = vld [vmem:[%s0 + $0x18] sm:$0xff]
  %v18 = vld [vmem:[%s0 + $0x20] sm:$0xff]
  %v19 = vld [vmem:[%s0 + $0x28] sm:$0xff]
  %v20 = vld [vmem:[%s0 + $0x30] sm:$0xff]
  %v21 = vld [vmem:[%s0 + $0x38] sm:$0xff]
  %v22 = vld [vmem:[%s0 + $0x40] sm:$0xff]
  %v23 = vld [vmem:[%s0 + $0x48] sm:$0xff]
  %v24 = vld [vmem:[%s0 + $0x50] sm:$0xff]
  %v25 = vld [vmem:[%s0 + $0x58] sm:$0xff]
  %v26 = vld [vmem:[%s0 + $0x60] sm:$0xff]
  %v27 = vld [vmem:[%s0 + $0x68] sm:$0xff]
  %v28 = vld [vmem:[%s0 + $0x70] sm:$0xff]
  %v29 = vld [vmem:[%s0 + $0x78] sm:$0xff]
  %v30 = vld [vmem:[%s0 + $0x80] sm:$0xff]
  %v31 = vld [vmem:[%s0 + $0x88] sm:$0xff]
  %v32 = vld [vmem:[%s0 + $0x90] sm:$0xff]
  %v33 = vld [vmem:[%s0 + $0x98] sm:$0xff]
  %v34 = vld [vmem:[%s0 + $0xa0] sm:$0xff]
  %v35 = vld [vmem:[%s0 + $0xa8] sm:$0xff]
  %v36 = vld [vmem:[%s0 + $0xb0] sm:$0xff]
  %v37 = vld [vmem:[%s0 + $0xb8] sm:$0xff]
  %v38 = vld [vmem:[%s0 + $0xc0] sm:$0xff]
  %v39 = vld [vmem:[%s0 + $0xc8] sm:$0xff]
  %v40 = vld [vmem:[%s0 + $0xd0] sm:$0xff]
  %v41 = vld [vmem:[%s0 + $0xd8] sm:$0xff]
  %v42 = vld [vmem:[%s0 + $0xe0] sm:$0xff]
  %v43 = vld [vmem:[%s0 + $0xe8] sm:$0xff]
  %v44 = vld [vmem:[%s0 + $0xf0] sm:$0xff]
  %v45 = vld [vmem:[%s0 + $0xf8] sm:$0xff]
  %v46 = vld [vmem:[%s0 + $0x100] sm:$0xff]
  %v47 = vld [vmem:[%s0 + $0x108] sm:$0xff]
  %v48 = vld [vmem:[%s0 + $0x110] sm:$0xff]
  %v49 = vld [vmem:[%s0 + $0x118] sm:$0xff]
  %v50 = vld [vmem:[%s0 + $0x120] sm:$0xff]
  %v51 = vld [vmem:[%s0 + $0x128] sm:$0xff]
  %v52 = vld [vmem:[%s0 + $0x130] sm:$0xff]
  %v53 = vld [vmem:[%s0 + $0x138] sm:$0xff]
  %v54 = vld [vmem:[%s0 + $0x140] sm:$0xff]
  %v55 = vld [vmem:[%s0 + $0x148] sm:$0xff]
  %v56 = vld [vmem:[%s0 + $0x150] sm:$0xff]
  %v57 = vld [vmem:[%s0 + $0x158] sm:$0xff]
  %v58 = vld [vmem:[%s0 + $0x160] sm:$0xff]
  %v59 = vld [vmem:[%s0 + $0x168] sm:$0xff]
  %v60 = vld [vmem:[%s0 + $0x170] sm:$0xff]
  %v61 = vld [vmem:[%s0 + $0x178] sm:$0xff]
  %v62 = vld [vmem:[%s0 + $0x180] sm:$0xff]
  %v63 = vld [vmem:[%s0 + $0x188] sm:$0xff]
  %v64 = vld [vmem:[%s0 + $0x190] sm:$0xff]
  %v65 = vld [vmem:[%s0 + $0x198] sm:$0xff]
  %v66 = vld [vmem:[%s0 + $0x1a0] sm:$0xff]
  %v67 = vld [vmem:[%s0 + $0x1a8] sm:$0xff]
  %v68 = vld [vmem:[%s0 + $0x1b0] sm:$0xff]
  %v69 = vld [vmem:[%s0 + $0x1b8] sm:$0xff]
  %v70 = vld [vmem:[%s0 + $0x1c0] sm:$0xff]
  %v71 = vld [vmem:[%s0 + $0x1c8] sm:$0xff]
  %v72 = vld [vmem:[%s0 + $0x1d0] sm:$0xff]
  %v73 = vld [vmem:[%s0 + $0x1d8] sm:$0xff]
  %v74 = vld [vmem:[%s0 + $0x1e0] sm:$0xff]
  %v75 = vld [vmem:[%s0 + $0x1e8] sm:$0xff]
  %v76 = vld [vmem:[%s0 + $0x1f0] sm:$0xff]
  %v77 = vld [vmem:[%s0 + $0x1f8] sm:$0xff]
  %v78 = vld [vmem:[%s1] sm:$0x1]
  %v80 = vlaneseq
  %v81 = vshrl.u32 %v80, 7
  %v82 = vsub.s32 0, %v81
  %v83 = vrot.slane %v78, %v82
  %v85 = vmul.f32 %v14, %v83
  %v86 = vmul.f32 %v15, %v83
  %v87 = vmul.f32 %v16, %v83
  %v88 = vmul.f32 %v17, %v83
  %v89 = vmul.f32 %v18, %v83
  %v90 = vmul.f32 %v19, %v83
  %v91 = vmul.f32 %v20, %v83
  %v92 = vmul.f32 %v21, %v83
  %v93 = vmul.f32 %v22, %v83
  %v94 = vmul.f32 %v23, %v83
  %v95 = vmul.f32 %v24, %v83
  %v96 = vmul.f32 %v25, %v83
  %v97 = vmul.f32 %v26, %v83
  %v98 = vmul.f32 %v27, %v83
  %v99 = vmul.f32 %v28, %v83
  %v100 = vmul.f32 %v29, %v83
  %v101 = vmul.f32 %v30, %v83
  %v102 = vmul.f32 %v31, %v83
  %v103 = vmul.f32 %v32, %v83
  %v104 = vmul.f32 %v33, %v83
  %v105 = vmul.f32 %v34, %v83
  %v106 = vmul.f32 %v35, %v83
  %v107 = vmul.f32 %v36, %v83
  %v108 = vmul.f32 %v37, %v83
  %v109 = vmul.f32 %v38, %v83
  %v110 = vmul.f32 %v39, %v83
  %v111 = vmul.f32 %v40, %v83
  %v112 = vmul.f32 %v41, %v83
  %v113 = vmul.f32 %v42, %v83
  %v114 = vmul.f32 %v43, %v83
  %v115 = vmul.f32 %v44, %v83
  %v116 = vmul.f32 %v45, %v83
  %v117 = vmul.f32 %v46, %v83
  %v118 = vmul.f32 %v47, %v83
  %v119 = vmul.f32 %v48, %v83
  %v120 = vmul.f32 %v49, %v83
  %v121 = vmul.f32 %v50, %v83
  %v122 = vmul.f32 %v51, %v83
  %v123 = vmul.f32 %v52, %v83
  %v124 = vmul.f32 %v53, %v83
  %v125 = vmul.f32 %v54, %v83
  %v126 = vmul.f32 %v55, %v83
  %v127 = vmul.f32 %v56, %v83
  %v128 = vmul.f32 %v57, %v83
  %v129 = vmul.f32 %v58, %v83
  %v130 = vmul.f32 %v59, %v83
  %v131 = vmul.f32 %v60, %v83
  %v132 = vmul.f32 %v61, %v83
  %v133 = vmul.f32 %v62, %v83
  %v134 = vmul.f32 %v63, %v83
  %v135 = vmul.f32 %v64, %v83
  %v136 = vmul.f32 %v65, %v83
  %v137 = vmul.f32 %v66, %v83
  %v138 = vmul.f32 %v67, %v83
  %v139 = vmul.f32 %v68, %v83
  %v140 = vmul.f32 %v69, %v83
  %v141 = vmul.f32 %v70, %v83
  %v142 = vmul.f32 %v71, %v83
  %v143 = vmul.f32 %v72, %v83
  %v144 = vmul.f32 %v73, %v83
  %v145 = vmul.f32 %v74, %v83
  %v146 = vmul.f32 %v75, %v83
  %v147 = vmul.f32 %v76, %v83
  %v148 = vmul.f32 %v77, %v83
  %v149 = vld [vmem:[%s2] sm:$0x1]
  %v151 = vlaneseq
  %v152 = vshrl.u32 %v151, 7
  %v153 = vsub.s32 0, %v152
  %v154 = vrot.slane %v149, %v153
  %v156 = vadd.f32 %v85, %v154
  %v157 = vadd.f32 %v86, %v154
  %v158 = vadd.f32 %v87, %v154
  %v159 = vadd.f32 %v88, %v154
  %v160 = vadd.f32 %v89, %v154
  %v161 = vadd.f32 %v90, %v154
  %v162 = vadd.f32 %v91, %v154
  %v163 = vadd.f32 %v92, %v154
  %v164 = vadd.f32 %v93, %v154
  %v165 = vadd.f32 %v94, %v154
  %v166 = vadd.f32 %v95, %v154
  %v167 = vadd.f32 %v96, %v154
  %v168 = vadd.f32 %v97, %v154
  %v169 = vadd.f32 %v98, %v154
  %v170 = vadd.f32 %v99, %v154
  %v171 = vadd.f32 %v100, %v154
  %v172 = vadd.f32 %v101, %v154
  %v173 = vadd.f32 %v102, %v154
  %v174 = vadd.f32 %v103, %v154
  %v175 = vadd.f32 %v104, %v154
  %v176 = vadd.f32 %v105, %v154
  %v177 = vadd.f32 %v106, %v154
  %v178 = vadd.f32 %v107, %v154
  %v179 = vadd.f32 %v108, %v154
  %v180 = vadd.f32 %v109, %v154
  %v181 = vadd.f32 %v110, %v154
  %v182 = vadd.f32 %v111, %v154
  %v183 = vadd.f32 %v112, %v154
  %v184 = vadd.f32 %v113, %v154
  %v185 = vadd.f32 %v114, %v154
  %v186 = vadd.f32 %v115, %v154
  %v187 = vadd.f32 %v116, %v154
  %v188 = vadd.f32 %v117, %v154
  %v189 = vadd.f32 %v118, %v154
  %v190 = vadd.f32 %v119, %v154
  %v191 = vadd.f32 %v120, %v154
  %v192 = vadd.f32 %v121, %v154
  %v193 = vadd.f32 %v122, %v154
  %v194 = vadd.f32 %v123, %v154
  %v195 = vadd.f32 %v124, %v154
  %v196 = vadd.f32 %v125, %v154
  %v197 = vadd.f32 %v126, %v154
  %v198 = vadd.f32 %v127, %v154
  %v199 = vadd.f32 %v128, %v154
  %v200 = vadd.f32 %v129, %v154
  %v201 = vadd.f32 %v130, %v154
  %v202 = vadd.f32 %v131, %v154
  %v203 = vadd.f32 %v132, %v154
  %v204 = vadd.f32 %v133, %v154
  %v205 = vadd.f32 %v134, %v154
  %v206 = vadd.f32 %v135, %v154
  %v207 = vadd.f32 %v136, %v154
  %v208 = vadd.f32 %v137, %v154
  %v209 = vadd.f32 %v138, %v154
  %v210 = vadd.f32 %v139, %v154
  %v211 = vadd.f32 %v140, %v154
  %v212 = vadd.f32 %v141, %v154
  %v213 = vadd.f32 %v142, %v154
  %v214 = vadd.f32 %v143, %v154
  %v215 = vadd.f32 %v144, %v154
  %v216 = vadd.f32 %v145, %v154
  %v217 = vadd.f32 %v146, %v154
  %v218 = vadd.f32 %v147, %v154
  %v219 = vadd.f32 %v148, %v154
  %v220 = vmax.f32 %v156, 0.0
  %v221 = vmax.f32 %v157, 0.0
  %v222 = vmax.f32 %v158, 0.0
  %v223 = vmax.f32 %v159, 0.0
  %v224 = vmax.f32 %v160, 0.0
  %v225 = vmax.f32 %v161, 0.0
  %v226 = vmax.f32 %v162, 0.0
  %v227 = vmax.f32 %v163, 0.0
  %v228 = vmax.f32 %v164, 0.0
  %v229 = vmax.f32 %v165, 0.0
  %v230 = vmax.f32 %v166, 0.0
  %v231 = vmax.f32 %v167, 0.0
  %v232 = vmax.f32 %v168, 0.0
  %v233 = vmax.f32 %v169, 0.0
  %v234 = vmax.f32 %v170, 0.0
  %v235 = vmax.f32 %v171, 0.0
  %v236 = vmax.f32 %v172, 0.0
  %v237 = vmax.f32 %v173, 0.0
  %v238 = vmax.f32 %v174, 0.0
  %v239 = vmax.f32 %v175, 0.0
  %v240 = vmax.f32 %v176, 0.0
  %v241 = vmax.f32 %v177, 0.0
  %v242 = vmax.f32 %v178, 0.0
  %v243 = vmax.f32 %v179, 0.0
  %v244 = vmax.f32 %v180, 0.0
  %v245 = vmax.f32 %v181, 0.0
  %v246 = vmax.f32 %v182, 0.0
  %v247 = vmax.f32 %v183, 0.0
  %v248 = vmax.f32 %v184, 0.0
  %v249 = vmax.f32 %v185, 0.0
  %v250 = vmax.f32 %v186, 0.0
  %v251 = vmax.f32 %v187, 0.0
  %v252 = vmax.f32 %v188, 0.0
  %v253 = vmax.f32 %v189, 0.0
  %v254 = vmax.f32 %v190, 0.0
  %v255 = vmax.f32 %v191, 0.0
  %v256 = vmax.f32 %v192, 0.0
  %v257 = vmax.f32 %v193, 0.0
  %v258 = vmax.f32 %v194, 0.0
  %v259 = vmax.f32 %v195, 0.0
  %v260 = vmax.f32 %v196, 0.0
  %v261 = vmax.f32 %v197, 0.0
  %v262 = vmax.f32 %v198, 0.0
  %v263 = vmax.f32 %v199, 0.0
  %v264 = vmax.f32 %v200, 0.0
  %v265 = vmax.f32 %v201, 0.0
  %v266 = vmax.f32 %v202, 0.0
  %v267 = vmax.f32 %v203, 0.0
  %v268 = vmax.f32 %v204, 0.0
  %v269 = vmax.f32 %v205, 0.0
  %v270 = vmax.f32 %v206, 0.0
  %v271 = vmax.f32 %v207, 0.0
  %v272 = vmax.f32 %v208, 0.0
  %v273 = vmax.f32 %v209, 0.0
  %v274 = vmax.f32 %v210, 0.0
  %v275 = vmax.f32 %v211, 0.0
  %v276 = vmax.f32 %v212, 0.0
  %v277 = vmax.f32 %v213, 0.0
  %v278 = vmax.f32 %v214, 0.0
  %v279 = vmax.f32 %v215, 0.0
  %v280 = vmax.f32 %v216, 0.0
  %v281 = vmax.f32 %v217, 0.0
  %v282 = vmax.f32 %v218, 0.0
  %v283 = vmax.f32 %v219, 0.0
  %v284 = vpack.c.bf16 %v221, %v220
  %v285 = vpack.c.bf16 %v223, %v222
  %v286 = vpack.c.bf16 %v225, %v224
  %v287 = vpack.c.bf16 %v227, %v226
  %v288 = vpack.c.bf16 %v229, %v228
  %v289 = vpack.c.bf16 %v231, %v230
  %v290 = vpack.c.bf16 %v233, %v232
  %v291 = vpack.c.bf16 %v235, %v234
  %v292 = vpack.c.bf16 %v237, %v236
  %v293 = vpack.c.bf16 %v239, %v238
  %v294 = vpack.c.bf16 %v241, %v240
  %v295 = vpack.c.bf16 %v243, %v242
  %v296 = vpack.c.bf16 %v245, %v244
  %v297 = vpack.c.bf16 %v247, %v246
  %v298 = vpack.c.bf16 %v249, %v248
  %v299 = vpack.c.bf16 %v251, %v250
  %v300 = vpack.c.bf16 %v253, %v252
  %v301 = vpack.c.bf16 %v255, %v254
  %v302 = vpack.c.bf16 %v257, %v256
  %v303 = vpack.c.bf16 %v259, %v258
  %v304 = vpack.c.bf16 %v261, %v260
  %v305 = vpack.c.bf16 %v263, %v262
  %v306 = vpack.c.bf16 %v265, %v264
  %v307 = vpack.c.bf16 %v267, %v266
  %v308 = vpack.c.bf16 %v269, %v268
  %v309 = vpack.c.bf16 %v271, %v270
  %v310 = vpack.c.bf16 %v273, %v272
  %v311 = vpack.c.bf16 %v275, %v274
  %v312 = vpack.c.bf16 %v277, %v276
  %v313 = vpack.c.bf16 %v279, %v278
  %v314 = vpack.c.bf16 %v281, %v280
  %v315 = vpack.c.bf16 %v283, %v282
  %v348 = vunpack.c.l.b16 %v284
  %v349 = vunpack.c.h.b16 %v284
  %v350 = vunpack.c.l.b16 %v285
  %v351 = vunpack.c.h.b16 %v285
  %v352 = vunpack.c.l.b16 %v286
  %v353 = vunpack.c.h.b16 %v286
  %v354 = vunpack.c.l.b16 %v287
  %v355 = vunpack.c.h.b16 %v287
  %v356 = vunpack.c.l.b16 %v288
  %v357 = vunpack.c.h.b16 %v288
  %v358 = vunpack.c.l.b16 %v289
  %v359 = vunpack.c.h.b16 %v289
  %v360 = vunpack.c.l.b16 %v290
  %v361 = vunpack.c.h.b16 %v290
  %v362 = vunpack.c.l.b16 %v291
  %v363 = vunpack.c.h.b16 %v291
  %v364 = vunpack.c.l.b16 %v292
  %v365 = vunpack.c.h.b16 %v292
  %v366 = vunpack.c.l.b16 %v293
  %v367 = vunpack.c.h.b16 %v293
  %v368 = vunpack.c.l.b16 %v294
  %v369 = vunpack.c.h.b16 %v294
  %v370 = vunpack.c.l.b16 %v295
  %v371 = vunpack.c.h.b16 %v295
  %v372 = vunpack.c.l.b16 %v296
  %v373 = vunpack.c.h.b16 %v296
  %v374 = vunpack.c.l.b16 %v297
  %v375 = vunpack.c.h.b16 %v297
  %v376 = vunpack.c.l.b16 %v298
  %v377 = vunpack.c.h.b16 %v298
  %v378 = vunpack.c.l.b16 %v299
  %v379 = vunpack.c.h.b16 %v299
  %v380 = vunpack.c.l.b16 %v300
  %v381 = vunpack.c.h.b16 %v300
  %v382 = vunpack.c.l.b16 %v301
  %v383 = vunpack.c.h.b16 %v301
  %v384 = vunpack.c.l.b16 %v302
  %v385 = vunpack.c.h.b16 %v302
  %v386 = vunpack.c.l.b16 %v303
  %v387 = vunpack.c.h.b16 %v303
  %v388 = vunpack.c.l.b16 %v304
  %v389 = vunpack.c.h.b16 %v304
  %v390 = vunpack.c.l.b16 %v305
  %v391 = vunpack.c.h.b16 %v305
  %v392 = vunpack.c.l.b16 %v306
  %v393 = vunpack.c.h.b16 %v306
  %v394 = vunpack.c.l.b16 %v307
  %v395 = vunpack.c.h.b16 %v307
  %v396 = vunpack.c.l.b16 %v308
  %v397 = vunpack.c.h.b16 %v308
  %v398 = vunpack.c.l.b16 %v309
  %v399 = vunpack.c.h.b16 %v309
  %v400 = vunpack.c.l.b16 %v310
  %v401 = vunpack.c.h.b16 %v310
  %v402 = vunpack.c.l.b16 %v311
  %v403 = vunpack.c.h.b16 %v311
  %v404 = vunpack.c.l.b16 %v312
  %v405 = vunpack.c.h.b16 %v312
  %v406 = vunpack.c.l.b16 %v313
  %v407 = vunpack.c.h.b16 %v313
  %v408 = vunpack.c.l.b16 %v314
  %v409 = vunpack.c.h.b16 %v314
  %v410 = vunpack.c.l.b16 %v315
  %v411 = vunpack.c.h.b16 %v315
  %v412 = vpack.c.b16 %v348, %v348
  %v413 = vpack.c.b16 %v349, %v349
  %v414 = vpack.c.b16 %v350, %v350
  %v415 = vpack.c.b16 %v351, %v351
  %v416 = vpack.c.b16 %v352, %v352
  %v417 = vpack.c.b16 %v353, %v353
  %v418 = vpack.c.b16 %v354, %v354
  %v419 = vpack.c.b16 %v355, %v355
  %v420 = vpack.c.b16 %v356, %v356
  %v421 = vpack.c.b16 %v357, %v357
  %v422 = vpack.c.b16 %v358, %v358
  %v423 = vpack.c.b16 %v359, %v359
  %v424 = vpack.c.b16 %v360, %v360
  %v425 = vpack.c.b16 %v361, %v361
  %v426 = vpack.c.b16 %v362, %v362
  %v427 = vpack.c.b16 %v363, %v363
  %v428 = vpack.c.b16 %v364, %v364
  %v429 = vpack.c.b16 %v365, %v365
  %v430 = vpack.c.b16 %v366, %v366
  %v431 = vpack.c.b16 %v367, %v367
  %v432 = vpack.c.b16 %v368, %v368
  %v433 = vpack.c.b16 %v369, %v369
  %v434 = vpack.c.b16 %v370, %v370
  %v435 = vpack.c.b16 %v371, %v371
  %v436 = vpack.c.b16 %v372, %v372
  %v437 = vpack.c.b16 %v373, %v373
  %v438 = vpack.c.b16 %v374, %v374
  %v439 = vpack.c.b16 %v375, %v375
  %v440 = vpack.c.b16 %v376, %v376
  %v441 = vpack.c.b16 %v377, %v377
  %v442 = vpack.c.b16 %v378, %v378
  %v443 = vpack.c.b16 %v379, %v379
  %v444 = vpack.c.b16 %v380, %v380
  %v445 = vpack.c.b16 %v381, %v381
  %v446 = vpack.c.b16 %v382, %v382
  %v447 = vpack.c.b16 %v383, %v383
  %v448 = vpack.c.b16 %v384, %v384
  %v449 = vpack.c.b16 %v385, %v385
  %v450 = vpack.c.b16 %v386, %v386
  %v451 = vpack.c.b16 %v387, %v387
  %v452 = vpack.c.b16 %v388, %v388
  %v453 = vpack.c.b16 %v389, %v389
  %v454 = vpack.c.b16 %v390, %v390
  %v455 = vpack.c.b16 %v391, %v391
  %v456 = vpack.c.b16 %v392, %v392
  %v457 = vpack.c.b16 %v393, %v393
  %v458 = vpack.c.b16 %v394, %v394
  %v459 = vpack.c.b16 %v395, %v395
  %v460 = vpack.c.b16 %v396, %v396
  %v461 = vpack.c.b16 %v397, %v397
  %v462 = vpack.c.b16 %v398, %v398
  %v463 = vpack.c.b16 %v399, %v399
  %v464 = vpack.c.b16 %v400, %v400
  %v465 = vpack.c.b16 %v401, %v401
  %v466 = vpack.c.b16 %v402, %v402
  %v467 = vpack.c.b16 %v403, %v403
  %v468 = vpack.c.b16 %v404, %v404
  %v469 = vpack.c.b16 %v405, %v405
  %v470 = vpack.c.b16 %v406, %v406
  %v471 = vpack.c.b16 %v407, %v407
  %v472 = vpack.c.b16 %v408, %v408
  %v473 = vpack.c.b16 %v409, %v409
  %v474 = vpack.c.b16 %v410, %v410
  %v475 = vpack.c.b16 %v411, %v411
  %vm540 = vcmask 60416
  %541 = vst.msk [vmem:[%s3] sm:$0xf] %vm540, %v412
  %542 = vst.msk [vmem:[%s3 + $0x4] sm:$0xf] %vm540, %v413
  %543 = vst.msk [vmem:[%s3 + $0x8] sm:$0xf] %vm540, %v414
  %544 = vst.msk [vmem:[%s3 + $0xc] sm:$0xf] %vm540, %v415
  %545 = vst.msk [vmem:[%s3 + $0x10] sm:$0xf] %vm540, %v416
  %546 = vst.msk [vmem:[%s3 + $0x14] sm:$0xf] %vm540, %v417
  %547 = vst.msk [vmem:[%s3 + $0x18] sm:$0xf] %vm540, %v418
  %548 = vst.msk [vmem:[%s3 + $0x1c] sm:$0xf] %vm540, %v419
  %549 = vst.msk [vmem:[%s3 + $0x20] sm:$0xf] %vm540, %v420
  %550 = vst.msk [vmem:[%s3 + $0x24] sm:$0xf] %vm540, %v421
  %551 = vst.msk [vmem:[%s3 + $0x28] sm:$0xf] %vm540, %v422
  %552 = vst.msk [vmem:[%s3 + $0x2c] sm:$0xf] %vm540, %v423
  %553 = vst.msk [vmem:[%s3 + $0x30] sm:$0xf] %vm540, %v424
  %554 = vst.msk [vmem:[%s3 + $0x34] sm:$0xf] %vm540, %v425
  %555 = vst.msk [vmem:[%s3 + $0x38] sm:$0xf] %vm540, %v426
  %556 = vst.msk [vmem:[%s3 + $0x3c] sm:$0xf] %vm540, %v427
  %557 = vst.msk [vmem:[%s3 + $0x40] sm:$0xf] %vm540, %v428
  %558 = vst.msk [vmem:[%s3 + $0x44] sm:$0xf] %vm540, %v429
  %559 = vst.msk [vmem:[%s3 + $0x48] sm:$0xf] %vm540, %v430
  %560 = vst.msk [vmem:[%s3 + $0x4c] sm:$0xf] %vm540, %v431
  %561 = vst.msk [vmem:[%s3 + $0x50] sm:$0xf] %vm540, %v432
  %562 = vst.msk [vmem:[%s3 + $0x54] sm:$0xf] %vm540, %v433
  %563 = vst.msk [vmem:[%s3 + $0x58] sm:$0xf] %vm540, %v434
  %564 = vst.msk [vmem:[%s3 + $0x5c] sm:$0xf] %vm540, %v435
  %565 = vst.msk [vmem:[%s3 + $0x60] sm:$0xf] %vm540, %v436
  %566 = vst.msk [vmem:[%s3 + $0x64] sm:$0xf] %vm540, %v437
  %567 = vst.msk [vmem:[%s3 + $0x68] sm:$0xf] %vm540, %v438
  %568 = vst.msk [vmem:[%s3 + $0x6c] sm:$0xf] %vm540, %v439
  %569 = vst.msk [vmem:[%s3 + $0x70] sm:$0xf] %vm540, %v440
  %570 = vst.msk [vmem:[%s3 + $0x74] sm:$0xf] %vm540, %v441
  %571 = vst.msk [vmem:[%s3 + $0x78] sm:$0xf] %vm540, %v442
  %572 = vst.msk [vmem:[%s3 + $0x7c] sm:$0xf] %vm540, %v443
  %573 = vst.msk [vmem:[%s3 + $0x80] sm:$0xf] %vm540, %v444
  %574 = vst.msk [vmem:[%s3 + $0x84] sm:$0xf] %vm540, %v445
  %575 = vst.msk [vmem:[%s3 + $0x88] sm:$0xf] %vm540, %v446
  %576 = vst.msk [vmem:[%s3 + $0x8c] sm:$0xf] %vm540, %v447
  %577 = vst.msk [vmem:[%s3 + $0x90] sm:$0xf] %vm540, %v448
  %578 = vst.msk [vmem:[%s3 + $0x94] sm:$0xf] %vm540, %v449
  %579 = vst.msk [vmem:[%s3 + $0x98] sm:$0xf] %vm540, %v450
  %580 = vst.msk [vmem:[%s3 + $0x9c] sm:$0xf] %vm540, %v451
  %581 = vst.msk [vmem:[%s3 + $0xa0] sm:$0xf] %vm540, %v452
  %582 = vst.msk [vmem:[%s3 + $0xa4] sm:$0xf] %vm540, %v453
  %583 = vst.msk [vmem:[%s3 + $0xa8] sm:$0xf] %vm540, %v454
  %584 = vst.msk [vmem:[%s3 + $0xac] sm:$0xf] %vm540, %v455
  %585 = vst.msk [vmem:[%s3 + $0xb0] sm:$0xf] %vm540, %v456
  %586 = vst.msk [vmem:[%s3 + $0xb4] sm:$0xf] %vm540, %v457
  %587 = vst.msk [vmem:[%s3 + $0xb8] sm:$0xf] %vm540, %v458
  %588 = vst.msk [vmem:[%s3 + $0xbc] sm:$0xf] %vm540, %v459
  %589 = vst.msk [vmem:[%s3 + $0xc0] sm:$0xf] %vm540, %v460
  %590 = vst.msk [vmem:[%s3 + $0xc4] sm:$0xf] %vm540, %v461
  %591 = vst.msk [vmem:[%s3 + $0xc8] sm:$0xf] %vm540, %v462
  %592 = vst.msk [vmem:[%s3 + $0xcc] sm:$0xf] %vm540, %v463
  %593 = vst.msk [vmem:[%s3 + $0xd0] sm:$0xf] %vm540, %v464
  %594 = vst.msk [vmem:[%s3 + $0xd4] sm:$0xf] %vm540, %v465
  %595 = vst.msk [vmem:[%s3 + $0xd8] sm:$0xf] %vm540, %v466
  %596 = vst.msk [vmem:[%s3 + $0xdc] sm:$0xf] %vm540, %v467
  %597 = vst.msk [vmem:[%s3 + $0xe0] sm:$0xf] %vm540, %v468
  %598 = vst.msk [vmem:[%s3 + $0xe4] sm:$0xf] %vm540, %v469
  %599 = vst.msk [vmem:[%s3 + $0xe8] sm:$0xf] %vm540, %v470
  %600 = vst.msk [vmem:[%s3 + $0xec] sm:$0xf] %vm540, %v471
  %601 = vst.msk [vmem:[%s3 + $0xf0] sm:$0xf] %vm540, %v472
  %602 = vst.msk [vmem:[%s3 + $0xf4] sm:$0xf] %vm540, %v473
  %603 = vst.msk [vmem:[%s3 + $0xf8] sm:$0xf] %vm540, %v474
  %604 = vst.msk [vmem:[%s3 + $0xfc] sm:$0xf] %vm540, %v475
  // Predicated region
  $region14: #{deform_layer_forward.10} parent=0 // pred_check
    _
  $region15: #{deform_layer_forward.10} parent=0 // pred_check_branch
    %606 = sbr.rel (0) target = $region17
  $region16: #{deform_layer_forward.10} parent=0 // pred_region
    _
  $region17: #{deform_layer_forward.10} parent=0 // pred_fallthru
    _
  // Predicated region
  $region18: #{deform_layer_forward.10} parent=0 // pred_check
    _
  $region19: #{deform_layer_forward.10} parent=0 // pred_check_branch
    %608 = sbr.rel (0) target = $region21
  $region20: #{deform_layer_forward.10} parent=0 // pred_region
    _
  $region21: #{deform_layer_forward.10} parent=0 // pred_fallthru
    _

// kernel: deform_layer_forward.12
$region0: #{deform_layer_forward.12}
  #allocation0 [shape = 'u32[]', space=smem, size = 0x4, offset = 0x4, fixed_abs, tag = 'smem constant byte address 0x4 - core index']
  #allocation1 [shape = 'u32[144,128]{1,0:T(1,128)}', space=vmem, size = 0x12000, scoped, tag = 'internal scratch']
  %s0 = inlined_call_operand.vmem [shape: f32[512,32], index: 0, kind: input, shape index: {}]
  %s1 = inlined_call_operand.vmem [shape: f32[1,32], index: 1, kind: output, shape index: {0}]
  %s2 = inlined_call_operand.vmem [shape: f32[1,32], index: 2, kind: output, shape index: {1}]
  %3 = xla_tuple %s1, %s2
  %s4 = sld [smem:[#allocation0]]
  $region26: #{deform_layer_forward.12} parent=0
    _
  %s6 = ssub.s32 1, %s4
  %s7 = scalar_select 0, %s6, %s4
  // Predicated region
  $region2: #{deform_layer_forward.12} parent=0 // pred_check
    _
  $region3: #{deform_layer_forward.12} parent=0 // pred_check_branch
    %9 = sbr.rel (0) target = $region5
  $region4: #{deform_layer_forward.12} parent=0 // pred_region
    _
  $region5: #{deform_layer_forward.12} parent=0 // pred_fallthru
    _
  %p10 = scmp.eq.s32.totalorder 0, 0
  // Predicated region
  $region6: #{deform_layer_forward.12} parent=0 // pred_check
    %p11 = pneg %p10
  $region7: #{deform_layer_forward.12} parent=0 // pred_check_branch
    %13 = sbr.rel (%p11) target = $region9
  $region8: #{deform_layer_forward.12} parent=0 // pred_region
    %vm14 = vcmask 253952
    %15 = vst.msk [vmem:[%s1] sm:$0x1] %vm14, 0.0
    %16 = vst.msk [vmem:[%s2] sm:$0x1] %vm14, 0.0
  $region9: #{deform_layer_forward.12} parent=0 // pred_fallthru
    _
  %v17 = vld [vmem:[%s0] sm:$0xff]
  %v18 = vld [vmem:[%s0 + $0x8] sm:$0xff]
  %v19 = vld [vmem:[%s0 + $0x10] sm:$0xff]
  %v20 = vld [vmem:[%s0 + $0x18] sm:$0xff]
  %v21 = vld [vmem:[%s0 + $0x20] sm:$0xff]
  %v22 = vld [vmem:[%s0 + $0x28] sm:$0xff]
  %v23 = vld [vmem:[%s0 + $0x30] sm:$0xff]
  %v24 = vld [vmem:[%s0 + $0x38] sm:$0xff]
  %v25 = vld [vmem:[%s0 + $0x40] sm:$0xff]
  %v26 = vld [vmem:[%s0 + $0x48] sm:$0xff]
  %v27 = vld [vmem:[%s0 + $0x50] sm:$0xff]
  %v28 = vld [vmem:[%s0 + $0x58] sm:$0xff]
  %v29 = vld [vmem:[%s0 + $0x60] sm:$0xff]
  %v30 = vld [vmem:[%s0 + $0x68] sm:$0xff]
  %v31 = vld [vmem:[%s0 + $0x70] sm:$0xff]
  %v32 = vld [vmem:[%s0 + $0x78] sm:$0xff]
  %v33 = vld [vmem:[%s0 + $0x80] sm:$0xff]
  %v34 = vld [vmem:[%s0 + $0x88] sm:$0xff]
  %v35 = vld [vmem:[%s0 + $0x90] sm:$0xff]
  %v36 = vld [vmem:[%s0 + $0x98] sm:$0xff]
  %v37 = vld [vmem:[%s0 + $0xa0] sm:$0xff]
  %v38 = vld [vmem:[%s0 + $0xa8] sm:$0xff]
  %v39 = vld [vmem:[%s0 + $0xb0] sm:$0xff]
  %v40 = vld [vmem:[%s0 + $0xb8] sm:$0xff]
  %v41 = vld [vmem:[%s0 + $0xc0] sm:$0xff]
  %v42 = vld [vmem:[%s0 + $0xc8] sm:$0xff]
  %v43 = vld [vmem:[%s0 + $0xd0] sm:$0xff]
  %v44 = vld [vmem:[%s0 + $0xd8] sm:$0xff]
  %v45 = vld [vmem:[%s0 + $0xe0] sm:$0xff]
  %v46 = vld [vmem:[%s0 + $0xe8] sm:$0xff]
  %v47 = vld [vmem:[%s0 + $0xf0] sm:$0xff]
  %v48 = vld [vmem:[%s0 + $0xf8] sm:$0xff]
  %v49 = vld [vmem:[%s0 + $0x100] sm:$0xff]
  %v50 = vld [vmem:[%s0 + $0x108] sm:$0xff]
  %v51 = vld [vmem:[%s0 + $0x110] sm:$0xff]
  %v52 = vld [vmem:[%s0 + $0x118] sm:$0xff]
  %v53 = vld [vmem:[%s0 + $0x120] sm:$0xff]
  %v54 = vld [vmem:[%s0 + $0x128] sm:$0xff]
  %v55 = vld [vmem:[%s0 + $0x130] sm:$0xff]
  %v56 = vld [vmem:[%s0 + $0x138] sm:$0xff]
  %v57 = vld [vmem:[%s0 + $0x140] sm:$0xff]
  %v58 = vld [vmem:[%s0 + $0x148] sm:$0xff]
  %v59 = vld [vmem:[%s0 + $0x150] sm:$0xff]
  %v60 = vld [vmem:[%s0 + $0x158] sm:$0xff]
  %v61 = vld [vmem:[%s0 + $0x160] sm:$0xff]
  %v62 = vld [vmem:[%s0 + $0x168] sm:$0xff]
  %v63 = vld [vmem:[%s0 + $0x170] sm:$0xff]
  %v64 = vld [vmem:[%s0 + $0x178] sm:$0xff]
  %v65 = vld [vmem:[%s0 + $0x180] sm:$0xff]
  %v66 = vld [vmem:[%s0 + $0x188] sm:$0xff]
  %v67 = vld [vmem:[%s0 + $0x190] sm:$0xff]
  %v68 = vld [vmem:[%s0 + $0x198] sm:$0xff]
  %v69 = vld [vmem:[%s0 + $0x1a0] sm:$0xff]
  %v70 = vld [vmem:[%s0 + $0x1a8] sm:$0xff]
  %v71 = vld [vmem:[%s0 + $0x1b0] sm:$0xff]
  %v72 = vld [vmem:[%s0 + $0x1b8] sm:$0xff]
  %v73 = vld [vmem:[%s0 + $0x1c0] sm:$0xff]
  %v74 = vld [vmem:[%s0 + $0x1c8] sm:$0xff]
  %v75 = vld [vmem:[%s0 + $0x1d0] sm:$0xff]
  %v76 = vld [vmem:[%s0 + $0x1d8] sm:$0xff]
  %v77 = vld [vmem:[%s0 + $0x1e0] sm:$0xff]
  %v78 = vld [vmem:[%s0 + $0x1e8] sm:$0xff]
  %v79 = vld [vmem:[%s0 + $0x1f0] sm:$0xff]
  %v80 = vld [vmem:[%s0 + $0x1f8] sm:$0xff]
  %v81 = vld [vmem:[%s1] sm:$0x1]
  %vm82 = vcmask 261120
  %v83 = vsel %vm82, %v17, 0.0
  %v84 = vsel %vm82, %v18, 0.0
  %v85 = vadd.f32 %v83, %v84
  %v86 = vsel %vm82, %v19, 0.0
  %v87 = vadd.f32 %v85, %v86
  %v88 = vsel %vm82, %v20, 0.0
  %v89 = vadd.f32 %v87, %v88
  %v90 = vsel %vm82, %v21, 0.0
  %v91 = vadd.f32 %v89, %v90
  %v92 = vsel %vm82, %v22, 0.0
  %v93 = vadd.f32 %v91, %v92
  %v94 = vsel %vm82, %v23, 0.0
  %v95 = vadd.f32 %v93, %v94
  %v96 = vsel %vm82, %v24, 0.0
  %v97 = vadd.f32 %v95, %v96
  %v98 = vsel %vm82, %v25, 0.0
  %v99 = vadd.f32 %v97, %v98
  %v100 = vsel %vm82, %v26, 0.0
  %v101 = vadd.f32 %v99, %v100
  %v102 = vsel %vm82, %v27, 0.0
  %v103 = vadd.f32 %v101, %v102
  %v104 = vsel %vm82, %v28, 0.0
  %v105 = vadd.f32 %v103, %v104
  %v106 = vsel %vm82, %v29, 0.0
  %v107 = vadd.f32 %v105, %v106
  %v108 = vsel %vm82, %v30, 0.0
  %v109 = vadd.f32 %v107, %v108
  %v110 = vsel %vm82, %v31, 0.0
  %v111 = vadd.f32 %v109, %v110
  %v112 = vsel %vm82, %v32, 0.0
  %v113 = vadd.f32 %v111, %v112
  %v114 = vsel %vm82, %v33, 0.0
  %v115 = vadd.f32 %v113, %v114
  %v116 = vsel %vm82, %v34, 0.0
  %v117 = vadd.f32 %v115, %v116
  %v118 = vsel %vm82, %v35, 0.0
  %v119 = vadd.f32 %v117, %v118
  %v120 = vsel %vm82, %v36, 0.0
  %v121 = vadd.f32 %v119, %v120
  %v122 = vsel %vm82, %v37, 0.0
  %v123 = vadd.f32 %v121, %v122
  %v124 = vsel %vm82, %v38, 0.0
  %v125 = vadd.f32 %v123, %v124
  %v126 = vsel %vm82, %v39, 0.0
  %v127 = vadd.f32 %v125, %v126
  %v128 = vsel %vm82, %v40, 0.0
  %v129 = vadd.f32 %v127, %v128
  %v130 = vsel %vm82, %v41, 0.0
  %v131 = vadd.f32 %v129, %v130
  %v132 = vsel %vm82, %v42, 0.0
  %v133 = vadd.f32 %v131, %v132
  %v134 = vsel %vm82, %v43, 0.0
  %v135 = vadd.f32 %v133, %v134
  %v136 = vsel %vm82, %v44, 0.0
  %v137 = vadd.f32 %v135, %v136
  %v138 = vsel %vm82, %v45, 0.0
  %v139 = vadd.f32 %v137, %v138
  %v140 = vsel %vm82, %v46, 0.0
  %v141 = vadd.f32 %v139, %v140
  %v142 = vsel %vm82, %v47, 0.0
  %v143 = vadd.f32 %v141, %v142
  %v144 = vsel %vm82, %v48, 0.0
  %v145 = vadd.f32 %v143, %v144
  %v146 = vsel %vm82, %v49, 0.0
  %v147 = vadd.f32 %v145, %v146
  %v148 = vsel %vm82, %v50, 0.0
  %v149 = vadd.f32 %v147, %v148
  %v150 = vsel %vm82, %v51, 0.0
  %v151 = vadd.f32 %v149, %v150
  %v152 = vsel %vm82, %v52, 0.0
  %v153 = vadd.f32 %v151, %v152
  %v154 = vsel %vm82, %v53, 0.0
  %v155 = vadd.f32 %v153, %v154
  %v156 = vsel %vm82, %v54, 0.0
  %v157 = vadd.f32 %v155, %v156
  %v158 = vsel %vm82, %v55, 0.0
  %v159 = vadd.f32 %v157, %v158
  %v160 = vsel %vm82, %v56, 0.0
  %v161 = vadd.f32 %v159, %v160
  %v162 = vsel %vm82, %v57, 0.0
  %v163 = vadd.f32 %v161, %v162
  %v164 = vsel %vm82, %v58, 0.0
  %v165 = vadd.f32 %v163, %v164
  %v166 = vsel %vm82, %v59, 0.0
  %v167 = vadd.f32 %v165, %v166
  %v168 = vsel %vm82, %v60, 0.0
  %v169 = vadd.f32 %v167, %v168
  %v170 = vsel %vm82, %v61, 0.0
  %v171 = vadd.f32 %v169, %v170
  %v172 = vsel %vm82, %v62, 0.0
  %v173 = vadd.f32 %v171, %v172
  %v174 = vsel %vm82, %v63, 0.0
  %v175 = vadd.f32 %v173, %v174
  %v176 = vsel %vm82, %v64, 0.0
  %v177 = vadd.f32 %v175, %v176
  %v178 = vsel %vm82, %v65, 0.0
  %v179 = vadd.f32 %v177, %v178
  %v180 = vsel %vm82, %v66, 0.0
  %v181 = vadd.f32 %v179, %v180
  %v182 = vsel %vm82, %v67, 0.0
  %v183 = vadd.f32 %v181, %v182
  %v184 = vsel %vm82, %v68, 0.0
  %v185 = vadd.f32 %v183, %v184
  %v186 = vsel %vm82, %v69, 0.0
  %v187 = vadd.f32 %v185, %v186
  %v188 = vsel %vm82, %v70, 0.0
  %v189 = vadd.f32 %v187, %v188
  %v190 = vsel %vm82, %v71, 0.0
  %v191 = vadd.f32 %v189, %v190
  %v192 = vsel %vm82, %v72, 0.0
  %v193 = vadd.f32 %v191, %v192
  %v194 = vsel %vm82, %v73, 0.0
  %v195 = vadd.f32 %v193, %v194
  %v196 = vsel %vm82, %v74, 0.0
  %v197 = vadd.f32 %v195, %v196
  %v198 = vsel %vm82, %v75, 0.0
  %v199 = vadd.f32 %v197, %v198
  %v200 = vsel %vm82, %v76, 0.0
  %v201 = vadd.f32 %v199, %v200
  %v202 = vsel %vm82, %v77, 0.0
  %v203 = vadd.f32 %v201, %v202
  %v204 = vsel %vm82, %v78, 0.0
  %v205 = vadd.f32 %v203, %v204
  %v206 = vsel %vm82, %v79, 0.0
  %v207 = vadd.f32 %v205, %v206
  %v208 = vsel %vm82, %v80, 0.0
  %v209 = vadd.f32 %v207, %v208
  %v210 = vrot.slane %v209, 4
  %v211 = vadd.f32 %v209, %v210
  %v212 = vrot.slane %v211, 2
  %v213 = vadd.f32 %v211, %v212
  %v214 = vrot.slane %v213, 1
  %v215 = vadd.f32 %v213, %v214
  %v216 = vadd.f32 %v81, %v215
  %vm217 = vcmask 253952
  %218 = vst.msk [vmem:[%s1] sm:$0x1] %vm217, %v216
  %v219 = vld [vmem:[%s2] sm:$0x1]
  %v220 = vmul.f32 %v17, %v17
  %v221 = vmul.f32 %v18, %v18
  %v222 = vmul.f32 %v19, %v19
  %v223 = vmul.f32 %v20, %v20
  %v224 = vmul.f32 %v21, %v21
  %v225 = vmul.f32 %v22, %v22
  %v226 = vmul.f32 %v23, %v23
  %v227 = vmul.f32 %v24, %v24
  %v228 = vmul.f32 %v25, %v25
  %v229 = vmul.f32 %v26, %v26
  %v230 = vmul.f32 %v27, %v27
  %v231 = vmul.f32 %v28, %v28
  %v232 = vmul.f32 %v29, %v29
  %v233 = vmul.f32 %v30, %v30
  %v234 = vmul.f32 %v31, %v31
  %v235 = vmul.f32 %v32, %v32
  %v236 = vmul.f32 %v33, %v33
  %v237 = vmul.f32 %v34, %v34
  %v238 = vmul.f32 %v35, %v35
  %v239 = vmul.f32 %v36, %v36
  %v240 = vmul.f32 %v37, %v37
  %v241 = vmul.f32 %v38, %v38
  %v242 = vmul.f32 %v39, %v39
  %v243 = vmul.f32 %v40, %v40
  %v244 = vmul.f32 %v41, %v41
  %v245 = vmul.f32 %v42, %v42
  %v246 = vmul.f32 %v43, %v43
  %v247 = vmul.f32 %v44, %v44
  %v248 = vmul.f32 %v45, %v45
  %v249 = vmul.f32 %v46, %v46
  %v250 = vmul.f32 %v47, %v47
  %v251 = vmul.f32 %v48, %v48
  %v252 = vmul.f32 %v49, %v49
  %v253 = vmul.f32 %v50, %v50
  %v254 = vmul.f32 %v51, %v51
  %v255 = vmul.f32 %v52, %v52
  %v256 = vmul.f32 %v53, %v53
  %v257 = vmul.f32 %v54, %v54
  %v258 = vmul.f32 %v55, %v55
  %v259 = vmul.f32 %v56, %v56
  %v260 = vmul.f32 %v57, %v57
  %v261 = vmul.f32 %v58, %v58
  %v262 = vmul.f32 %v59, %v59
  %v263 = vmul.f32 %v60, %v60
  %v264 = vmul.f32 %v61, %v61
  %v265 = vmul.f32 %v62, %v62
  %v266 = vmul.f32 %v63, %v63
  %v267 = vmul.f32 %v64, %v64
  %v268 = vmul.f32 %v65, %v65
  %v269 = vmul.f32 %v66, %v66
  %v270 = vmul.f32 %v67, %v67
  %v271 = vmul.f32 %v68, %v68
  %v272 = vmul.f32 %v69, %v69
  %v273 = vmul.f32 %v70, %v70
  %v274 = vmul.f32 %v71, %v71
  %v275 = vmul.f32 %v72, %v72
  %v276 = vmul.f32 %v73, %v73
  %v277 = vmul.f32 %v74, %v74
  %v278 = vmul.f32 %v75, %v75
  %v279 = vmul.f32 %v76, %v76
  %v280 = vmul.f32 %v77, %v77
  %v281 = vmul.f32 %v78, %v78
  %v282 = vmul.f32 %v79, %v79
  %v283 = vmul.f32 %v80, %v80
  %v284 = vsel %vm82, %v220, 0.0
  %v285 = vsel %vm82, %v221, 0.0
  %v286 = vadd.f32 %v284, %v285
  %v287 = vsel %vm82, %v222, 0.0
  %v288 = vadd.f32 %v286, %v287
  %v289 = vsel %vm82, %v223, 0.0
  %v290 = vadd.f32 %v288, %v289
  %v291 = vsel %vm82, %v224, 0.0
  %v292 = vadd.f32 %v290, %v291
  %v293 = vsel %vm82, %v225, 0.0
  %v294 = vadd.f32 %v292, %v293
  %v295 = vsel %vm82, %v226, 0.0
  %v296 = vadd.f32 %v294, %v295
  %v297 = vsel %vm82, %v227, 0.0
  %v298 = vadd.f32 %v296, %v297
  %v299 = vsel %vm82, %v228, 0.0
  %v300 = vadd.f32 %v298, %v299
  %v301 = vsel %vm82, %v229, 0.0
  %v302 = vadd.f32 %v300, %v301
  %v303 = vsel %vm82, %v230, 0.0
  %v304 = vadd.f32 %v302, %v303
  %v305 = vsel %vm82, %v231, 0.0
  %v306 = vadd.f32 %v304, %v305
  %v307 = vsel %vm82, %v232, 0.0
  %v308 = vadd.f32 %v306, %v307
  %v309 = vsel %vm82, %v233, 0.0
  %v310 = vadd.f32 %v308, %v309
  %v311 = vsel %vm82, %v234, 0.0
  %v312 = vadd.f32 %v310, %v311
  %v313 = vsel %vm82, %v235, 0.0
  %v314 = vadd.f32 %v312, %v313
  %v315 = vsel %vm82, %v236, 0.0
  %v316 = vadd.f32 %v314, %v315
  %v317 = vsel %vm82, %v237, 0.0
  %v318 = vadd.f32 %v316, %v317
  %v319 = vsel %vm82, %v238, 0.0
  %v320 = vadd.f32 %v318, %v319
  %v321 = vsel %vm82, %v239, 0.0
  %v322 = vadd.f32 %v320, %v321
  %v323 = vsel %vm82, %v240, 0.0
  %v324 = vadd.f32 %v322, %v323
  %v325 = vsel %vm82, %v241, 0.0
  %v326 = vadd.f32 %v324, %v325
  %v327 = vsel %vm82, %v242, 0.0
  %v328 = vadd.f32 %v326, %v327
  %v329 = vsel %vm82, %v243, 0.0
  %v330 = vadd.f32 %v328, %v329
  %v331 = vsel %vm82, %v244, 0.0
  %v332 = vadd.f32 %v330, %v331
  %v333 = vsel %vm82, %v245, 0.0
  %v334 = vadd.f32 %v332, %v333
  %v335 = vsel %vm82, %v246, 0.0
  %v336 = vadd.f32 %v334, %v335
  %v337 = vsel %vm82, %v247, 0.0
  %v338 = vadd.f32 %v336, %v337
  %v339 = vsel %vm82, %v248, 0.0
  %v340 = vadd.f32 %v338, %v339
  %v341 = vsel %vm82, %v249, 0.0
  %v342 = vadd.f32 %v340, %v341
  %v343 = vsel %vm82, %v250, 0.0
  %v344 = vadd.f32 %v342, %v343
  %v345 = vsel %vm82, %v251, 0.0
  %v346 = vadd.f32 %v344, %v345
  %v347 = vsel %vm82, %v252, 0.0
  %v348 = vadd.f32 %v346, %v347
  %v349 = vsel %vm82, %v253, 0.0
  %v350 = vadd.f32 %v348, %v349
  %v351 = vsel %vm82, %v254, 0.0
  %v352 = vadd.f32 %v350, %v351
  %v353 = vsel %vm82, %v255, 0.0
  %v354 = vadd.f32 %v352, %v353
  %v355 = vsel %vm82, %v256, 0.0
  %v356 = vadd.f32 %v354, %v355
  %v357 = vsel %vm82, %v257, 0.0
  %v358 = vadd.f32 %v356, %v357
  %v359 = vsel %vm82, %v258, 0.0
  %v360 = vadd.f32 %v358, %v359
  %v361 = vsel %vm82, %v259, 0.0
  %v362 = vadd.f32 %v360, %v361
  %v363 = vsel %vm82, %v260, 0.0
  %v364 = vadd.f32 %v362, %v363
  %v365 = vsel %vm82, %v261, 0.0
  %v366 = vadd.f32 %v364, %v365
  %v367 = vsel %vm82, %v262, 0.0
  %v368 = vadd.f32 %v366, %v367
  %v369 = vsel %vm82, %v263, 0.0
  %v370 = vadd.f32 %v368, %v369
  %v371 = vsel %vm82, %v264, 0.0
  %v372 = vadd.f32 %v370, %v371
  %v373 = vsel %vm82, %v265, 0.0
  %v374 = vadd.f32 %v372, %v373
  %v375 = vsel %vm82, %v266, 0.0
  %v376 = vadd.f32 %v374, %v375
  %v377 = vsel %vm82, %v267, 0.0
  %v378 = vadd.f32 %v376, %v377
  %v379 = vsel %vm82, %v268, 0.0
  %v380 = vadd.f32 %v378, %v379
  %v381 = vsel %vm82, %v269, 0.0
  %v382 = vadd.f32 %v380, %v381
  %v383 = vsel %vm82, %v270, 0.0
  %v384 = vadd.f32 %v382, %v383
  %v385 = vsel %vm82, %v271, 0.0
  %v386 = vadd.f32 %v384, %v385
  %v387 = vsel %vm82, %v272, 0.0
  %v388 = vadd.f32 %v386, %v387
  %v389 = vsel %vm82, %v273, 0.0
  %v390 = vadd.f32 %v388, %v389
  %v391 = vsel %vm82, %v274, 0.0
  %v392 = vadd.f32 %v390, %v391
  %v393 = vsel %vm82, %v275, 0.0
  %v394 = vadd.f32 %v392, %v393
  %v395 = vsel %vm82, %v276, 0.0
  %v396 = vadd.f32 %v394, %v395
  %v397 = vsel %vm82, %v277, 0.0
  %v398 = vadd.f32 %v396, %v397
  %v399 = vsel %vm82, %v278, 0.0
  %v400 = vadd.f32 %v398, %v399
  %v401 = vsel %vm82, %v279, 0.0
  %v402 = vadd.f32 %v400, %v401
  %v403 = vsel %vm82, %v280, 0.0
  %v404 = vadd.f32 %v402, %v403
  %v405 = vsel %vm82, %v281, 0.0
  %v406 = vadd.f32 %v404, %v405
  %v407 = vsel %vm82, %v282, 0.0
  %v408 = vadd.f32 %v406, %v407
  %v409 = vsel %vm82, %v283, 0.0
  %v410 = vadd.f32 %v408, %v409
  %v411 = vrot.slane %v410, 4
  %v412 = vadd.f32 %v410, %v411
  %v413 = vrot.slane %v412, 2
  %v414 = vadd.f32 %v412, %v413
  %v415 = vrot.slane %v414, 1
  %v416 = vadd.f32 %v414, %v415
  %v417 = vadd.f32 %v219, %v416
  %418 = vst.msk [vmem:[%s2] sm:$0x1] %vm217, %v417
  // Predicated region
  $region10: #{deform_layer_forward.12} parent=0 // pred_check
    _
  $region11: #{deform_layer_forward.12} parent=0 // pred_check_branch
    %420 = sbr.rel (0) target = $region13
  $region12: #{deform_layer_forward.12} parent=0 // pred_region
    _
  $region13: #{deform_layer_forward.12} parent=0 // pred_fallthru
    _
  // Predicated region
  $region14: #{deform_layer_forward.12} parent=0 // pred_check
    _
  $region15: #{deform_layer_forward.12} parent=0 // pred_check_branch
    %422 = sbr.rel (0) target = $region17
  $region16: #{deform_layer_forward.12} parent=0 // pred_region
    _
  $region17: #{deform_layer_forward.12} parent=0 // pred_fallthru
    _
  // Predicated region
  $region18: #{deform_layer_forward.12} parent=0 // pred_check
    _
  $region19: #{deform_layer_forward.12} parent=0 // pred_check_branch
    %424 = sbr.rel (0) target = $region21
  $region20: #{deform_layer_forward.12} parent=0 // pred_region
    _
  $region21: #{deform_layer_forward.12} parent=0 // pred_fallthru
    _
  // Predicated region
  $region22: #{deform_layer_forward.12} parent=0 // pred_check
    _
  $region23: #{deform_layer_forward.12} parent=0 // pred_check_branch
    %426 = sbr.rel (0) target = $region25
  $region24: #{deform_layer_forward.12} parent=0 // pred_region
    _
  $region25: #{deform_layer_forward.12} parent=0 // pred_fallthru
    _

// kernel: deform_layer_forward.11
$region0: #{deform_layer_forward.11}
  #allocation0 [shape = 'u32[]', space=smem, size = 0x4, offset = 0x4, fixed_abs, tag = 'smem constant byte address 0x4 - core index']
  #allocation1 [shape = 'u32[144,128]{1,0:T(1,128)}', space=vmem, size = 0x12000, scoped, tag = 'internal scratch']
  %s0 = inlined_call_operand.vmem [shape: bf16[512,72], index: 0, kind: input, shape index: {}]
  %s1 = inlined_call_operand.vmem [shape: bf16[72,32], index: 1, kind: input, shape index: {}]
  %s2 = inlined_call_operand.vmem [shape: f32[1,32], index: 2, kind: input, shape index: {}]
  %s3 = inlined_call_operand.vmem [shape: f32[512,32], index: 3, kind: output, shape index: {}]
  %s4 = sld [smem:[#allocation0]]
  $region22: #{deform_layer_forward.11} parent=0
    _
  %s6 = ssub.s32 1, %s4
  %s7 = scalar_select 0, %s6, %s4
  // Predicated region
  $region2: #{deform_layer_forward.11} parent=0 // pred_check
    _
  $region3: #{deform_layer_forward.11} parent=0 // pred_check_branch
    %9 = sbr.rel (0) target = $region5
  $region4: #{deform_layer_forward.11} parent=0 // pred_region
    _
  $region5: #{deform_layer_forward.11} parent=0 // pred_fallthru
    _
  // Predicated region
  $region6: #{deform_layer_forward.11} parent=0 // pred_check
    _
  $region7: #{deform_layer_forward.11} parent=0 // pred_check_branch
    %11 = sbr.rel (0) target = $region9
  $region8: #{deform_layer_forward.11} parent=0 // pred_region
    _
  $region9: #{deform_layer_forward.11} parent=0 // pred_fallthru
    _
  // Predicated region
  $region10: #{deform_layer_forward.11} parent=0 // pred_check
    _
  $region11: #{deform_layer_forward.11} parent=0 // pred_check_branch
    %13 = sbr.rel (0) target = $region13
  $region12: #{deform_layer_forward.11} parent=0 // pred_region
    _
  $region13: #{deform_layer_forward.11} parent=0 // pred_fallthru
    _
  %v15 = vld [vmem:[%s0] sm:$0xf]
  %v16 = vld [vmem:[%s0 + $0x4] sm:$0xf]
  %v17 = vld [vmem:[%s0 + $0x8] sm:$0xf]
  %v18 = vld [vmem:[%s0 + $0xc] sm:$0xf]
  %v19 = vld [vmem:[%s0 + $0x10] sm:$0xf]
  %v20 = vld [vmem:[%s0 + $0x14] sm:$0xf]
  %v21 = vld [vmem:[%s0 + $0x18] sm:$0xf]
  %v22 = vld [vmem:[%s0 + $0x1c] sm:$0xf]
  %v23 = vld [vmem:[%s0 + $0x20] sm:$0xf]
  %v24 = vld [vmem:[%s0 + $0x24] sm:$0xf]
  %v25 = vld [vmem:[%s0 + $0x28] sm:$0xf]
  %v26 = vld [vmem:[%s0 + $0x2c] sm:$0xf]
  %v27 = vld [vmem:[%s0 + $0x30] sm:$0xf]
  %v28 = vld [vmem:[%s0 + $0x34] sm:$0xf]
  %v29 = vld [vmem:[%s0 + $0x38] sm:$0xf]
  %v30 = vld [vmem:[%s0 + $0x3c] sm:$0xf]
  %v31 = vld [vmem:[%s0 + $0x40] sm:$0xf]
  %v32 = vld [vmem:[%s0 + $0x44] sm:$0xf]
  %v33 = vld [vmem:[%s0 + $0x48] sm:$0xf]
  %v34 = vld [vmem:[%s0 + $0x4c] sm:$0xf]
  %v35 = vld [vmem:[%s0 + $0x50] sm:$0xf]
  %v36 = vld [vmem:[%s0 + $0x54] sm:$0xf]
  %v37 = vld [vmem:[%s0 + $0x58] sm:$0xf]
  %v38 = vld [vmem:[%s0 + $0x5c] sm:$0xf]
  %v39 = vld [vmem:[%s0 + $0x60] sm:$0xf]
  %v40 = vld [vmem:[%s0 + $0x64] sm:$0xf]
  %v41 = vld [vmem:[%s0 + $0x68] sm:$0xf]
  %v42 = vld [vmem:[%s0 + $0x6c] sm:$0xf]
  %v43 = vld [vmem:[%s0 + $0x70] sm:$0xf]
  %v44 = vld [vmem:[%s0 + $0x74] sm:$0xf]
  %v45 = vld [vmem:[%s0 + $0x78] sm:$0xf]
  %v46 = vld [vmem:[%s0 + $0x7c] sm:$0xf]
  %v47 = vld [vmem:[%s0 + $0x80] sm:$0xf]
  %v48 = vld [vmem:[%s0 + $0x84] sm:$0xf]
  %v49 = vld [vmem:[%s0 + $0x88] sm:$0xf]
  %v50 = vld [vmem:[%s0 + $0x8c] sm:$0xf]
  %v51 = vld [vmem:[%s0 + $0x90] sm:$0xf]
  %v52 = vld [vmem:[%s0 + $0x94] sm:$0xf]
  %v53 = vld [vmem:[%s0 + $0x98] sm:$0xf]
  %v54 = vld [vmem:[%s0 + $0x9c] sm:$0xf]
  %v55 = vld [vmem:[%s0 + $0xa0] sm:$0xf]
  %v56 = vld [vmem:[%s0 + $0xa4] sm:$0xf]
  %v57 = vld [vmem:[%s0 + $0xa8] sm:$0xf]
  %v58 = vld [vmem:[%s0 + $0xac] sm:$0xf]
  %v59 = vld [vmem:[%s0 + $0xb0] sm:$0xf]
  %v60 = vld [vmem:[%s0 + $0xb4] sm:$0xf]
  %v61 = vld [vmem:[%s0 + $0xb8] sm:$0xf]
  %v62 = vld [vmem:[%s0 + $0xbc] sm:$0xf]
  %v63 = vld [vmem:[%s0 + $0xc0] sm:$0xf]
  %v64 = vld [vmem:[%s0 + $0xc4] sm:$0xf]
  %v65 = vld [vmem:[%s0 + $0xc8] sm:$0xf]
  %v66 = vld [vmem:[%s0 + $0xcc] sm:$0xf]
  %v67 = vld [vmem:[%s0 + $0xd0] sm:$0xf]
  %v68 = vld [vmem:[%s0 + $0xd4] sm:$0xf]
  %v69 = vld [vmem:[%s0 + $0xd8] sm:$0xf]
  %v70 = vld [vmem:[%s0 + $0xdc] sm:$0xf]
  %v71 = vld [vmem:[%s0 + $0xe0] sm:$0xf]
  %v72 = vld [vmem:[%s0 + $0xe4] sm:$0xf]
  %v73 = vld [vmem:[%s0 + $0xe8] sm:$0xf]
  %v74 = vld [vmem:[%s0 + $0xec] sm:$0xf]
  %v75 = vld [vmem:[%s0 + $0xf0] sm:$0xf]
  %v76 = vld [vmem:[%s0 + $0xf4] sm:$0xf]
  %v77 = vld [vmem:[%s0 + $0xf8] sm:$0xf]
  %v78 = vld [vmem:[%s0 + $0xfc] sm:$0xf]
  %v79 = vld [vmem:[%s1] sm:$0xf]
  %v80 = vld [vmem:[%s1 + $0x4] sm:$0xf]
  %v81 = vld [vmem:[%s1 + $0x8] sm:$0xf]
  %v82 = vld [vmem:[%s1 + $0xc] sm:$0xf]
  %v83 = vld [vmem:[%s1 + $0x10] sm:$0xf]
  %v84 = vld [vmem:[%s1 + $0x14] sm:$0xf]
  %v85 = vld [vmem:[%s1 + $0x18] sm:$0xf]
  %v86 = vld [vmem:[%s1 + $0x1c] sm:$0xf]
  %v87 = vld [vmem:[%s1 + $0x20] sm:$0xf]
  %v88 = vld [vmem:[%s2] sm:$0x1]
  %v90 = vlaneseq
  %v91 = vshrl.u32 %v90, 7
  %v92 = vsub.s32 0, %v91
  %v93 = vrot.slane %v88, %v92
  %v159 = vunpack.c.l.b16 %v15
  %v160 = vunpack.c.l.b16 %v16
  %v161 = vunpack.c.l.b16 %v17
  %v162 = vunpack.c.l.b16 %v18
  %v163 = vunpack.c.l.b16 %v19
  %v164 = vunpack.c.l.b16 %v20
  %v165 = vunpack.c.l.b16 %v21
  %v166 = vunpack.c.l.b16 %v22
  %v167 = vunpack.c.l.b16 %v23
  %v168 = vunpack.c.l.b16 %v24
  %v169 = vunpack.c.l.b16 %v25
  %v170 = vunpack.c.l.b16 %v26
  %v171 = vunpack.c.l.b16 %v27
  %v172 = vunpack.c.l.b16 %v28
  %v173 = vunpack.c.l.b16 %v29
  %v174 = vunpack.c.l.b16 %v30
  %v175 = vunpack.c.l.b16 %v31
  %v176 = vunpack.c.l.b16 %v32
  %v177 = vunpack.c.l.b16 %v33
  %v178 = vunpack.c.l.b16 %v34
  %v179 = vunpack.c.l.b16 %v35
  %v180 = vunpack.c.l.b16 %v36
  %v181 = vunpack.c.l.b16 %v37
  %v182 = vunpack.c.l.b16 %v38
  %v183 = vunpack.c.l.b16 %v39
  %v184 = vunpack.c.l.b16 %v40
  %v185 = vunpack.c.l.b16 %v41
  %v186 = vunpack.c.l.b16 %v42
  %v187 = vunpack.c.l.b16 %v43
  %v188 = vunpack.c.l.b16 %v44
  %v189 = vunpack.c.l.b16 %v45
  %v190 = vunpack.c.l.b16 %v46
  %v191 = vunpack.c.l.b16 %v47
  %v192 = vunpack.c.l.b16 %v48
  %v193 = vunpack.c.l.b16 %v49
  %v194 = vunpack.c.l.b16 %v50
  %v195 = vunpack.c.l.b16 %v51
  %v196 = vunpack.c.l.b16 %v52
  %v197 = vunpack.c.l.b16 %v53
  %v198 = vunpack.c.l.b16 %v54
  %v199 = vunpack.c.l.b16 %v55
  %v200 = vunpack.c.l.b16 %v56
  %v201 = vunpack.c.l.b16 %v57
  %v202 = vunpack.c.l.b16 %v58
  %v203 = vunpack.c.l.b16 %v59
  %v204 = vunpack.c.l.b16 %v60
  %v205 = vunpack.c.l.b16 %v61
  %v206 = vunpack.c.l.b16 %v62
  %v207 = vunpack.c.l.b16 %v63
  %v208 = vunpack.c.l.b16 %v64
  %v209 = vunpack.c.l.b16 %v65
  %v210 = vunpack.c.l.b16 %v66
  %v211 = vunpack.c.l.b16 %v67
  %v212 = vunpack.c.l.b16 %v68
  %v213 = vunpack.c.l.b16 %v69
  %v214 = vunpack.c.l.b16 %v70
  %v215 = vunpack.c.l.b16 %v71
  %v216 = vunpack.c.l.b16 %v72
  %v217 = vunpack.c.l.b16 %v73
  %v218 = vunpack.c.l.b16 %v74
  %v219 = vunpack.c.l.b16 %v75
  %v220 = vunpack.c.l.b16 %v76
  %v221 = vunpack.c.l.b16 %v77
  %v222 = vunpack.c.l.b16 %v78
  %v223 = vpack.c.b16 %v160, %v159
  %v224 = vpack.c.b16 %v162, %v161
  %v225 = vpack.c.b16 %v164, %v163
  %v226 = vpack.c.b16 %v166, %v165
  %v227 = vpack.c.b16 %v168, %v167
  %v228 = vpack.c.b16 %v170, %v169
  %v229 = vpack.c.b16 %v172, %v171
  %v230 = vpack.c.b16 %v174, %v173
  %v231 = vpack.c.b16 %v176, %v175
  %v232 = vpack.c.b16 %v178, %v177
  %v233 = vpack.c.b16 %v180, %v179
  %v234 = vpack.c.b16 %v182, %v181
  %v235 = vpack.c.b16 %v184, %v183
  %v236 = vpack.c.b16 %v186, %v185
  %v237 = vpack.c.b16 %v188, %v187
  %v238 = vpack.c.b16 %v190, %v189
  %v239 = vpack.c.b16 %v192, %v191
  %v240 = vpack.c.b16 %v194, %v193
  %v241 = vpack.c.b16 %v196, %v195
  %v242 = vpack.c.b16 %v198, %v197
  %v243 = vpack.c.b16 %v200, %v199
  %v244 = vpack.c.b16 %v202, %v201
  %v245 = vpack.c.b16 %v204, %v203
  %v246 = vpack.c.b16 %v206, %v205
  %v247 = vpack.c.b16 %v208, %v207
  %v248 = vpack.c.b16 %v210, %v209
  %v249 = vpack.c.b16 %v212, %v211
  %v250 = vpack.c.b16 %v214, %v213
  %v251 = vpack.c.b16 %v216, %v215
  %v252 = vpack.c.b16 %v218, %v217
  %v253 = vpack.c.b16 %v220, %v219
  %v254 = vpack.c.b16 %v222, %v221
  %v264 = vunpack.c.l.b16 %v79
  %v265 = vunpack.c.l.b16 %v80
  %v266 = vunpack.c.l.b16 %v81
  %v267 = vunpack.c.l.b16 %v82
  %v268 = vunpack.c.l.b16 %v83
  %v269 = vunpack.c.l.b16 %v84
  %v270 = vunpack.c.l.b16 %v85
  %v271 = vunpack.c.l.b16 %v86
  %v272 = vunpack.c.l.b16 %v87
  %v273 = vpack.c.b16 %v265, %v264
  %v274 = vpack.c.b16 %v267, %v266
  %v275 = vpack.c.b16 %v269, %v268
  %v276 = vpack.c.b16 %v271, %v270
  %v277 = vpack.c.b16 %v272, %v272
  %vm282 = vcmask 588800
  %v284 = vsel %vm282, %v223, 0
  %v287 = vsel %vm282, %v224, 0
  %v290 = vsel %vm282, %v225, 0
  %v293 = vsel %vm282, %v226, 0
  %v296 = vsel %vm282, %v227, 0
  %v299 = vsel %vm282, %v228, 0
  %v302 = vsel %vm282, %v229, 0
  %v305 = vsel %vm282, %v230, 0
  %v308 = vsel %vm282, %v231, 0
  %v311 = vsel %vm282, %v232, 0
  %v314 = vsel %vm282, %v233, 0
  %v317 = vsel %vm282, %v234, 0
  %v320 = vsel %vm282, %v235, 0
  %v323 = vsel %vm282, %v236, 0
  %v326 = vsel %vm282, %v237, 0
  %v329 = vsel %vm282, %v238, 0
  %v332 = vsel %vm282, %v239, 0
  %v335 = vsel %vm282, %v240, 0
  %v338 = vsel %vm282, %v241, 0
  %v341 = vsel %vm282, %v242, 0
  %v344 = vsel %vm282, %v243, 0
  %v347 = vsel %vm282, %v244, 0
  %v350 = vsel %vm282, %v245, 0
  %v353 = vsel %vm282, %v246, 0
  %v356 = vsel %vm282, %v247, 0
  %v359 = vsel %vm282, %v248, 0
  %v362 = vsel %vm282, %v249, 0
  %v365 = vsel %vm282, %v250, 0
  %v368 = vsel %vm282, %v251, 0
  %v371 = vsel %vm282, %v252, 0
  %v374 = vsel %vm282, %v253, 0
  %v377 = vsel %vm282, %v254, 0
  %vm379 = vcmask 1043456
  %v381 = vsel %vm379, %v277, 0
  %383 = vmatprep.subr.bf16.mxu0 0
  %384 = vmatpush1.bf16.msra.mxu0 0
  %385 = vmatprep.subr.bf16.mxu0 0
  %386 = vmatpush1.bf16.msra.mxu0 0
  %387 = vmatprep.subr.bf16.mxu0 0
  %388 = vmatpush1.bf16.msra.mxu0 0
  %389 = vmatprep.subr.bf16.mxu0 0
  %390 = vmatpush1.bf16.msra.mxu0 %v381
  %391 = vmatprep.subr.bf16.mxu0 0
  %392 = vmatpush1.bf16.msra.mxu0 %v276
  %393 = vmatprep.subr.bf16.mxu0 0
  %394 = vmatpush1.bf16.msra.mxu0 %v275
  %395 = vmatprep.subr.bf16.mxu0 0
  %396 = vmatpush1.bf16.msra.mxu0 %v274
  %397 = vmatprep.subr.bf16.mxu0 0
  %398 = vmatpush1.bf16.msra.mxu0 %v273
  %399 = vmatprep.subr.bf16.mxu0 0
  %400 = vmatpush2.bf16.msra.mxu0 0
  %401 = vmatprep.subr.bf16.mxu0 0
  %402 = vmatpush2.bf16.msra.mxu0 0
  %403 = vmatprep.subr.bf16.mxu0 0
  %404 = vmatpush2.bf16.msra.mxu0 0
  %405 = vmatprep.subr.bf16.mxu0 0
  %406 = vmatpush2.bf16.msra.mxu0 0
  %407 = vmatprep.subr.bf16.mxu0 0
  %408 = vmatpush2.bf16.msra.mxu0 0
  %409 = vmatprep.subr.bf16.mxu0 0
  %410 = vmatpush2.bf16.msra.mxu0 0
  %411 = vmatprep.subr.bf16.mxu0 0
  %412 = vmatpush2.bf16.msra.mxu0 0
  %413 = vmatprep.subr.bf16.mxu0 0
  %414 = vmatpush2.bf16.msra.mxu0 0
  %415 = vmatprep.mubr.bf16.mxu0 0
  %416 = vmatmul.mubr.bf16.gmra.mxu0 %v284
  %v417 = vpop.f32.mrf.mxu0
  %v418 = vadd.f32 %v93, %v417
  %v419 = vpop.f32.mrf.mxu0
  %v420 = vpop.f32.mrf.mxu0
  %v421 = vadd.f32 %v93, %v420
  %v422 = vpop.f32.mrf.mxu0
  %423 = vmatprep.mubr.bf16.mxu0 0
  %424 = vmatmul.mubr.bf16.gmra.mxu0 %v287
  %v425 = vpop.f32.mrf.mxu0
  %v426 = vadd.f32 %v93, %v425
  %v427 = vpop.f32.mrf.mxu0
  %v428 = vpop.f32.mrf.mxu0
  %v429 = vadd.f32 %v93, %v428
  %v430 = vpop.f32.mrf.mxu0
  %431 = vmatprep.mubr.bf16.mxu0 0
  %432 = vmatmul.mubr.bf16.gmra.mxu0 %v290
  %v433 = vpop.f32.mrf.mxu0
  %v434 = vadd.f32 %v93, %v433
  %v435 = vpop.f32.mrf.mxu0
  %v436 = vpop.f32.mrf.mxu0
  %v437 = vadd.f32 %v93, %v436
  %v438 = vpop.f32.mrf.mxu0
  %439 = vmatprep.mubr.bf16.mxu0 0
  %440 = vmatmul.mubr.bf16.gmra.mxu0 %v293
  %v441 = vpop.f32.mrf.mxu0
  %v442 = vadd.f32 %v93, %v441
  %v443 = vpop.f32.mrf.mxu0
  %v444 = vpop.f32.mrf.mxu0
  %v445 = vadd.f32 %v93, %v444
  %v446 = vpop.f32.mrf.mxu0
  %447 = vmatprep.mubr.bf16.mxu0 0
  %448 = vmatmul.mubr.bf16.gmra.mxu0 %v296
  %v449 = vpop.f32.mrf.mxu0
  %v450 = vadd.f32 %v93, %v449
  %v451 = vpop.f32.mrf.mxu0
  %v452 = vpop.f32.mrf.mxu0
  %v453 = vadd.f32 %v93, %v452
  %v454 = vpop.f32.mrf.mxu0
  %455 = vmatprep.mubr.bf16.mxu0 0
  %456 = vmatmul.mubr.bf16.gmra.mxu0 %v299
  %v457 = vpop.f32.mrf.mxu0
  %v458 = vadd.f32 %v93, %v457
  %v459 = vpop.f32.mrf.mxu0
  %v460 = vpop.f32.mrf.mxu0
  %v461 = vadd.f32 %v93, %v460
  %v462 = vpop.f32.mrf.mxu0
  %463 = vmatprep.mubr.bf16.mxu0 0
  %464 = vmatmul.mubr.bf16.gmra.mxu0 %v302
  %v465 = vpop.f32.mrf.mxu0
  %v466 = vadd.f32 %v93, %v465
  %v467 = vpop.f32.mrf.mxu0
  %v468 = vpop.f32.mrf.mxu0
  %v469 = vadd.f32 %v93, %v468
  %v470 = vpop.f32.mrf.mxu0
  %471 = vmatprep.mubr.bf16.mxu0 0
  %472 = vmatmul.mubr.bf16.gmra.mxu0 %v305
  %v473 = vpop.f32.mrf.mxu0
  %v474 = vadd.f32 %v93, %v473
  %v475 = vpop.f32.mrf.mxu0
  %v476 = vpop.f32.mrf.mxu0
  %v477 = vadd.f32 %v93, %v476
  %v478 = vpop.f32.mrf.mxu0
  %479 = vmatprep.mubr.bf16.mxu0 0
  %480 = vmatmul.mubr.bf16.gmra.mxu0 %v308
  %v481 = vpop.f32.mrf.mxu0
  %v482 = vadd.f32 %v93, %v481
  %v483 = vpop.f32.mrf.mxu0
  %v484 = vpop.f32.mrf.mxu0
  %v485 = vadd.f32 %v93, %v484
  %v486 = vpop.f32.mrf.mxu0
  %487 = vmatprep.mubr.bf16.mxu0 0
  %488 = vmatmul.mubr.bf16.gmra.mxu0 %v311
  %v489 = vpop.f32.mrf.mxu0
  %v490 = vadd.f32 %v93, %v489
  %v491 = vpop.f32.mrf.mxu0
  %v492 = vpop.f32.mrf.mxu0
  %v493 = vadd.f32 %v93, %v492
  %v494 = vpop.f32.mrf.mxu0
  %495 = vmatprep.mubr.bf16.mxu0 0
  %496 = vmatmul.mubr.bf16.gmra.mxu0 %v314
  %v497 = vpop.f32.mrf.mxu0
  %v498 = vadd.f32 %v93, %v497
  %v499 = vpop.f32.mrf.mxu0
  %v500 = vpop.f32.mrf.mxu0
  %v501 = vadd.f32 %v93, %v500
  %v502 = vpop.f32.mrf.mxu0
  %503 = vmatprep.mubr.bf16.mxu0 0
  %504 = vmatmul.mubr.bf16.gmra.mxu0 %v317
  %v505 = vpop.f32.mrf.mxu0
  %v506 = vadd.f32 %v93, %v505
  %v507 = vpop.f32.mrf.mxu0
  %v508 = vpop.f32.mrf.mxu0
  %v509 = vadd.f32 %v93, %v508
  %v510 = vpop.f32.mrf.mxu0
  %511 = vmatprep.mubr.bf16.mxu0 0
  %512 = vmatmul.mubr.bf16.gmra.mxu0 %v320
  %v513 = vpop.f32.mrf.mxu0
  %v514 = vadd.f32 %v93, %v513
  %v515 = vpop.f32.mrf.mxu0
  %v516 = vpop.f32.mrf.mxu0
  %v517 = vadd.f32 %v93, %v516
  %v518 = vpop.f32.mrf.mxu0
  %519 = vmatprep.mubr.bf16.mxu0 0
  %520 = vmatmul.mubr.bf16.gmra.mxu0 %v323
  %v521 = vpop.f32.mrf.mxu0
  %v522 = vadd.f32 %v93, %v521
  %v523 = vpop.f32.mrf.mxu0
  %v524 = vpop.f32.mrf.mxu0
  %v525 = vadd.f32 %v93, %v524
  %v526 = vpop.f32.mrf.mxu0
  %527 = vmatprep.mubr.bf16.mxu0 0
  %528 = vmatmul.mubr.bf16.gmra.mxu0 %v326
  %v529 = vpop.f32.mrf.mxu0
  %v530 = vadd.f32 %v93, %v529
  %v531 = vpop.f32.mrf.mxu0
  %v532 = vpop.f32.mrf.mxu0
  %v533 = vadd.f32 %v93, %v532
  %v534 = vpop.f32.mrf.mxu0
  %535 = vmatprep.mubr.bf16.mxu0 0
  %536 = vmatmul.mubr.bf16.gmra.mxu0 %v329
  %v537 = vpop.f32.mrf.mxu0
  %v538 = vadd.f32 %v93, %v537
  %v539 = vpop.f32.mrf.mxu0
  %v540 = vpop.f32.mrf.mxu0
  %v541 = vadd.f32 %v93, %v540
  %v542 = vpop.f32.mrf.mxu0
  %543 = vmatprep.mubr.bf16.mxu0 0
  %544 = vmatmul.mubr.bf16.gmra.mxu0 %v332
  %v545 = vpop.f32.mrf.mxu0
  %v546 = vadd.f32 %v93, %v545
  %v547 = vpop.f32.mrf.mxu0
  %v548 = vpop.f32.mrf.mxu0
  %v549 = vadd.f32 %v93, %v548
  %v550 = vpop.f32.mrf.mxu0
  %551 = vmatprep.mubr.bf16.mxu0 0
  %552 = vmatmul.mubr.bf16.gmra.mxu0 %v335
  %v553 = vpop.f32.mrf.mxu0
  %v554 = vadd.f32 %v93, %v553
  %v555 = vpop.f32.mrf.mxu0
  %v556 = vpop.f32.mrf.mxu0
  %v557 = vadd.f32 %v93, %v556
  %v558 = vpop.f32.mrf.mxu0
  %559 = vmatprep.mubr.bf16.mxu0 0
  %560 = vmatmul.mubr.bf16.gmra.mxu0 %v338
  %v561 = vpop.f32.mrf.mxu0
  %v562 = vadd.f32 %v93, %v561
  %v563 = vpop.f32.mrf.mxu0
  %v564 = vpop.f32.mrf.mxu0
  %v565 = vadd.f32 %v93, %v564
  %v566 = vpop.f32.mrf.mxu0
  %567 = vmatprep.mubr.bf16.mxu0 0
  %568 = vmatmul.mubr.bf16.gmra.mxu0 %v341
  %v569 = vpop.f32.mrf.mxu0
  %v570 = vadd.f32 %v93, %v569
  %v571 = vpop.f32.mrf.mxu0
  %v572 = vpop.f32.mrf.mxu0
  %v573 = vadd.f32 %v93, %v572
  %v574 = vpop.f32.mrf.mxu0
  %575 = vmatprep.mubr.bf16.mxu0 0
  %576 = vmatmul.mubr.bf16.gmra.mxu0 %v344
  %v577 = vpop.f32.mrf.mxu0
  %v578 = vadd.f32 %v93, %v577
  %v579 = vpop.f32.mrf.mxu0
  %v580 = vpop.f32.mrf.mxu0
  %v581 = vadd.f32 %v93, %v580
  %v582 = vpop.f32.mrf.mxu0
  %583 = vmatprep.mubr.bf16.mxu0 0
  %584 = vmatmul.mubr.bf16.gmra.mxu0 %v347
  %v585 = vpop.f32.mrf.mxu0
  %v586 = vadd.f32 %v93, %v585
  %v587 = vpop.f32.mrf.mxu0
  %v588 = vpop.f32.mrf.mxu0
  %v589 = vadd.f32 %v93, %v588
  %v590 = vpop.f32.mrf.mxu0
  %591 = vmatprep.mubr.bf16.mxu0 0
  %592 = vmatmul.mubr.bf16.gmra.mxu0 %v350
  %v593 = vpop.f32.mrf.mxu0
  %v594 = vadd.f32 %v93, %v593
  %v595 = vpop.f32.mrf.mxu0
  %v596 = vpop.f32.mrf.mxu0
  %v597 = vadd.f32 %v93, %v596
  %v598 = vpop.f32.mrf.mxu0
  %599 = vmatprep.mubr.bf16.mxu0 0
  %600 = vmatmul.mubr.bf16.gmra.mxu0 %v353
  %v601 = vpop.f32.mrf.mxu0
  %v602 = vadd.f32 %v93, %v601
  %v603 = vpop.f32.mrf.mxu0
  %v604 = vpop.f32.mrf.mxu0
  %v605 = vadd.f32 %v93, %v604
  %v606 = vpop.f32.mrf.mxu0
  %607 = vmatprep.mubr.bf16.mxu0 0
  %608 = vmatmul.mubr.bf16.gmra.mxu0 %v356
  %v609 = vpop.f32.mrf.mxu0
  %v610 = vadd.f32 %v93, %v609
  %v611 = vpop.f32.mrf.mxu0
  %v612 = vpop.f32.mrf.mxu0
  %v613 = vadd.f32 %v93, %v612
  %v614 = vpop.f32.mrf.mxu0
  %615 = vmatprep.mubr.bf16.mxu0 0
  %616 = vmatmul.mubr.bf16.gmra.mxu0 %v359
  %v617 = vpop.f32.mrf.mxu0
  %v618 = vadd.f32 %v93, %v617
  %v619 = vpop.f32.mrf.mxu0
  %v620 = vpop.f32.mrf.mxu0
  %v621 = vadd.f32 %v93, %v620
  %v622 = vpop.f32.mrf.mxu0
  %623 = vmatprep.mubr.bf16.mxu0 0
  %624 = vmatmul.mubr.bf16.gmra.mxu0 %v362
  %v625 = vpop.f32.mrf.mxu0
  %v626 = vadd.f32 %v93, %v625
  %v627 = vpop.f32.mrf.mxu0
  %v628 = vpop.f32.mrf.mxu0
  %v629 = vadd.f32 %v93, %v628
  %v630 = vpop.f32.mrf.mxu0
  %631 = vmatprep.mubr.bf16.mxu0 0
  %632 = vmatmul.mubr.bf16.gmra.mxu0 %v365
  %v633 = vpop.f32.mrf.mxu0
  %v634 = vadd.f32 %v93, %v633
  %v635 = vpop.f32.mrf.mxu0
  %v636 = vpop.f32.mrf.mxu0
  %v637 = vadd.f32 %v93, %v636
  %v638 = vpop.f32.mrf.mxu0
  %639 = vmatprep.mubr.bf16.mxu0 0
  %640 = vmatmul.mubr.bf16.gmra.mxu0 %v368
  %v641 = vpop.f32.mrf.mxu0
  %v642 = vadd.f32 %v93, %v641
  %v643 = vpop.f32.mrf.mxu0
  %v644 = vpop.f32.mrf.mxu0
  %v645 = vadd.f32 %v93, %v644
  %v646 = vpop.f32.mrf.mxu0
  %647 = vmatprep.mubr.bf16.mxu0 0
  %648 = vmatmul.mubr.bf16.gmra.mxu0 %v371
  %v649 = vpop.f32.mrf.mxu0
  %v650 = vadd.f32 %v93, %v649
  %v651 = vpop.f32.mrf.mxu0
  %v652 = vpop.f32.mrf.mxu0
  %v653 = vadd.f32 %v93, %v652
  %v654 = vpop.f32.mrf.mxu0
  %655 = vmatprep.mubr.bf16.mxu0 0
  %656 = vmatmul.mubr.bf16.gmra.mxu0 %v374
  %v657 = vpop.f32.mrf.mxu0
  %v658 = vadd.f32 %v93, %v657
  %v659 = vpop.f32.mrf.mxu0
  %v660 = vpop.f32.mrf.mxu0
  %v661 = vadd.f32 %v93, %v660
  %v662 = vpop.f32.mrf.mxu0
  %663 = vmatprep.mubr.bf16.mxu0 0
  %664 = vmatmul.mubr.bf16.gmra.mxu0 %v377
  %v665 = vpop.f32.mrf.mxu0
  %v666 = vadd.f32 %v93, %v665
  %v667 = vpop.f32.mrf.mxu0
  %v668 = vpop.f32.mrf.mxu0
  %v669 = vadd.f32 %v93, %v668
  %v670 = vpop.f32.mrf.mxu0
  %671 = vdwg.mxu0
  %vm672 = vcmask 261120
  %673 = vst.msk [vmem:[%s3] sm:$0xff] %vm672, %v418
  %674 = vst.msk [vmem:[%s3 + $0x8] sm:$0xff] %vm672, %v421
  %675 = vst.msk [vmem:[%s3 + $0x10] sm:$0xff] %vm672, %v426
  %676 = vst.msk [vmem:[%s3 + $0x18] sm:$0xff] %vm672, %v429
  %677 = vst.msk [vmem:[%s3 + $0x20] sm:$0xff] %vm672, %v434
  %678 = vst.msk [vmem:[%s3 + $0x28] sm:$0xff] %vm672, %v437
  %679 = vst.msk [vmem:[%s3 + $0x30] sm:$0xff] %vm672, %v442
  %680 = vst.msk [vmem:[%s3 + $0x38] sm:$0xff] %vm672, %v445
  %681 = vst.msk [vmem:[%s3 + $0x40] sm:$0xff] %vm672, %v450
  %682 = vst.msk [vmem:[%s3 + $0x48] sm:$0xff] %vm672, %v453
  %683 = vst.msk [vmem:[%s3 + $0x50] sm:$0xff] %vm672, %v458
  %684 = vst.msk [vmem:[%s3 + $0x58] sm:$0xff] %vm672, %v461
  %685 = vst.msk [vmem:[%s3 + $0x60] sm:$0xff] %vm672, %v466
  %686 = vst.msk [vmem:[%s3 + $0x68] sm:$0xff] %vm672, %v469
  %687 = vst.msk [vmem:[%s3 + $0x70] sm:$0xff] %vm672, %v474
  %688 = vst.msk [vmem:[%s3 + $0x78] sm:$0xff] %vm672, %v477
  %689 = vst.msk [vmem:[%s3 + $0x80] sm:$0xff] %vm672, %v482
  %690 = vst.msk [vmem:[%s3 + $0x88] sm:$0xff] %vm672, %v485
  %691 = vst.msk [vmem:[%s3 + $0x90] sm:$0xff] %vm672, %v490
  %692 = vst.msk [vmem:[%s3 + $0x98] sm:$0xff] %vm672, %v493
  %693 = vst.msk [vmem:[%s3 + $0xa0] sm:$0xff] %vm672, %v498
  %694 = vst.msk [vmem:[%s3 + $0xa8] sm:$0xff] %vm672, %v501
  %695 = vst.msk [vmem:[%s3 + $0xb0] sm:$0xff] %vm672, %v506
  %696 = vst.msk [vmem:[%s3 + $0xb8] sm:$0xff] %vm672, %v509
  %697 = vst.msk [vmem:[%s3 + $0xc0] sm:$0xff] %vm672, %v514
  %698 = vst.msk [vmem:[%s3 + $0xc8] sm:$0xff] %vm672, %v517
  %699 = vst.msk [vmem:[%s3 + $0xd0] sm:$0xff] %vm672, %v522
  %700 = vst.msk [vmem:[%s3 + $0xd8] sm:$0xff] %vm672, %v525
  %701 = vst.msk [vmem:[%s3 + $0xe0] sm:$0xff] %vm672, %v530
  %702 = vst.msk [vmem:[%s3 + $0xe8] sm:$0xff] %vm672, %v533
  %703 = vst.msk [vmem:[%s3 + $0xf0] sm:$0xff] %vm672, %v538
  %704 = vst.msk [vmem:[%s3 + $0xf8] sm:$0xff] %vm672, %v541
  %705 = vst.msk [vmem:[%s3 + $0x100] sm:$0xff] %vm672, %v546
  %706 = vst.msk [vmem:[%s3 + $0x108] sm:$0xff] %vm672, %v549
  %707 = vst.msk [vmem:[%s3 + $0x110] sm:$0xff] %vm672, %v554
  %708 = vst.msk [vmem:[%s3 + $0x118] sm:$0xff] %vm672, %v557
  %709 = vst.msk [vmem:[%s3 + $0x120] sm:$0xff] %vm672, %v562
  %710 = vst.msk [vmem:[%s3 + $0x128] sm:$0xff] %vm672, %v565
  %711 = vst.msk [vmem:[%s3 + $0x130] sm:$0xff] %vm672, %v570
  %712 = vst.msk [vmem:[%s3 + $0x138] sm:$0xff] %vm672, %v573
  %713 = vst.msk [vmem:[%s3 + $0x140] sm:$0xff] %vm672, %v578
  %714 = vst.msk [vmem:[%s3 + $0x148] sm:$0xff] %vm672, %v581
  %715 = vst.msk [vmem:[%s3 + $0x150] sm:$0xff] %vm672, %v586
  %716 = vst.msk [vmem:[%s3 + $0x158] sm:$0xff] %vm672, %v589
  %717 = vst.msk [vmem:[%s3 + $0x160] sm:$0xff] %vm672, %v594
  %718 = vst.msk [vmem:[%s3 + $0x168] sm:$0xff] %vm672, %v597
  %719 = vst.msk [vmem:[%s3 + $0x170] sm:$0xff] %vm672, %v602
  %720 = vst.msk [vmem:[%s3 + $0x178] sm:$0xff] %vm672, %v605
  %721 = vst.msk [vmem:[%s3 + $0x180] sm:$0xff] %vm672, %v610
  %722 = vst.msk [vmem:[%s3 + $0x188] sm:$0xff] %vm672, %v613
  %723 = vst.msk [vmem:[%s3 + $0x190] sm:$0xff] %vm672, %v618
  %724 = vst.msk [vmem:[%s3 + $0x198] sm:$0xff] %vm672, %v621
  %725 = vst.msk [vmem:[%s3 + $0x1a0] sm:$0xff] %vm672, %v626
  %726 = vst.msk [vmem:[%s3 + $0x1a8] sm:$0xff] %vm672, %v629
  %727 = vst.msk [vmem:[%s3 + $0x1b0] sm:$0xff] %vm672, %v634
  %728 = vst.msk [vmem:[%s3 + $0x1b8] sm:$0xff] %vm672, %v637
  %729 = vst.msk [vmem:[%s3 + $0x1c0] sm:$0xff] %vm672, %v642
  %730 = vst.msk [vmem:[%s3 + $0x1c8] sm:$0xff] %vm672, %v645
  %731 = vst.msk [vmem:[%s3 + $0x1d0] sm:$0xff] %vm672, %v650
  %732 = vst.msk [vmem:[%s3 + $0x1d8] sm:$0xff] %vm672, %v653
  %733 = vst.msk [vmem:[%s3 + $0x1e0] sm:$0xff] %vm672, %v658
  %734 = vst.msk [vmem:[%s3 + $0x1e8] sm:$0xff] %vm672, %v661
  %735 = vst.msk [vmem:[%s3 + $0x1f0] sm:$0xff] %vm672, %v666
  %736 = vst.msk [vmem:[%s3 + $0x1f8] sm:$0xff] %vm672, %v669
  // Predicated region
  $region14: #{deform_layer_forward.11} parent=0 // pred_check
    _
  $region15: #{deform_layer_forward.11} parent=0 // pred_check_branch
    %738 = sbr.rel (0) target = $region17
  $region16: #{deform_layer_forward.11} parent=0 // pred_region
    _
  $region17: #{deform_layer_forward.11} parent=0 // pred_fallthru
    _
  // Predicated region
  $region18: #{deform_layer_forward.11} parent=0 // pred_check
    _
  $region19: #{deform_layer_forward.11} parent=0 // pred_check_branch
    %740 = sbr.rel (0) target = $region21
  $region20: #{deform_layer_forward.11} parent=0 // pred_region
    _
  $region21: #{deform_layer_forward.11} parent=0 // pred_fallthru
    _

// kernel: deform_layer_forward.13
$region0: #{deform_layer_forward.13}
  #allocation0 [shape = 'u32[]', space=smem, size = 0x4, offset = 0x4, fixed_abs, tag = 'smem constant byte address 0x4 - core index']
  #allocation1 [shape = 'u32[144,128]{1,0:T(1,128)}', space=vmem, size = 0x12000, scoped, tag = 'internal scratch']
  %s0 = inlined_call_operand.vmem [shape: f32[512,32], index: 0, kind: input, shape index: {}]
  %s1 = inlined_call_operand.vmem [shape: f32[1,32], index: 1, kind: input, shape index: {}]
  %s2 = inlined_call_operand.vmem [shape: f32[1,32], index: 2, kind: input, shape index: {}]
  %s3 = inlined_call_operand.vmem [shape: f32[512,32], index: 3, kind: output, shape index: {}]
  %s4 = sld [smem:[#allocation0]]
  $region22: #{deform_layer_forward.13} parent=0
    _
  %s6 = ssub.s32 1, %s4
  %s7 = scalar_select 0, %s6, %s4
  // Predicated region
  $region2: #{deform_layer_forward.13} parent=0 // pred_check
    _
  $region3: #{deform_layer_forward.13} parent=0 // pred_check_branch
    %9 = sbr.rel (0) target = $region5
  $region4: #{deform_layer_forward.13} parent=0 // pred_region
    _
  $region5: #{deform_layer_forward.13} parent=0 // pred_fallthru
    _
  // Predicated region
  $region6: #{deform_layer_forward.13} parent=0 // pred_check
    _
  $region7: #{deform_layer_forward.13} parent=0 // pred_check_branch
    %11 = sbr.rel (0) target = $region9
  $region8: #{deform_layer_forward.13} parent=0 // pred_region
    _
  $region9: #{deform_layer_forward.13} parent=0 // pred_fallthru
    _
  // Predicated region
  $region10: #{deform_layer_forward.13} parent=0 // pred_check
    _
  $region11: #{deform_layer_forward.13} parent=0 // pred_check_branch
    %13 = sbr.rel (0) target = $region13
  $region12: #{deform_layer_forward.13} parent=0 // pred_region
    _
  $region13: #{deform_layer_forward.13} parent=0 // pred_fallthru
    _
  %v14 = vld [vmem:[%s0] sm:$0xff]
  %v15 = vld [vmem:[%s0 + $0x8] sm:$0xff]
  %v16 = vld [vmem:[%s0 + $0x10] sm:$0xff]
  %v17 = vld [vmem:[%s0 + $0x18] sm:$0xff]
  %v18 = vld [vmem:[%s0 + $0x20] sm:$0xff]
  %v19 = vld [vmem:[%s0 + $0x28] sm:$0xff]
  %v20 = vld [vmem:[%s0 + $0x30] sm:$0xff]
  %v21 = vld [vmem:[%s0 + $0x38] sm:$0xff]
  %v22 = vld [vmem:[%s0 + $0x40] sm:$0xff]
  %v23 = vld [vmem:[%s0 + $0x48] sm:$0xff]
  %v24 = vld [vmem:[%s0 + $0x50] sm:$0xff]
  %v25 = vld [vmem:[%s0 + $0x58] sm:$0xff]
  %v26 = vld [vmem:[%s0 + $0x60] sm:$0xff]
  %v27 = vld [vmem:[%s0 + $0x68] sm:$0xff]
  %v28 = vld [vmem:[%s0 + $0x70] sm:$0xff]
  %v29 = vld [vmem:[%s0 + $0x78] sm:$0xff]
  %v30 = vld [vmem:[%s0 + $0x80] sm:$0xff]
  %v31 = vld [vmem:[%s0 + $0x88] sm:$0xff]
  %v32 = vld [vmem:[%s0 + $0x90] sm:$0xff]
  %v33 = vld [vmem:[%s0 + $0x98] sm:$0xff]
  %v34 = vld [vmem:[%s0 + $0xa0] sm:$0xff]
  %v35 = vld [vmem:[%s0 + $0xa8] sm:$0xff]
  %v36 = vld [vmem:[%s0 + $0xb0] sm:$0xff]
  %v37 = vld [vmem:[%s0 + $0xb8] sm:$0xff]
  %v38 = vld [vmem:[%s0 + $0xc0] sm:$0xff]
  %v39 = vld [vmem:[%s0 + $0xc8] sm:$0xff]
  %v40 = vld [vmem:[%s0 + $0xd0] sm:$0xff]
  %v41 = vld [vmem:[%s0 + $0xd8] sm:$0xff]
  %v42 = vld [vmem:[%s0 + $0xe0] sm:$0xff]
  %v43 = vld [vmem:[%s0 + $0xe8] sm:$0xff]
  %v44 = vld [vmem:[%s0 + $0xf0] sm:$0xff]
  %v45 = vld [vmem:[%s0 + $0xf8] sm:$0xff]
  %v46 = vld [vmem:[%s0 + $0x100] sm:$0xff]
  %v47 = vld [vmem:[%s0 + $0x108] sm:$0xff]
  %v48 = vld [vmem:[%s0 + $0x110] sm:$0xff]
  %v49 = vld [vmem:[%s0 + $0x118] sm:$0xff]
  %v50 = vld [vmem:[%s0 + $0x120] sm:$0xff]
  %v51 = vld [vmem:[%s0 + $0x128] sm:$0xff]
  %v52 = vld [vmem:[%s0 + $0x130] sm:$0xff]
  %v53 = vld [vmem:[%s0 + $0x138] sm:$0xff]
  %v54 = vld [vmem:[%s0 + $0x140] sm:$0xff]
  %v55 = vld [vmem:[%s0 + $0x148] sm:$0xff]
  %v56 = vld [vmem:[%s0 + $0x150] sm:$0xff]
  %v57 = vld [vmem:[%s0 + $0x158] sm:$0xff]
  %v58 = vld [vmem:[%s0 + $0x160] sm:$0xff]
  %v59 = vld [vmem:[%s0 + $0x168] sm:$0xff]
  %v60 = vld [vmem:[%s0 + $0x170] sm:$0xff]
  %v61 = vld [vmem:[%s0 + $0x178] sm:$0xff]
  %v62 = vld [vmem:[%s0 + $0x180] sm:$0xff]
  %v63 = vld [vmem:[%s0 + $0x188] sm:$0xff]
  %v64 = vld [vmem:[%s0 + $0x190] sm:$0xff]
  %v65 = vld [vmem:[%s0 + $0x198] sm:$0xff]
  %v66 = vld [vmem:[%s0 + $0x1a0] sm:$0xff]
  %v67 = vld [vmem:[%s0 + $0x1a8] sm:$0xff]
  %v68 = vld [vmem:[%s0 + $0x1b0] sm:$0xff]
  %v69 = vld [vmem:[%s0 + $0x1b8] sm:$0xff]
  %v70 = vld [vmem:[%s0 + $0x1c0] sm:$0xff]
  %v71 = vld [vmem:[%s0 + $0x1c8] sm:$0xff]
  %v72 = vld [vmem:[%s0 + $0x1d0] sm:$0xff]
  %v73 = vld [vmem:[%s0 + $0x1d8] sm:$0xff]
  %v74 = vld [vmem:[%s0 + $0x1e0] sm:$0xff]
  %v75 = vld [vmem:[%s0 + $0x1e8] sm:$0xff]
  %v76 = vld [vmem:[%s0 + $0x1f0] sm:$0xff]
  %v77 = vld [vmem:[%s0 + $0x1f8] sm:$0xff]
  %v78 = vld [vmem:[%s1] sm:$0x1]
  %v80 = vlaneseq
  %v81 = vshrl.u32 %v80, 7
  %v82 = vsub.s32 0, %v81
  %v83 = vrot.slane %v78, %v82
  %v85 = vmul.f32 %v14, %v83
  %v86 = vmul.f32 %v15, %v83
  %v87 = vmul.f32 %v16, %v83
  %v88 = vmul.f32 %v17, %v83
  %v89 = vmul.f32 %v18, %v83
  %v90 = vmul.f32 %v19, %v83
  %v91 = vmul.f32 %v20, %v83
  %v92 = vmul.f32 %v21, %v83
  %v93 = vmul.f32 %v22, %v83
  %v94 = vmul.f32 %v23, %v83
  %v95 = vmul.f32 %v24, %v83
  %v96 = vmul.f32 %v25, %v83
  %v97 = vmul.f32 %v26, %v83
  %v98 = vmul.f32 %v27, %v83
  %v99 = vmul.f32 %v28, %v83
  %v100 = vmul.f32 %v29, %v83
  %v101 = vmul.f32 %v30, %v83
  %v102 = vmul.f32 %v31, %v83
  %v103 = vmul.f32 %v32, %v83
  %v104 = vmul.f32 %v33, %v83
  %v105 = vmul.f32 %v34, %v83
  %v106 = vmul.f32 %v35, %v83
  %v107 = vmul.f32 %v36, %v83
  %v108 = vmul.f32 %v37, %v83
  %v109 = vmul.f32 %v38, %v83
  %v110 = vmul.f32 %v39, %v83
  %v111 = vmul.f32 %v40, %v83
  %v112 = vmul.f32 %v41, %v83
  %v113 = vmul.f32 %v42, %v83
  %v114 = vmul.f32 %v43, %v83
  %v115 = vmul.f32 %v44, %v83
  %v116 = vmul.f32 %v45, %v83
  %v117 = vmul.f32 %v46, %v83
  %v118 = vmul.f32 %v47, %v83
  %v119 = vmul.f32 %v48, %v83
  %v120 = vmul.f32 %v49, %v83
  %v121 = vmul.f32 %v50, %v83
  %v122 = vmul.f32 %v51, %v83
  %v123 = vmul.f32 %v52, %v83
  %v124 = vmul.f32 %v53, %v83
  %v125 = vmul.f32 %v54, %v83
  %v126 = vmul.f32 %v55, %v83
  %v127 = vmul.f32 %v56, %v83
  %v128 = vmul.f32 %v57, %v83
  %v129 = vmul.f32 %v58, %v83
  %v130 = vmul.f32 %v59, %v83
  %v131 = vmul.f32 %v60, %v83
  %v132 = vmul.f32 %v61, %v83
  %v133 = vmul.f32 %v62, %v83
  %v134 = vmul.f32 %v63, %v83
  %v135 = vmul.f32 %v64, %v83
  %v136 = vmul.f32 %v65, %v83
  %v137 = vmul.f32 %v66, %v83
  %v138 = vmul.f32 %v67, %v83
  %v139 = vmul.f32 %v68, %v83
  %v140 = vmul.f32 %v69, %v83
  %v141 = vmul.f32 %v70, %v83
  %v142 = vmul.f32 %v71, %v83
  %v143 = vmul.f32 %v72, %v83
  %v144 = vmul.f32 %v73, %v83
  %v145 = vmul.f32 %v74, %v83
  %v146 = vmul.f32 %v75, %v83
  %v147 = vmul.f32 %v76, %v83
  %v148 = vmul.f32 %v77, %v83
  %v149 = vld [vmem:[%s2] sm:$0x1]
  %v151 = vlaneseq
  %v152 = vshrl.u32 %v151, 7
  %v153 = vsub.s32 0, %v152
  %v154 = vrot.slane %v149, %v153
  %v156 = vadd.f32 %v85, %v154
  %v157 = vadd.f32 %v86, %v154
  %v158 = vadd.f32 %v87, %v154
  %v159 = vadd.f32 %v88, %v154
  %v160 = vadd.f32 %v89, %v154
  %v161 = vadd.f32 %v90, %v154
  %v162 = vadd.f32 %v91, %v154
  %v163 = vadd.f32 %v92, %v154
  %v164 = vadd.f32 %v93, %v154
  %v165 = vadd.f32 %v94, %v154
  %v166 = vadd.f32 %v95, %v154
  %v167 = vadd.f32 %v96, %v154
  %v168 = vadd.f32 %v97, %v154
  %v169 = vadd.f32 %v98, %v154
  %v170 = vadd.f32 %v99, %v154
  %v171 = vadd.f32 %v100, %v154
  %v172 = vadd.f32 %v101, %v154
  %v173 = vadd.f32 %v102, %v154
  %v174 = vadd.f32 %v103, %v154
  %v175 = vadd.f32 %v104, %v154
  %v176 = vadd.f32 %v105, %v154
  %v177 = vadd.f32 %v106, %v154
  %v178 = vadd.f32 %v107, %v154
  %v179 = vadd.f32 %v108, %v154
  %v180 = vadd.f32 %v109, %v154
  %v181 = vadd.f32 %v110, %v154
  %v182 = vadd.f32 %v111, %v154
  %v183 = vadd.f32 %v112, %v154
  %v184 = vadd.f32 %v113, %v154
  %v185 = vadd.f32 %v114, %v154
  %v186 = vadd.f32 %v115, %v154
  %v187 = vadd.f32 %v116, %v154
  %v188 = vadd.f32 %v117, %v154
  %v189 = vadd.f32 %v118, %v154
  %v190 = vadd.f32 %v119, %v154
  %v191 = vadd.f32 %v120, %v154
  %v192 = vadd.f32 %v121, %v154
  %v193 = vadd.f32 %v122, %v154
  %v194 = vadd.f32 %v123, %v154
  %v195 = vadd.f32 %v124, %v154
  %v196 = vadd.f32 %v125, %v154
  %v197 = vadd.f32 %v126, %v154
  %v198 = vadd.f32 %v127, %v154
  %v199 = vadd.f32 %v128, %v154
  %v200 = vadd.f32 %v129, %v154
  %v201 = vadd.f32 %v130, %v154
  %v202 = vadd.f32 %v131, %v154
  %v203 = vadd.f32 %v132, %v154
  %v204 = vadd.f32 %v133, %v154
  %v205 = vadd.f32 %v134, %v154
  %v206 = vadd.f32 %v135, %v154
  %v207 = vadd.f32 %v136, %v154
  %v208 = vadd.f32 %v137, %v154
  %v209 = vadd.f32 %v138, %v154
  %v210 = vadd.f32 %v139, %v154
  %v211 = vadd.f32 %v140, %v154
  %v212 = vadd.f32 %v141, %v154
  %v213 = vadd.f32 %v142, %v154
  %v214 = vadd.f32 %v143, %v154
  %v215 = vadd.f32 %v144, %v154
  %v216 = vadd.f32 %v145, %v154
  %v217 = vadd.f32 %v146, %v154
  %v218 = vadd.f32 %v147, %v154
  %v219 = vadd.f32 %v148, %v154
  %v220 = vmax.f32 %v156, 0.0
  %v221 = vmax.f32 %v157, 0.0
  %v222 = vmax.f32 %v158, 0.0
  %v223 = vmax.f32 %v159, 0.0
  %v224 = vmax.f32 %v160, 0.0
  %v225 = vmax.f32 %v161, 0.0
  %v226 = vmax.f32 %v162, 0.0
  %v227 = vmax.f32 %v163, 0.0
  %v228 = vmax.f32 %v164, 0.0
  %v229 = vmax.f32 %v165, 0.0
  %v230 = vmax.f32 %v166, 0.0
  %v231 = vmax.f32 %v167, 0.0
  %v232 = vmax.f32 %v168, 0.0
  %v233 = vmax.f32 %v169, 0.0
  %v234 = vmax.f32 %v170, 0.0
  %v235 = vmax.f32 %v171, 0.0
  %v236 = vmax.f32 %v172, 0.0
  %v237 = vmax.f32 %v173, 0.0
  %v238 = vmax.f32 %v174, 0.0
  %v239 = vmax.f32 %v175, 0.0
  %v240 = vmax.f32 %v176, 0.0
  %v241 = vmax.f32 %v177, 0.0
  %v242 = vmax.f32 %v178, 0.0
  %v243 = vmax.f32 %v179, 0.0
  %v244 = vmax.f32 %v180, 0.0
  %v245 = vmax.f32 %v181, 0.0
  %v246 = vmax.f32 %v182, 0.0
  %v247 = vmax.f32 %v183, 0.0
  %v248 = vmax.f32 %v184, 0.0
  %v249 = vmax.f32 %v185, 0.0
  %v250 = vmax.f32 %v186, 0.0
  %v251 = vmax.f32 %v187, 0.0
  %v252 = vmax.f32 %v188, 0.0
  %v253 = vmax.f32 %v189, 0.0
  %v254 = vmax.f32 %v190, 0.0
  %v255 = vmax.f32 %v191, 0.0
  %v256 = vmax.f32 %v192, 0.0
  %v257 = vmax.f32 %v193, 0.0
  %v258 = vmax.f32 %v194, 0.0
  %v259 = vmax.f32 %v195, 0.0
  %v260 = vmax.f32 %v196, 0.0
  %v261 = vmax.f32 %v197, 0.0
  %v262 = vmax.f32 %v198, 0.0
  %v263 = vmax.f32 %v199, 0.0
  %v264 = vmax.f32 %v200, 0.0
  %v265 = vmax.f32 %v201, 0.0
  %v266 = vmax.f32 %v202, 0.0
  %v267 = vmax.f32 %v203, 0.0
  %v268 = vmax.f32 %v204, 0.0
  %v269 = vmax.f32 %v205, 0.0
  %v270 = vmax.f32 %v206, 0.0
  %v271 = vmax.f32 %v207, 0.0
  %v272 = vmax.f32 %v208, 0.0
  %v273 = vmax.f32 %v209, 0.0
  %v274 = vmax.f32 %v210, 0.0
  %v275 = vmax.f32 %v211, 0.0
  %v276 = vmax.f32 %v212, 0.0
  %v277 = vmax.f32 %v213, 0.0
  %v278 = vmax.f32 %v214, 0.0
  %v279 = vmax.f32 %v215, 0.0
  %v280 = vmax.f32 %v216, 0.0
  %v281 = vmax.f32 %v217, 0.0
  %v282 = vmax.f32 %v218, 0.0
  %v283 = vmax.f32 %v219, 0.0
  %vm284 = vcmask 261120
  %285 = vst.msk [vmem:[%s3] sm:$0xff] %vm284, %v220
  %286 = vst.msk [vmem:[%s3 + $0x8] sm:$0xff] %vm284, %v221
  %287 = vst.msk [vmem:[%s3 + $0x10] sm:$0xff] %vm284, %v222
  %288 = vst.msk [vmem:[%s3 + $0x18] sm:$0xff] %vm284, %v223
  %289 = vst.msk [vmem:[%s3 + $0x20] sm:$0xff] %vm284, %v224
  %290 = vst.msk [vmem:[%s3 + $0x28] sm:$0xff] %vm284, %v225
  %291 = vst.msk [vmem:[%s3 + $0x30] sm:$0xff] %vm284, %v226
  %292 = vst.msk [vmem:[%s3 + $0x38] sm:$0xff] %vm284, %v227
  %293 = vst.msk [vmem:[%s3 + $0x40] sm:$0xff] %vm284, %v228
  %294 = vst.msk [vmem:[%s3 + $0x48] sm:$0xff] %vm284, %v229
  %295 = vst.msk [vmem:[%s3 + $0x50] sm:$0xff] %vm284, %v230
  %296 = vst.msk [vmem:[%s3 + $0x58] sm:$0xff] %vm284, %v231
  %297 = vst.msk [vmem:[%s3 + $0x60] sm:$0xff] %vm284, %v232
  %298 = vst.msk [vmem:[%s3 + $0x68] sm:$0xff] %vm284, %v233
  %299 = vst.msk [vmem:[%s3 + $0x70] sm:$0xff] %vm284, %v234
  %300 = vst.msk [vmem:[%s3 + $0x78] sm:$0xff] %vm284, %v235
  %301 = vst.msk [vmem:[%s3 + $0x80] sm:$0xff] %vm284, %v236
  %302 = vst.msk [vmem:[%s3 + $0x88] sm:$0xff] %vm284, %v237
  %303 = vst.msk [vmem:[%s3 + $0x90] sm:$0xff] %vm284, %v238
  %304 = vst.msk [vmem:[%s3 + $0x98] sm:$0xff] %vm284, %v239
  %305 = vst.msk [vmem:[%s3 + $0xa0] sm:$0xff] %vm284, %v240
  %306 = vst.msk [vmem:[%s3 + $0xa8] sm:$0xff] %vm284, %v241
  %307 = vst.msk [vmem:[%s3 + $0xb0] sm:$0xff] %vm284, %v242
  %308 = vst.msk [vmem:[%s3 + $0xb8] sm:$0xff] %vm284, %v243
  %309 = vst.msk [vmem:[%s3 + $0xc0] sm:$0xff] %vm284, %v244
  %310 = vst.msk [vmem:[%s3 + $0xc8] sm:$0xff] %vm284, %v245
  %311 = vst.msk [vmem:[%s3 + $0xd0] sm:$0xff] %vm284, %v246
  %312 = vst.msk [vmem:[%s3 + $0xd8] sm:$0xff] %vm284, %v247
  %313 = vst.msk [vmem:[%s3 + $0xe0] sm:$0xff] %vm284, %v248
  %314 = vst.msk [vmem:[%s3 + $0xe8] sm:$0xff] %vm284, %v249
  %315 = vst.msk [vmem:[%s3 + $0xf0] sm:$0xff] %vm284, %v250
  %316 = vst.msk [vmem:[%s3 + $0xf8] sm:$0xff] %vm284, %v251
  %317 = vst.msk [vmem:[%s3 + $0x100] sm:$0xff] %vm284, %v252
  %318 = vst.msk [vmem:[%s3 + $0x108] sm:$0xff] %vm284, %v253
  %319 = vst.msk [vmem:[%s3 + $0x110] sm:$0xff] %vm284, %v254
  %320 = vst.msk [vmem:[%s3 + $0x118] sm:$0xff] %vm284, %v255
  %321 = vst.msk [vmem:[%s3 + $0x120] sm:$0xff] %vm284, %v256
  %322 = vst.msk [vmem:[%s3 + $0x128] sm:$0xff] %vm284, %v257
  %323 = vst.msk [vmem:[%s3 + $0x130] sm:$0xff] %vm284, %v258
  %324 = vst.msk [vmem:[%s3 + $0x138] sm:$0xff] %vm284, %v259
  %325 = vst.msk [vmem:[%s3 + $0x140] sm:$0xff] %vm284, %v260
  %326 = vst.msk [vmem:[%s3 + $0x148] sm:$0xff] %vm284, %v261
  %327 = vst.msk [vmem:[%s3 + $0x150] sm:$0xff] %vm284, %v262
  %328 = vst.msk [vmem:[%s3 + $0x158] sm:$0xff] %vm284, %v263
  %329 = vst.msk [vmem:[%s3 + $0x160] sm:$0xff] %vm284, %v264
  %330 = vst.msk [vmem:[%s3 + $0x168] sm:$0xff] %vm284, %v265
  %331 = vst.msk [vmem:[%s3 + $0x170] sm:$0xff] %vm284, %v266
  %332 = vst.msk [vmem:[%s3 + $0x178] sm:$0xff] %vm284, %v267
  %333 = vst.msk [vmem:[%s3 + $0x180] sm:$0xff] %vm284, %v268
  %334 = vst.msk [vmem:[%s3 + $0x188] sm:$0xff] %vm284, %v269
  %335 = vst.msk [vmem:[%s3 + $0x190] sm:$0xff] %vm284, %v270
  %336 = vst.msk [vmem:[%s3 + $0x198] sm:$0xff] %vm284, %v271
  %337 = vst.msk [vmem:[%s3 + $0x1a0] sm:$0xff] %vm284, %v272
  %338 = vst.msk [vmem:[%s3 + $0x1a8] sm:$0xff] %vm284, %v273
  %339 = vst.msk [vmem:[%s3 + $0x1b0] sm:$0xff] %vm284, %v274
  %340 = vst.msk [vmem:[%s3 + $0x1b8] sm:$0xff] %vm284, %v275
  %341 = vst.msk [vmem:[%s3 + $0x1c0] sm:$0xff] %vm284, %v276
  %342 = vst.msk [vmem:[%s3 + $0x1c8] sm:$0xff] %vm284, %v277
  %343 = vst.msk [vmem:[%s3 + $0x1d0] sm:$0xff] %vm284, %v278
  %344 = vst.msk [vmem:[%s3 + $0x1d8] sm:$0xff] %vm284, %v279
  %345 = vst.msk [vmem:[%s3 + $0x1e0] sm:$0xff] %vm284, %v280
  %346 = vst.msk [vmem:[%s3 + $0x1e8] sm:$0xff] %vm284, %v281
  %347 = vst.msk [vmem:[%s3 + $0x1f0] sm:$0xff] %vm284, %v282
  %348 = vst.msk [vmem:[%s3 + $0x1f8] sm:$0xff] %vm284, %v283
  // Predicated region
  $region14: #{deform_layer_forward.13} parent=0 // pred_check
    _
  $region15: #{deform_layer_forward.13} parent=0 // pred_check_branch
    %350 = sbr.rel (0) target = $region17
  $region16: #{deform_layer_forward.13} parent=0 // pred_region
    _
  $region17: #{deform_layer_forward.13} parent=0 // pred_fallthru
    _
  // Predicated region
  $region18: #{deform_layer_forward.13} parent=0 // pred_check
    _
  $region19: #{deform_layer_forward.13} parent=0 // pred_check_branch
    %352 = sbr.rel (0) target = $region21
  $region20: #{deform_layer_forward.13} parent=0 // pred_region
    _
  $region21: #{deform_layer_forward.13} parent=0 // pred_fallthru
    _

</llo_original>
